<compile_context>
chip_gen: v6e
topology: v6e:2x2x1
jax: 0.10.0
libtpu: 0.0.40
codegen_flags: <defaults>
</compile_context>

<pallas_src>
import jax
import jax.numpy as jnp
from jax.experimental import pallas as pl
from jax.experimental.pallas import tpu as pltpu

# ----------------------------- model sizes ---------------------------------
B = 2                 # batch
N_PATCH = 10          # facial-landmark patches (5 eyebrow + 5 mouth)
PC, PH, PW = 3, 4, 4
D_PATCH = PC * PH * PW           # 48 flattened patch features
C_IN, T, H, W = 3, 8, 16, 16     # frames (NCDHW in torch)
S_FLAT = T * H * W               # 2048 flattened spatio-temporal positions
H_GRAPH = 64                     # graph-branch feature width (eyebrow / mouth)
F1, F2 = 16, 32                  # P3D channel widths (reduced stand-in)
N_AU = 9                         # P3D63(num_classes=9) -> 9 action units
GCN_HID = 80                     # hidden_features=80
GCN_OUT = 64
NUM_CLASSES = 5
LANE = 128                       # lane-dense output-slab width
P3D_CHUNK = 512                  # channel-mix / pool chunk along S (4 chunks)
NEG_INF = -1e30                  # cross-branch softmax mask value


# --------------------- single packed weight buffer layout -------------------
def _round8(n):
    return ((n + 7) // 8) * 8


# (name, (rows, cols)) — each entry starts at an 8-aligned row of a (ROWS, 128) buffer,
# so every in-kernel slice is a statically aligned, zero-cost ref view.
_PACK_LAYOUT = (
    ("wa_bd",      (2 * D_PATCH, 2 * D_PATCH)),   # block-diag adjacency-score weights (96,96)
    ("wp_stack",   (2 * D_PATCH, H_GRAPH)),       # stacked branch projections (96,64)
    ("graph_mask", (N_PATCH, N_PATCH)),           # 0 within branch, -1e30 across (10,10)
    ("p3d_w1",     (F1, C_IN)),                   # 1x1x1 channel mix (16,3)
    ("p3d_b1",     (F1, 1)),
    ("p3d_w2t",    (F2, F1)),                     # stored transposed (column-oriented head)
    ("p3d_b2",     (F2, 1)),
    ("p3d_w3t",    (N_AU, F2)),
    ("p3d_b3",     (N_AU, 1)),
    ("gcn_emb",    (N_AU, GCN_HID)),
    ("gcn_adj",    (N_AU, N_AU)),
    ("gcn_w1",     (GCN_HID, GCN_HID)),
    ("gcn_w2",     (GCN_HID, GCN_OUT)),
    ("fus_w",      (2 * H_GRAPH + GCN_OUT, LANE)),  # columns pre-padded to 128 lanes
    ("fus_b",      (1, LANE)),
)


def _pack_offsets():
    offs, row = {}, 0
    for name, (r, c) in _PACK_LAYOUT:
        offs[name] = (row, r, c)
        row += _round8(r)
    return offs, row


_PACK_OFFSETS, _PACK_ROWS = _pack_offsets()


def _pack_weights(w):
    buf = jnp.zeros((_PACK_ROWS, LANE), jnp.float32)
    for name, (row, r, c) in _PACK_OFFSETS.items():
        buf = buf.at[row:row + r, :c].set(w[name].astype(jnp.float32))
    return buf


# ------------------------------ fused Pallas kernel --------------------------
def fmer_kernel(nodes_ref, frames_ref, wpack_ref, out_ref):
    """Fully-fused FMER forward for one batch block (bb elements per grid step)."""
    f32 = jnp.float32
    bb = nodes_ref.shape[0]

    def pk(name):
        row, r, c = _PACK_OFFSETS[name]
        return wpack_ref[row:row + r, :c]       # static ref slice: zero-cost view

    # ---- weights (single packed, constant-resident buffer) ----
    wa = pk("wa_bd")
    wp = pk("wp_stack")
    mask = pk("graph_mask")
    w1 = pk("p3d_w1")
    b1 = pk("p3d_b1")
    w2t = pk("p3d_w2t")
    b2 = pk("p3d_b2")
    w3t = pk("p3d_w3t")
    b3 = pk("p3d_b3")
    emb = pk("gcn_emb")
    adj = pk("gcn_adj")                          # TODO(synk): stand-in adjacency, no D^-1/2 (A+I) D^-1/2 normalization
    gw1 = pk("gcn_w1")
    gw2 = pk("gcn_w2")
    fw_row = _PACK_OFFSETS["fus_w"][0]
    wf_e = wpack_ref[fw_row:fw_row + H_GRAPH, :]
    wf_m = wpack_ref[fw_row + H_GRAPH:fw_row + 2 * H_GRAPH, :]
    wf_g = wpack_ref[fw_row + 2 * H_GRAPH:fw_row + 2 * H_GRAPH + GCN_OUT, :]
    bf = pk("fus_b")

    # -------- P3D63 stand-in: 1x1x1 channel mix -> ReLU -> global pool (batched) --------
    # TODO(synk): full P3D63 pseudo-3D residual stack not reproduced; channel-mix conv + pool + FC only.
    # The channel mix is 3 broadcast VPU FMAs (K=3 MXU pass is ~98% padding) and is chunked
    # over S so the ReLU'd intermediate stays small (no vreg spills from a (bb,16,2048) tensor).
    pooled = jnp.zeros((bb, F1, 1), f32)
    for ci in range(S_FLAT // P3D_CHUNK):        # static 4-step unrolled accumulation
        s0 = ci * P3D_CHUNK
        xs = frames_ref[:, :, s0:s0 + P3D_CHUNK]                      # (bb, C_IN, CHUNK)
        hm = w1[:, 0:1][None, :, :] * xs[:, 0:1, :]
        for c in range(1, C_IN):
            hm = hm + w1[:, c:c + 1][None, :, :] * xs[:, c:c + 1, :]  # (bb, F1, CHUNK)
        hm = jnp.maximum(hm + b1[None, :, :], 0.0)
        pooled = pooled + jnp.sum(hm, axis=2, keepdims=True)          # (bb, F1, 1)
    pooled = pooled * (1.0 / S_FLAT)

    # Per-batch-element tail: every block below is a single padded MXU tile, so plain 2D
    # matmuls looped over bb (bb <= 2) are the simplest safe lowering; the grid-step
    # overhead is already gone because the batch is folded into this one invocation.
    for b in range(bb):
        # -------- GraphLearningModel: merged eyebrow+mouth pass (block-diag lifted features)
        x = nodes_ref[b]                                              # (10, 96) lifted nodes
        xa = jnp.dot(x, wa, preferred_element_type=f32)               # (10, 96)
        scores = jnp.einsum('ne,me->nm', xa, x,
                            preferred_element_type=f32) + mask        # cross-branch masked
        scores = scores - jnp.max(scores, axis=-1, keepdims=True)
        e = jnp.exp(scores)
        a = e / jnp.sum(e, axis=-1, keepdims=True)                    # exact row softmax
        ax = jnp.dot(a, x, preferred_element_type=f32)                # (10, 96)
        hg = jnp.maximum(jnp.dot(ax, wp, preferred_element_type=f32), 0.0)   # (10, 64)
        eyebrow = jnp.sum(hg[0:N_PATCH // 2, :], axis=0, keepdims=True) * (2.0 / N_PATCH)
        mouth = jnp.sum(hg[N_PATCH // 2:, :], axis=0, keepdims=True) * (2.0 / N_PATCH)

        # -------- P3D head (column-oriented: no row/column relayouts in the chain)
        h2 = jnp.maximum(jnp.dot(w2t, pooled[b],
                                 preferred_element_type=f32) + b2, 0.0)      # (F2, 1)
        au_col = jnp.dot(w3t, h2, preferred_element_type=f32) + b3           # (N_AU, 1)

        # -------- GCN over the 9 AU nodes: node feats = AU-embedding * AU activation
        node = emb * au_col                                                  # (9, 80)
        h1 = jnp.dot(adj, node, preferred_element_type=f32)
        h1 = jnp.maximum(jnp.dot(h1, gw1, preferred_element_type=f32), 0.0)
        g2 = jnp.dot(adj, h1, preferred_element_type=f32)
        g2 = jnp.dot(g2, gw2, preferred_element_type=f32)                    # (9, 64)
        gcn_out = jnp.sum(g2, axis=0, keepdims=True) * (1.0 / N_AU)          # (1, 64)

        # -------- AUFusion head: concat-free, lane-dense logits via padded weight slabs
        logits = (jnp.dot(eyebrow, wf_e, preferred_element_type=f32)
                  + jnp.dot(mouth, wf_m, preferred_element_type=f32)
                  + jnp.dot(gcn_out, wf_g, preferred_element_type=f32)
                  + bf)                                                      # (1, 128)

        # -------- output slab: row 0 = fusion logits, row 1 = AU activations
        au_row = au_col.T                                                    # tiny 9-value transpose
        au128 = jnp.concatenate(
            [au_row, jnp.zeros((1, LANE - N_AU), f32)], axis=1)              # single zero-fill
        out_ref[b:b + 1, 0:1, :] = logits[None]
        out_ref[b:b + 1, 1:2, :] = au128[None]


# ------------------------------ chip detection -------------------------------
def _tensorcores_per_device():
    """2 TensorCores per JAX device on v7x (and v4/v5p megacore), else 1 (v5e/v6e)."""
    try:
        kind = jax.devices()[0].device_kind.lower()
    except Exception:
        return 1
    if "7" in kind or "v4" in kind or "v5p" in kind:
        return 2
    return 1


# ------------------------------ parameters ----------------------------------
def init_params():
    k = jax.random.PRNGKey(42)
    ks = jax.random.split(k, 12)
    s = lambda key, shape, fan: (jax.random.normal(key, shape, jnp.float32)
                                 / jnp.sqrt(jnp.float32(fan)))
    d = D_PATCH
    # GraphLearningModel: per-branch weights merged into block-diag / stacked forms
    wa0, wa1 = s(ks[0], (d, d), d), s(ks[2], (d, d), d)
    wp0, wp1 = s(ks[1], (d, H_GRAPH), d), s(ks[3], (d, H_GRAPH), d)
    wa_bd = jnp.zeros((2 * d, 2 * d), jnp.float32)
    wa_bd = wa_bd.at[:d, :d].set(wa0).at[d:, d:].set(wa1)
    wp_stack = jnp.concatenate([wp0, wp1], axis=0)
    grp = jnp.arange(N_PATCH) >= (N_PATCH // 2)
    graph_mask = jnp.where(grp[:, None] == grp[None, :], 0.0, NEG_INF).astype(jnp.float32)

    # AUFusion weight pre-padded to 128 output lanes (cols >= NUM_CLASSES are zero)
    fus_w = jnp.zeros((2 * H_GRAPH + GCN_OUT, LANE), jnp.float32)
    fus_w = fus_w.at[:, :NUM_CLASSES].set(
        s(ks[11], (2 * H_GRAPH + GCN_OUT, NUM_CLASSES), 2 * H_GRAPH + GCN_OUT))

    w = {
        "wa_bd": wa_bd,
        "wp_stack": wp_stack,
        "graph_mask": graph_mask,
        # P3D63 stand-in (w2/w3 stored transposed for the column-oriented head)
        "p3d_w1": s(ks[4], (F1, C_IN), C_IN),
        "p3d_b1": jnp.zeros((F1, 1), jnp.float32),
        "p3d_w2t": s(ks[5], (F2, F1), F1),
        "p3d_b2": jnp.zeros((F2, 1), jnp.float32),
        "p3d_w3t": s(ks[6], (N_AU, F2), F2),
        "p3d_b3": jnp.zeros((N_AU, 1), jnp.float32),
        # GCN
        "gcn_emb": s(ks[7], (N_AU, GCN_HID), 1),
        "gcn_adj": s(ks[8], (N_AU, N_AU), N_AU) + jnp.eye(N_AU, dtype=jnp.float32),
        "gcn_w1": s(ks[9], (GCN_HID, GCN_HID), GCN_HID),
        "gcn_w2": s(ks[10], (GCN_HID, GCN_OUT), GCN_HID),
        # AUFusion
        "fus_w": fus_w,
        "fus_b": jnp.zeros((1, LANE), jnp.float32),
    }
    return {"wpack": _pack_weights(w)}


# ------------------------------ forward -------------------------------------
def fmer_forward(params, patches, frames):
    """patches: (B, N_PATCH, PC, PH, PW); frames: (B, C, T, H, W) [NCDHW, PyTorch convention]."""
    b = patches.shape[0]

    # glue: flatten patches, then lift node features into a 2*D "block-diagonal" feature
    # space (eyebrow rows use cols [0,48), mouth rows use cols [48,96)) so both branches run
    # in one 10-node graph pass inside the kernel.
    nodes = patches.reshape(b, N_PATCH, D_PATCH).astype(jnp.float32)
    zeros = jnp.zeros((b, N_PATCH // 2, D_PATCH), jnp.float32)
    x_lift = jnp.concatenate(
        [jnp.concatenate([nodes[:, :N_PATCH // 2, :], zeros], axis=-1),
         jnp.concatenate([zeros, nodes[:, N_PATCH // 2:, :]], axis=-1)],
        axis=1)                                                        # (B, 10, 96)

    # glue: keep NCDHW order, just flatten spatio-temporal dims -> (B, C, S); S is the lane axis
    frames_f = frames.reshape(b, C_IN, S_FLAT).astype(jnp.float32)

    # Batch folding: one grid step per TensorCore.  Single-TC chips (v5e/v6e) get the whole
    # batch in one invocation; v7x keeps a 2-wide "parallel" grid (one element per core).
    n_tc = _tensorcores_per_device()
    bb = (b // n_tc) if (n_tc > 1 and b % n_tc == 0) else b
    grid = (b // bb,)

    out = pl.pallas_call(
        fmer_kernel,
        grid=grid,
        in_specs=[
            pl.BlockSpec((bb, N_PATCH, 2 * D_PATCH), lambda i: (i, 0, 0)),
            pl.BlockSpec((bb, C_IN, S_FLAT), lambda i: (i, 0, 0)),
            pl.BlockSpec((_PACK_ROWS, LANE), lambda i: (0, 0)),   # packed weights, grid-constant
        ],
        out_specs=pl.BlockSpec((bb, 2, LANE), lambda i: (i, 0, 0)),
        out_shape=jax.ShapeDtypeStruct((b, 2, LANE), jnp.float32),
        compiler_params=pltpu.CompilerParams(dimension_semantics=("parallel",)),
    )(x_lift, frames_f, params["wpack"])

    fusion_output = out[:, 0, :NUM_CLASSES]
    au_feature = out[:, 1, :N_AU]
    return fusion_output, au_feature


# ------------------------------ main -----------------------------------------
if __name__ == "__main__":
    key = jax.random.PRNGKey(0)
    kp, kf = jax.random.split(key)
    patches = jax.random.normal(kp, (B, N_PATCH, PC, PH, PW), jnp.float32)
    frames = jax.random.normal(kf, (B, C_IN, T, H, W), jnp.float32)

    params = init_params()
    fusion_out, au_feature = jax.jit(fmer_forward)(params, patches, frames)
    jax.block_until_ready((fusion_out, au_feature))

    assert fusion_out.shape == (B, NUM_CLASSES)
    assert au_feature.shape == (B, N_AU)
    assert jnp.all(jnp.isfinite(fusion_out)) and jnp.all(jnp.isfinite(au_feature))
    print("KERNEL_OK")
</pallas_src>

<mosaic_0001>
module attributes {stable_mosaic.version = 11 : i64} {
  func.func @fmer_kernel(%arg0: i32, %arg1: memref<2x10x96xf32, #tpu.memory_space<vmem>>, %arg2: memref<2x3x2048xf32, #tpu.memory_space<vmem>>, %arg3: memref<728x128xf32, #tpu.memory_space<vmem>>, %arg4: memref<2x2x128xf32, #tpu.memory_space<vmem>>) attributes {dimension_semantics = [#tpu.dimension_semantics<parallel>], iteration_bounds = array<i64: 1>, scalar_prefetch = 0 : i64, scratch_operands = 0 : i64, tpu.core_type = #tpu.core_type<tc>, window_params = [{transform_indices = @transform_0, window_bounds = array<i64: 2, 10, 96>}, {transform_indices = @transform_1, window_bounds = array<i64: 2, 3, 2048>}, {pipeline_mode = #tpu.pipeline_mode<synchronous>, transform_indices = @transform_2, window_bounds = array<i64: 728, 128>}, {transform_indices = @transform_3, window_bounds = array<i64: 2, 2, 128>}]} {
    %c0 = arith.constant 0 : index
    %c0_0 = arith.constant 0 : index
    %0 = vector.load %arg3[%c0, %c0_0] : memref<728x128xf32, #tpu.memory_space<vmem>>, vector<96x96xf32>
    %c96 = arith.constant 96 : index
    %c0_1 = arith.constant 0 : index
    %1 = vector.load %arg3[%c96, %c0_1] : memref<728x128xf32, #tpu.memory_space<vmem>>, vector<96x64xf32>
    %c192 = arith.constant 192 : index
    %c0_2 = arith.constant 0 : index
    %2 = vector.load %arg3[%c192, %c0_2] : memref<728x128xf32, #tpu.memory_space<vmem>>, vector<10x10xf32>
    %c208 = arith.constant 208 : index
    %c0_3 = arith.constant 0 : index
    %3 = vector.load %arg3[%c208, %c0_3] : memref<728x128xf32, #tpu.memory_space<vmem>>, vector<16x3xf32>
    %c224 = arith.constant 224 : index
    %c0_4 = arith.constant 0 : index
    %4 = vector.load %arg3[%c224, %c0_4] : memref<728x128xf32, #tpu.memory_space<vmem>>, vector<16x1xf32>
    %c240 = arith.constant 240 : index
    %c0_5 = arith.constant 0 : index
    %5 = vector.load %arg3[%c240, %c0_5] : memref<728x128xf32, #tpu.memory_space<vmem>>, vector<32x16xf32>
    %c272 = arith.constant 272 : index
    %c0_6 = arith.constant 0 : index
    %6 = vector.load %arg3[%c272, %c0_6] : memref<728x128xf32, #tpu.memory_space<vmem>>, vector<32x1xf32>
    %c304 = arith.constant 304 : index
    %c0_7 = arith.constant 0 : index
    %7 = vector.load %arg3[%c304, %c0_7] : memref<728x128xf32, #tpu.memory_space<vmem>>, vector<9x32xf32>
    %c320 = arith.constant 320 : index
    %c0_8 = arith.constant 0 : index
    %8 = vector.load %arg3[%c320, %c0_8] : memref<728x128xf32, #tpu.memory_space<vmem>>, vector<9x1xf32>
    %c336 = arith.constant 336 : index
    %c0_9 = arith.constant 0 : index
    %9 = vector.load %arg3[%c336, %c0_9] : memref<728x128xf32, #tpu.memory_space<vmem>>, vector<9x80xf32>
    %c352 = arith.constant 352 : index
    %c0_10 = arith.constant 0 : index
    %10 = vector.load %arg3[%c352, %c0_10] : memref<728x128xf32, #tpu.memory_space<vmem>>, vector<9x9xf32>
    %c368 = arith.constant 368 : index
    %c0_11 = arith.constant 0 : index
    %11 = vector.load %arg3[%c368, %c0_11] : memref<728x128xf32, #tpu.memory_space<vmem>>, vector<80x80xf32>
    %c448 = arith.constant 448 : index
    %c0_12 = arith.constant 0 : index
    %12 = vector.load %arg3[%c448, %c0_12] : memref<728x128xf32, #tpu.memory_space<vmem>>, vector<80x64xf32>
    %c528 = arith.constant 528 : index
    %c0_13 = arith.constant 0 : index
    %13 = vector.load %arg3[%c528, %c0_13] : memref<728x128xf32, #tpu.memory_space<vmem>>, vector<64x128xf32>
    %c592 = arith.constant 592 : index
    %c0_14 = arith.constant 0 : index
    %14 = vector.load %arg3[%c592, %c0_14] : memref<728x128xf32, #tpu.memory_space<vmem>>, vector<64x128xf32>
    %c656 = arith.constant 656 : index
    %c0_15 = arith.constant 0 : index
    %15 = vector.load %arg3[%c656, %c0_15] : memref<728x128xf32, #tpu.memory_space<vmem>>, vector<64x128xf32>
    %c720 = arith.constant 720 : index
    %c0_16 = arith.constant 0 : index
    %16 = vector.load %arg3[%c720, %c0_16] : memref<728x128xf32, #tpu.memory_space<vmem>>, vector<1x128xf32>
    %cst = arith.constant 0.000000e+00 : f32
    %17 = vector.broadcast %cst : f32 to vector<2x16x1xf32>
    %c0_17 = arith.constant 0 : index
    %c0_18 = arith.constant 0 : index
    %c0_19 = arith.constant 0 : index
    %18 = vector.load %arg2[%c0_17, %c0_18, %c0_19] : memref<2x3x2048xf32, #tpu.memory_space<vmem>>, vector<2x3x512xf32>
    %19 = vector.extract_strided_slice %3 {offsets = [0, 0], sizes = [16, 1], strides = [1, 1]} : vector<16x3xf32> to vector<16x1xf32>
    %20 = vector.shape_cast %19 : vector<16x1xf32> to vector<1x16x1xf32>
    %21 = vector.extract_strided_slice %18 {offsets = [0, 0, 0], sizes = [2, 1, 512], strides = [1, 1, 1]} : vector<2x3x512xf32> to vector<2x1x512xf32>
    %22 = vector.broadcast %20 : vector<1x16x1xf32> to vector<2x16x512xf32>
    %23 = vector.broadcast %21 : vector<2x1x512xf32> to vector<2x16x512xf32>
    %24 = arith.mulf %22, %23 : vector<2x16x512xf32>
    %25 = vector.extract_strided_slice %3 {offsets = [0, 1], sizes = [16, 1], strides = [1, 1]} : vector<16x3xf32> to vector<16x1xf32>
    %26 = vector.shape_cast %25 : vector<16x1xf32> to vector<1x16x1xf32>
    %27 = vector.extract_strided_slice %18 {offsets = [0, 1, 0], sizes = [2, 1, 512], strides = [1, 1, 1]} : vector<2x3x512xf32> to vector<2x1x512xf32>
    %28 = vector.broadcast %26 : vector<1x16x1xf32> to vector<2x16x512xf32>
    %29 = vector.broadcast %27 : vector<2x1x512xf32> to vector<2x16x512xf32>
    %30 = arith.mulf %28, %29 : vector<2x16x512xf32>
    %31 = arith.addf %24, %30 : vector<2x16x512xf32>
    %32 = vector.extract_strided_slice %3 {offsets = [0, 2], sizes = [16, 1], strides = [1, 1]} : vector<16x3xf32> to vector<16x1xf32>
    %33 = vector.shape_cast %32 : vector<16x1xf32> to vector<1x16x1xf32>
    %34 = vector.extract_strided_slice %18 {offsets = [0, 2, 0], sizes = [2, 1, 512], strides = [1, 1, 1]} : vector<2x3x512xf32> to vector<2x1x512xf32>
    %35 = vector.broadcast %33 : vector<1x16x1xf32> to vector<2x16x512xf32>
    %36 = vector.broadcast %34 : vector<2x1x512xf32> to vector<2x16x512xf32>
    %37 = arith.mulf %35, %36 : vector<2x16x512xf32>
    %38 = arith.addf %31, %37 : vector<2x16x512xf32>
    %39 = vector.shape_cast %4 : vector<16x1xf32> to vector<1x16x1xf32>
    %40 = vector.broadcast %39 : vector<1x16x1xf32> to vector<2x16x512xf32>
    %41 = arith.addf %38, %40 : vector<2x16x512xf32>
    %cst_20 = arith.constant 0.000000e+00 : f32
    %42 = vector.broadcast %cst_20 : f32 to vector<2x16x512xf32>
    %43 = arith.maximumf %41, %42 : vector<2x16x512xf32>
    %cst_21 = arith.constant dense<0.000000e+00> : vector<2x16xf32>
    %44 = vector.multi_reduction <add>, %43, %cst_21 [2] : vector<2x16x512xf32> to vector<2x16xf32>
    %45 = vector.shape_cast %44 : vector<2x16xf32> to vector<2x16x1xf32>
    %46 = arith.addf %17, %45 : vector<2x16x1xf32>
    %c0_22 = arith.constant 0 : index
    %c0_23 = arith.constant 0 : index
    %c512 = arith.constant 512 : index
    %47 = vector.load %arg2[%c0_22, %c0_23, %c512] : memref<2x3x2048xf32, #tpu.memory_space<vmem>>, vector<2x3x512xf32>
    %48 = vector.extract_strided_slice %3 {offsets = [0, 0], sizes = [16, 1], strides = [1, 1]} : vector<16x3xf32> to vector<16x1xf32>
    %49 = vector.shape_cast %48 : vector<16x1xf32> to vector<1x16x1xf32>
    %50 = vector.extract_strided_slice %47 {offsets = [0, 0, 0], sizes = [2, 1, 512], strides = [1, 1, 1]} : vector<2x3x512xf32> to vector<2x1x512xf32>
    %51 = vector.broadcast %49 : vector<1x16x1xf32> to vector<2x16x512xf32>
    %52 = vector.broadcast %50 : vector<2x1x512xf32> to vector<2x16x512xf32>
    %53 = arith.mulf %51, %52 : vector<2x16x512xf32>
    %54 = vector.extract_strided_slice %3 {offsets = [0, 1], sizes = [16, 1], strides = [1, 1]} : vector<16x3xf32> to vector<16x1xf32>
    %55 = vector.shape_cast %54 : vector<16x1xf32> to vector<1x16x1xf32>
    %56 = vector.extract_strided_slice %47 {offsets = [0, 1, 0], sizes = [2, 1, 512], strides = [1, 1, 1]} : vector<2x3x512xf32> to vector<2x1x512xf32>
    %57 = vector.broadcast %55 : vector<1x16x1xf32> to vector<2x16x512xf32>
    %58 = vector.broadcast %56 : vector<2x1x512xf32> to vector<2x16x512xf32>
    %59 = arith.mulf %57, %58 : vector<2x16x512xf32>
    %60 = arith.addf %53, %59 : vector<2x16x512xf32>
    %61 = vector.extract_strided_slice %3 {offsets = [0, 2], sizes = [16, 1], strides = [1, 1]} : vector<16x3xf32> to vector<16x1xf32>
    %62 = vector.shape_cast %61 : vector<16x1xf32> to vector<1x16x1xf32>
    %63 = vector.extract_strided_slice %47 {offsets = [0, 2, 0], sizes = [2, 1, 512], strides = [1, 1, 1]} : vector<2x3x512xf32> to vector<2x1x512xf32>
    %64 = vector.broadcast %62 : vector<1x16x1xf32> to vector<2x16x512xf32>
    %65 = vector.broadcast %63 : vector<2x1x512xf32> to vector<2x16x512xf32>
    %66 = arith.mulf %64, %65 : vector<2x16x512xf32>
    %67 = arith.addf %60, %66 : vector<2x16x512xf32>
    %68 = vector.shape_cast %4 : vector<16x1xf32> to vector<1x16x1xf32>
    %69 = vector.broadcast %68 : vector<1x16x1xf32> to vector<2x16x512xf32>
    %70 = arith.addf %67, %69 : vector<2x16x512xf32>
    %cst_24 = arith.constant 0.000000e+00 : f32
    %71 = vector.broadcast %cst_24 : f32 to vector<2x16x512xf32>
    %72 = arith.maximumf %70, %71 : vector<2x16x512xf32>
    %cst_25 = arith.constant dense<0.000000e+00> : vector<2x16xf32>
    %73 = vector.multi_reduction <add>, %72, %cst_25 [2] : vector<2x16x512xf32> to vector<2x16xf32>
    %74 = vector.shape_cast %73 : vector<2x16xf32> to vector<2x16x1xf32>
    %75 = arith.addf %46, %74 : vector<2x16x1xf32>
    %c0_26 = arith.constant 0 : index
    %c0_27 = arith.constant 0 : index
    %c1024 = arith.constant 1024 : index
    %76 = vector.load %arg2[%c0_26, %c0_27, %c1024] : memref<2x3x2048xf32, #tpu.memory_space<vmem>>, vector<2x3x512xf32>
    %77 = vector.extract_strided_slice %3 {offsets = [0, 0], sizes = [16, 1], strides = [1, 1]} : vector<16x3xf32> to vector<16x1xf32>
    %78 = vector.shape_cast %77 : vector<16x1xf32> to vector<1x16x1xf32>
    %79 = vector.extract_strided_slice %76 {offsets = [0, 0, 0], sizes = [2, 1, 512], strides = [1, 1, 1]} : vector<2x3x512xf32> to vector<2x1x512xf32>
    %80 = vector.broadcast %78 : vector<1x16x1xf32> to vector<2x16x512xf32>
    %81 = vector.broadcast %79 : vector<2x1x512xf32> to vector<2x16x512xf32>
    %82 = arith.mulf %80, %81 : vector<2x16x512xf32>
    %83 = vector.extract_strided_slice %3 {offsets = [0, 1], sizes = [16, 1], strides = [1, 1]} : vector<16x3xf32> to vector<16x1xf32>
    %84 = vector.shape_cast %83 : vector<16x1xf32> to vector<1x16x1xf32>
    %85 = vector.extract_strided_slice %76 {offsets = [0, 1, 0], sizes = [2, 1, 512], strides = [1, 1, 1]} : vector<2x3x512xf32> to vector<2x1x512xf32>
    %86 = vector.broadcast %84 : vector<1x16x1xf32> to vector<2x16x512xf32>
    %87 = vector.broadcast %85 : vector<2x1x512xf32> to vector<2x16x512xf32>
    %88 = arith.mulf %86, %87 : vector<2x16x512xf32>
    %89 = arith.addf %82, %88 : vector<2x16x512xf32>
    %90 = vector.extract_strided_slice %3 {offsets = [0, 2], sizes = [16, 1], strides = [1, 1]} : vector<16x3xf32> to vector<16x1xf32>
    %91 = vector.shape_cast %90 : vector<16x1xf32> to vector<1x16x1xf32>
    %92 = vector.extract_strided_slice %76 {offsets = [0, 2, 0], sizes = [2, 1, 512], strides = [1, 1, 1]} : vector<2x3x512xf32> to vector<2x1x512xf32>
    %93 = vector.broadcast %91 : vector<1x16x1xf32> to vector<2x16x512xf32>
    %94 = vector.broadcast %92 : vector<2x1x512xf32> to vector<2x16x512xf32>
    %95 = arith.mulf %93, %94 : vector<2x16x512xf32>
    %96 = arith.addf %89, %95 : vector<2x16x512xf32>
    %97 = vector.shape_cast %4 : vector<16x1xf32> to vector<1x16x1xf32>
    %98 = vector.broadcast %97 : vector<1x16x1xf32> to vector<2x16x512xf32>
    %99 = arith.addf %96, %98 : vector<2x16x512xf32>
    %cst_28 = arith.constant 0.000000e+00 : f32
    %100 = vector.broadcast %cst_28 : f32 to vector<2x16x512xf32>
    %101 = arith.maximumf %99, %100 : vector<2x16x512xf32>
    %cst_29 = arith.constant dense<0.000000e+00> : vector<2x16xf32>
    %102 = vector.multi_reduction <add>, %101, %cst_29 [2] : vector<2x16x512xf32> to vector<2x16xf32>
    %103 = vector.shape_cast %102 : vector<2x16xf32> to vector<2x16x1xf32>
    %104 = arith.addf %75, %103 : vector<2x16x1xf32>
    %c0_30 = arith.constant 0 : index
    %c0_31 = arith.constant 0 : index
    %c1536 = arith.constant 1536 : index
    %105 = vector.load %arg2[%c0_30, %c0_31, %c1536] : memref<2x3x2048xf32, #tpu.memory_space<vmem>>, vector<2x3x512xf32>
    %106 = vector.extract_strided_slice %3 {offsets = [0, 0], sizes = [16, 1], strides = [1, 1]} : vector<16x3xf32> to vector<16x1xf32>
    %107 = vector.shape_cast %106 : vector<16x1xf32> to vector<1x16x1xf32>
    %108 = vector.extract_strided_slice %105 {offsets = [0, 0, 0], sizes = [2, 1, 512], strides = [1, 1, 1]} : vector<2x3x512xf32> to vector<2x1x512xf32>
    %109 = vector.broadcast %107 : vector<1x16x1xf32> to vector<2x16x512xf32>
    %110 = vector.broadcast %108 : vector<2x1x512xf32> to vector<2x16x512xf32>
    %111 = arith.mulf %109, %110 : vector<2x16x512xf32>
    %112 = vector.extract_strided_slice %3 {offsets = [0, 1], sizes = [16, 1], strides = [1, 1]} : vector<16x3xf32> to vector<16x1xf32>
    %113 = vector.shape_cast %112 : vector<16x1xf32> to vector<1x16x1xf32>
    %114 = vector.extract_strided_slice %105 {offsets = [0, 1, 0], sizes = [2, 1, 512], strides = [1, 1, 1]} : vector<2x3x512xf32> to vector<2x1x512xf32>
    %115 = vector.broadcast %113 : vector<1x16x1xf32> to vector<2x16x512xf32>
    %116 = vector.broadcast %114 : vector<2x1x512xf32> to vector<2x16x512xf32>
    %117 = arith.mulf %115, %116 : vector<2x16x512xf32>
    %118 = arith.addf %111, %117 : vector<2x16x512xf32>
    %119 = vector.extract_strided_slice %3 {offsets = [0, 2], sizes = [16, 1], strides = [1, 1]} : vector<16x3xf32> to vector<16x1xf32>
    %120 = vector.shape_cast %119 : vector<16x1xf32> to vector<1x16x1xf32>
    %121 = vector.extract_strided_slice %105 {offsets = [0, 2, 0], sizes = [2, 1, 512], strides = [1, 1, 1]} : vector<2x3x512xf32> to vector<2x1x512xf32>
    %122 = vector.broadcast %120 : vector<1x16x1xf32> to vector<2x16x512xf32>
    %123 = vector.broadcast %121 : vector<2x1x512xf32> to vector<2x16x512xf32>
    %124 = arith.mulf %122, %123 : vector<2x16x512xf32>
    %125 = arith.addf %118, %124 : vector<2x16x512xf32>
    %126 = vector.shape_cast %4 : vector<16x1xf32> to vector<1x16x1xf32>
    %127 = vector.broadcast %126 : vector<1x16x1xf32> to vector<2x16x512xf32>
    %128 = arith.addf %125, %127 : vector<2x16x512xf32>
    %cst_32 = arith.constant 0.000000e+00 : f32
    %129 = vector.broadcast %cst_32 : f32 to vector<2x16x512xf32>
    %130 = arith.maximumf %128, %129 : vector<2x16x512xf32>
    %cst_33 = arith.constant dense<0.000000e+00> : vector<2x16xf32>
    %131 = vector.multi_reduction <add>, %130, %cst_33 [2] : vector<2x16x512xf32> to vector<2x16xf32>
    %132 = vector.shape_cast %131 : vector<2x16xf32> to vector<2x16x1xf32>
    %133 = arith.addf %104, %132 : vector<2x16x1xf32>
    %cst_34 = arith.constant 4.8828125E-4 : f32
    %134 = vector.broadcast %cst_34 : f32 to vector<2x16x1xf32>
    %135 = arith.mulf %133, %134 : vector<2x16x1xf32>
    %c0_35 = arith.constant 0 : index
    %c0_36 = arith.constant 0 : index
    %c0_37 = arith.constant 0 : index
    %136 = vector.load %arg1[%c0_35, %c0_36, %c0_37] : memref<2x10x96xf32, #tpu.memory_space<vmem>>, vector<1x10x96xf32>
    %137 = vector.shape_cast %136 : vector<1x10x96xf32> to vector<10x96xf32>
    %cst_38 = arith.constant dense<0.000000e+00> : vector<10x96xf32>
    %138 = tpu.matmul %137, %0, %cst_38 {dimension_numbers = #tpu.dot_dimension_numbers<[1], [0], [0], [1], [0, 0, 1, 1], [], []>} : vector<10x96xf32>, vector<96x96xf32>, vector<10x96xf32> -> vector<10x96xf32>
    "tpu.trace_start"() <{level = 10 : i32, message = "ne,me->nm"}> : () -> ()
    %cst_39 = arith.constant dense<0.000000e+00> : vector<10x10xf32>
    %139 = tpu.matmul %138, %137, %cst_39 {dimension_numbers = #tpu.dot_dimension_numbers<[1], [1], [0], [0], [0, 0, 1, 0], [], []>} : vector<10x96xf32>, vector<10x96xf32>, vector<10x10xf32> -> vector<10x10xf32>
    "tpu.trace_stop"() : () -> ()
    %140 = arith.addf %139, %2 : vector<10x10xf32>
    %cst_40 = arith.constant dense<0xFF800000> : vector<10xf32>
    %141 = vector.multi_reduction <maximumf>, %140, %cst_40 [1] : vector<10x10xf32> to vector<10xf32>
    %142 = vector.shape_cast %141 : vector<10xf32> to vector<10x1xf32>
    %143 = vector.broadcast %142 : vector<10x1xf32> to vector<10x10xf32>
    %144 = arith.subf %140, %143 : vector<10x10xf32>
    %145 = math.exp %144 : vector<10x10xf32>
    %cst_41 = arith.constant dense<0.000000e+00> : vector<10xf32>
    %146 = vector.multi_reduction <add>, %145, %cst_41 [1] : vector<10x10xf32> to vector<10xf32>
    %147 = vector.shape_cast %146 : vector<10xf32> to vector<10x1xf32>
    %148 = vector.broadcast %147 : vector<10x1xf32> to vector<10x10xf32>
    %149 = arith.divf %145, %148 : vector<10x10xf32>
    %cst_42 = arith.constant dense<0.000000e+00> : vector<10x96xf32>
    %150 = tpu.matmul %149, %137, %cst_42 {dimension_numbers = #tpu.dot_dimension_numbers<[1], [0], [0], [1], [0, 0, 1, 1], [], []>} : vector<10x10xf32>, vector<10x96xf32>, vector<10x96xf32> -> vector<10x96xf32>
    %cst_43 = arith.constant dense<0.000000e+00> : vector<10x64xf32>
    %151 = tpu.matmul %150, %1, %cst_43 {dimension_numbers = #tpu.dot_dimension_numbers<[1], [0], [0], [1], [0, 0, 1, 1], [], []>} : vector<10x96xf32>, vector<96x64xf32>, vector<10x64xf32> -> vector<10x64xf32>
    %cst_44 = arith.constant 0.000000e+00 : f32
    %152 = vector.broadcast %cst_44 : f32 to vector<10x64xf32>
    %153 = arith.maximumf %151, %152 : vector<10x64xf32>
    %154 = vector.extract_strided_slice %153 {offsets = [0, 0], sizes = [5, 64], strides = [1, 1]} : vector<10x64xf32> to vector<5x64xf32>
    %cst_45 = arith.constant dense<0.000000e+00> : vector<64xf32>
    %155 = vector.multi_reduction <add>, %154, %cst_45 [0] : vector<5x64xf32> to vector<64xf32>
    %156 = vector.shape_cast %155 : vector<64xf32> to vector<1x64xf32>
    %cst_46 = arith.constant 2.000000e-01 : f32
    %157 = vector.broadcast %cst_46 : f32 to vector<1x64xf32>
    %158 = arith.mulf %156, %157 : vector<1x64xf32>
    %159 = vector.extract_strided_slice %153 {offsets = [5, 0], sizes = [5, 64], strides = [1, 1]} : vector<10x64xf32> to vector<5x64xf32>
    %cst_47 = arith.constant dense<0.000000e+00> : vector<64xf32>
    %160 = vector.multi_reduction <add>, %159, %cst_47 [0] : vector<5x64xf32> to vector<64xf32>
    %161 = vector.shape_cast %160 : vector<64xf32> to vector<1x64xf32>
    %cst_48 = arith.constant 2.000000e-01 : f32
    %162 = vector.broadcast %cst_48 : f32 to vector<1x64xf32>
    %163 = arith.mulf %161, %162 : vector<1x64xf32>
    %164 = vector.extract_strided_slice %135 {offsets = [0, 0, 0], sizes = [1, 16, 1], strides = [1, 1, 1]} : vector<2x16x1xf32> to vector<1x16x1xf32>
    %165 = vector.shape_cast %164 : vector<1x16x1xf32> to vector<16x1xf32>
    %cst_49 = arith.constant dense<0.000000e+00> : vector<32x1xf32>
    %166 = tpu.matmul %5, %165, %cst_49 {dimension_numbers = #tpu.dot_dimension_numbers<[1], [0], [0], [1], [0, 0, 1, 1], [], []>} : vector<32x16xf32>, vector<16x1xf32>, vector<32x1xf32> -> vector<32x1xf32>
    %167 = arith.addf %166, %6 : vector<32x1xf32>
    %cst_50 = arith.constant 0.000000e+00 : f32
    %168 = vector.broadcast %cst_50 : f32 to vector<32x1xf32>
    %169 = arith.maximumf %167, %168 : vector<32x1xf32>
    %cst_51 = arith.constant dense<0.000000e+00> : vector<9x1xf32>
    %170 = tpu.matmul %7, %169, %cst_51 {dimension_numbers = #tpu.dot_dimension_numbers<[1], [0], [0], [1], [0, 0, 1, 1], [], []>} : vector<9x32xf32>, vector<32x1xf32>, vector<9x1xf32> -> vector<9x1xf32>
    %171 = arith.addf %170, %8 : vector<9x1xf32>
    %172 = vector.broadcast %171 : vector<9x1xf32> to vector<9x80xf32>
    %173 = arith.mulf %9, %172 : vector<9x80xf32>
    %cst_52 = arith.constant dense<0.000000e+00> : vector<9x80xf32>
    %174 = tpu.matmul %10, %173, %cst_52 {dimension_numbers = #tpu.dot_dimension_numbers<[1], [0], [0], [1], [0, 0, 1, 1], [], []>} : vector<9x9xf32>, vector<9x80xf32>, vector<9x80xf32> -> vector<9x80xf32>
    %cst_53 = arith.constant dense<0.000000e+00> : vector<9x80xf32>
    %175 = tpu.matmul %174, %11, %cst_53 {dimension_numbers = #tpu.dot_dimension_numbers<[1], [0], [0], [1], [0, 0, 1, 1], [], []>} : vector<9x80xf32>, vector<80x80xf32>, vector<9x80xf32> -> vector<9x80xf32>
    %cst_54 = arith.constant 0.000000e+00 : f32
    %176 = vector.broadcast %cst_54 : f32 to vector<9x80xf32>
    %177 = arith.maximumf %175, %176 : vector<9x80xf32>
    %cst_55 = arith.constant dense<0.000000e+00> : vector<9x80xf32>
    %178 = tpu.matmul %10, %177, %cst_55 {dimension_numbers = #tpu.dot_dimension_numbers<[1], [0], [0], [1], [0, 0, 1, 1], [], []>} : vector<9x9xf32>, vector<9x80xf32>, vector<9x80xf32> -> vector<9x80xf32>
    %cst_56 = arith.constant dense<0.000000e+00> : vector<9x64xf32>
    %179 = tpu.matmul %178, %12, %cst_56 {dimension_numbers = #tpu.dot_dimension_numbers<[1], [0], [0], [1], [0, 0, 1, 1], [], []>} : vector<9x80xf32>, vector<80x64xf32>, vector<9x64xf32> -> vector<9x64xf32>
    %cst_57 = arith.constant dense<0.000000e+00> : vector<64xf32>
    %180 = vector.multi_reduction <add>, %179, %cst_57 [0] : vector<9x64xf32> to vector<64xf32>
    %181 = vector.shape_cast %180 : vector<64xf32> to vector<1x64xf32>
    %cst_58 = arith.constant 0.111111112 : f32
    %182 = vector.broadcast %cst_58 : f32 to vector<1x64xf32>
    %183 = arith.mulf %181, %182 : vector<1x64xf32>
    %cst_59 = arith.constant dense<0.000000e+00> : vector<1x128xf32>
    %184 = tpu.matmul %158, %13, %cst_59 {dimension_numbers = #tpu.dot_dimension_numbers<[1], [0], [0], [1], [0, 0, 1, 1], [], []>} : vector<1x64xf32>, vector<64x128xf32>, vector<1x128xf32> -> vector<1x128xf32>
    %cst_60 = arith.constant dense<0.000000e+00> : vector<1x128xf32>
    %185 = tpu.matmul %163, %14, %cst_60 {dimension_numbers = #tpu.dot_dimension_numbers<[1], [0], [0], [1], [0, 0, 1, 1], [], []>} : vector<1x64xf32>, vector<64x128xf32>, vector<1x128xf32> -> vector<1x128xf32>
    %186 = arith.addf %184, %185 : vector<1x128xf32>
    %cst_61 = arith.constant dense<0.000000e+00> : vector<1x128xf32>
    %187 = tpu.matmul %183, %15, %cst_61 {dimension_numbers = #tpu.dot_dimension_numbers<[1], [0], [0], [1], [0, 0, 1, 1], [], []>} : vector<1x64xf32>, vector<64x128xf32>, vector<1x128xf32> -> vector<1x128xf32>
    %188 = arith.addf %186, %187 : vector<1x128xf32>
    %189 = arith.addf %188, %16 : vector<1x128xf32>
    %190 = tpu.transpose %171, [1, 0] : vector<9x1xf32> -> vector<1x9xf32>
    %cst_62 = arith.constant 0.000000e+00 : f32
    %191 = vector.broadcast %cst_62 : f32 to vector<1x119xf32>
    %192 = tpu.concatenate %190, %191 in 1 : vector<1x9xf32>, vector<1x119xf32> -> vector<1x128xf32>
    %193 = vector.shape_cast %189 : vector<1x128xf32> to vector<1x1x128xf32>
    %c0_63 = arith.constant 0 : index
    %c0_64 = arith.constant 0 : index
    %c0_65 = arith.constant 0 : index
    %194 = vector.load %arg4[%c0_63, %c0_64, %c0_65] : memref<2x2x128xf32, #tpu.memory_space<vmem>>, vector<1x1x128xf32>
    tpu.vector_store %arg4[%c0_63, %c0_64, %c0_65], %193 {strides = array<i32>} : memref<2x2x128xf32, #tpu.memory_space<vmem>>, vector<1x1x128xf32>,
    %195 = vector.shape_cast %192 : vector<1x128xf32> to vector<1x1x128xf32>
    %c0_66 = arith.constant 0 : index
    %c1 = arith.constant 1 : index
    %c0_67 = arith.constant 0 : index
    %196 = vector.load %arg4[%c0_66, %c1, %c0_67] : memref<2x2x128xf32, #tpu.memory_space<vmem>>, vector<1x1x128xf32>
    tpu.vector_store %arg4[%c0_66, %c1, %c0_67], %195 {strides = array<i32>} : memref<2x2x128xf32, #tpu.memory_space<vmem>>, vector<1x1x128xf32>,
    %c1_68 = arith.constant 1 : index
    %c0_69 = arith.constant 0 : index
    %c0_70 = arith.constant 0 : index
    %197 = vector.load %arg1[%c1_68, %c0_69, %c0_70] : memref<2x10x96xf32, #tpu.memory_space<vmem>>, vector<1x10x96xf32>
    %198 = vector.shape_cast %197 : vector<1x10x96xf32> to vector<10x96xf32>
    %cst_71 = arith.constant dense<0.000000e+00> : vector<10x96xf32>
    %199 = tpu.matmul %198, %0, %cst_71 {dimension_numbers = #tpu.dot_dimension_numbers<[1], [0], [0], [1], [0, 0, 1, 1], [], []>} : vector<10x96xf32>, vector<96x96xf32>, vector<10x96xf32> -> vector<10x96xf32>
    "tpu.trace_start"() <{level = 10 : i32, message = "ne,me->nm"}> : () -> ()
    %cst_72 = arith.constant dense<0.000000e+00> : vector<10x10xf32>
    %200 = tpu.matmul %199, %198, %cst_72 {dimension_numbers = #tpu.dot_dimension_numbers<[1], [1], [0], [0], [0, 0, 1, 0], [], []>} : vector<10x96xf32>, vector<10x96xf32>, vector<10x10xf32> -> vector<10x10xf32>
    "tpu.trace_stop"() : () -> ()
    %201 = arith.addf %200, %2 : vector<10x10xf32>
    %cst_73 = arith.constant dense<0xFF800000> : vector<10xf32>
    %202 = vector.multi_reduction <maximumf>, %201, %cst_73 [1] : vector<10x10xf32> to vector<10xf32>
    %203 = vector.shape_cast %202 : vector<10xf32> to vector<10x1xf32>
    %204 = vector.broadcast %203 : vector<10x1xf32> to vector<10x10xf32>
    %205 = arith.subf %201, %204 : vector<10x10xf32>
    %206 = math.exp %205 : vector<10x10xf32>
    %cst_74 = arith.constant dense<0.000000e+00> : vector<10xf32>
    %207 = vector.multi_reduction <add>, %206, %cst_74 [1] : vector<10x10xf32> to vector<10xf32>
    %208 = vector.shape_cast %207 : vector<10xf32> to vector<10x1xf32>
    %209 = vector.broadcast %208 : vector<10x1xf32> to vector<10x10xf32>
    %210 = arith.divf %206, %209 : vector<10x10xf32>
    %cst_75 = arith.constant dense<0.000000e+00> : vector<10x96xf32>
    %211 = tpu.matmul %210, %198, %cst_75 {dimension_numbers = #tpu.dot_dimension_numbers<[1], [0], [0], [1], [0, 0, 1, 1], [], []>} : vector<10x10xf32>, vector<10x96xf32>, vector<10x96xf32> -> vector<10x96xf32>
    %cst_76 = arith.constant dense<0.000000e+00> : vector<10x64xf32>
    %212 = tpu.matmul %211, %1, %cst_76 {dimension_numbers = #tpu.dot_dimension_numbers<[1], [0], [0], [1], [0, 0, 1, 1], [], []>} : vector<10x96xf32>, vector<96x64xf32>, vector<10x64xf32> -> vector<10x64xf32>
    %cst_77 = arith.constant 0.000000e+00 : f32
    %213 = vector.broadcast %cst_77 : f32 to vector<10x64xf32>
    %214 = arith.maximumf %212, %213 : vector<10x64xf32>
    %215 = vector.extract_strided_slice %214 {offsets = [0, 0], sizes = [5, 64], strides = [1, 1]} : vector<10x64xf32> to vector<5x64xf32>
    %cst_78 = arith.constant dense<0.000000e+00> : vector<64xf32>
    %216 = vector.multi_reduction <add>, %215, %cst_78 [0] : vector<5x64xf32> to vector<64xf32>
    %217 = vector.shape_cast %216 : vector<64xf32> to vector<1x64xf32>
    %cst_79 = arith.constant 2.000000e-01 : f32
    %218 = vector.broadcast %cst_79 : f32 to vector<1x64xf32>
    %219 = arith.mulf %217, %218 : vector<1x64xf32>
    %220 = vector.extract_strided_slice %214 {offsets = [5, 0], sizes = [5, 64], strides = [1, 1]} : vector<10x64xf32> to vector<5x64xf32>
    %cst_80 = arith.constant dense<0.000000e+00> : vector<64xf32>
    %221 = vector.multi_reduction <add>, %220, %cst_80 [0] : vector<5x64xf32> to vector<64xf32>
    %222 = vector.shape_cast %221 : vector<64xf32> to vector<1x64xf32>
    %cst_81 = arith.constant 2.000000e-01 : f32
    %223 = vector.broadcast %cst_81 : f32 to vector<1x64xf32>
    %224 = arith.mulf %222, %223 : vector<1x64xf32>
    %225 = vector.extract_strided_slice %135 {offsets = [1, 0, 0], sizes = [1, 16, 1], strides = [1, 1, 1]} : vector<2x16x1xf32> to vector<1x16x1xf32>
    %226 = vector.shape_cast %225 : vector<1x16x1xf32> to vector<16x1xf32>
    %cst_82 = arith.constant dense<0.000000e+00> : vector<32x1xf32>
    %227 = tpu.matmul %5, %226, %cst_82 {dimension_numbers = #tpu.dot_dimension_numbers<[1], [0], [0], [1], [0, 0, 1, 1], [], []>} : vector<32x16xf32>, vector<16x1xf32>, vector<32x1xf32> -> vector<32x1xf32>
    %228 = arith.addf %227, %6 : vector<32x1xf32>
    %cst_83 = arith.constant 0.000000e+00 : f32
    %229 = vector.broadcast %cst_83 : f32 to vector<32x1xf32>
    %230 = arith.maximumf %228, %229 : vector<32x1xf32>
    %cst_84 = arith.constant dense<0.000000e+00> : vector<9x1xf32>
    %231 = tpu.matmul %7, %230, %cst_84 {dimension_numbers = #tpu.dot_dimension_numbers<[1], [0], [0], [1], [0, 0, 1, 1], [], []>} : vector<9x32xf32>, vector<32x1xf32>, vector<9x1xf32> -> vector<9x1xf32>
    %232 = arith.addf %231, %8 : vector<9x1xf32>
    %233 = vector.broadcast %232 : vector<9x1xf32> to vector<9x80xf32>
    %234 = arith.mulf %9, %233 : vector<9x80xf32>
    %cst_85 = arith.constant dense<0.000000e+00> : vector<9x80xf32>
    %235 = tpu.matmul %10, %234, %cst_85 {dimension_numbers = #tpu.dot_dimension_numbers<[1], [0], [0], [1], [0, 0, 1, 1], [], []>} : vector<9x9xf32>, vector<9x80xf32>, vector<9x80xf32> -> vector<9x80xf32>
    %cst_86 = arith.constant dense<0.000000e+00> : vector<9x80xf32>
    %236 = tpu.matmul %235, %11, %cst_86 {dimension_numbers = #tpu.dot_dimension_numbers<[1], [0], [0], [1], [0, 0, 1, 1], [], []>} : vector<9x80xf32>, vector<80x80xf32>, vector<9x80xf32> -> vector<9x80xf32>
    %cst_87 = arith.constant 0.000000e+00 : f32
    %237 = vector.broadcast %cst_87 : f32 to vector<9x80xf32>
    %238 = arith.maximumf %236, %237 : vector<9x80xf32>
    %cst_88 = arith.constant dense<0.000000e+00> : vector<9x80xf32>
    %239 = tpu.matmul %10, %238, %cst_88 {dimension_numbers = #tpu.dot_dimension_numbers<[1], [0], [0], [1], [0, 0, 1, 1], [], []>} : vector<9x9xf32>, vector<9x80xf32>, vector<9x80xf32> -> vector<9x80xf32>
    %cst_89 = arith.constant dense<0.000000e+00> : vector<9x64xf32>
    %240 = tpu.matmul %239, %12, %cst_89 {dimension_numbers = #tpu.dot_dimension_numbers<[1], [0], [0], [1], [0, 0, 1, 1], [], []>} : vector<9x80xf32>, vector<80x64xf32>, vector<9x64xf32> -> vector<9x64xf32>
    %cst_90 = arith.constant dense<0.000000e+00> : vector<64xf32>
    %241 = vector.multi_reduction <add>, %240, %cst_90 [0] : vector<9x64xf32> to vector<64xf32>
    %242 = vector.shape_cast %241 : vector<64xf32> to vector<1x64xf32>
    %cst_91 = arith.constant 0.111111112 : f32
    %243 = vector.broadcast %cst_91 : f32 to vector<1x64xf32>
    %244 = arith.mulf %242, %243 : vector<1x64xf32>
    %cst_92 = arith.constant dense<0.000000e+00> : vector<1x128xf32>
    %245 = tpu.matmul %219, %13, %cst_92 {dimension_numbers = #tpu.dot_dimension_numbers<[1], [0], [0], [1], [0, 0, 1, 1], [], []>} : vector<1x64xf32>, vector<64x128xf32>, vector<1x128xf32> -> vector<1x128xf32>
    %cst_93 = arith.constant dense<0.000000e+00> : vector<1x128xf32>
    %246 = tpu.matmul %224, %14, %cst_93 {dimension_numbers = #tpu.dot_dimension_numbers<[1], [0], [0], [1], [0, 0, 1, 1], [], []>} : vector<1x64xf32>, vector<64x128xf32>, vector<1x128xf32> -> vector<1x128xf32>
    %247 = arith.addf %245, %246 : vector<1x128xf32>
    %cst_94 = arith.constant dense<0.000000e+00> : vector<1x128xf32>
    %248 = tpu.matmul %244, %15, %cst_94 {dimension_numbers = #tpu.dot_dimension_numbers<[1], [0], [0], [1], [0, 0, 1, 1], [], []>} : vector<1x64xf32>, vector<64x128xf32>, vector<1x128xf32> -> vector<1x128xf32>
    %249 = arith.addf %247, %248 : vector<1x128xf32>
    %250 = arith.addf %249, %16 : vector<1x128xf32>
    %251 = tpu.transpose %232, [1, 0] : vector<9x1xf32> -> vector<1x9xf32>
    %cst_95 = arith.constant 0.000000e+00 : f32
    %252 = vector.broadcast %cst_95 : f32 to vector<1x119xf32>
    %253 = tpu.concatenate %251, %252 in 1 : vector<1x9xf32>, vector<1x119xf32> -> vector<1x128xf32>
    %254 = vector.shape_cast %250 : vector<1x128xf32> to vector<1x1x128xf32>
    %c1_96 = arith.constant 1 : index
    %c0_97 = arith.constant 0 : index
    %c0_98 = arith.constant 0 : index
    %255 = vector.load %arg4[%c1_96, %c0_97, %c0_98] : memref<2x2x128xf32, #tpu.memory_space<vmem>>, vector<1x1x128xf32>
    tpu.vector_store %arg4[%c1_96, %c0_97, %c0_98], %254 {strides = array<i32>} : memref<2x2x128xf32, #tpu.memory_space<vmem>>, vector<1x1x128xf32>,
    %256 = vector.shape_cast %253 : vector<1x128xf32> to vector<1x1x128xf32>
    %c1_99 = arith.constant 1 : index
    %c1_100 = arith.constant 1 : index
    %c0_101 = arith.constant 0 : index
    %257 = vector.load %arg4[%c1_99, %c1_100, %c0_101] : memref<2x2x128xf32, #tpu.memory_space<vmem>>, vector<1x1x128xf32>
    tpu.vector_store %arg4[%c1_99, %c1_100, %c0_101], %256 {strides = array<i32>} : memref<2x2x128xf32, #tpu.memory_space<vmem>>, vector<1x1x128xf32>,
    return
  }
  func.func @transform_0(%arg0: i32) -> (i32, i32, i32) {
    %c0_i32 = arith.constant 0 : i32
    %c0_i32_0 = arith.constant 0 : i32
    %c0_i32_1 = arith.constant 0 : i32
    return %arg0, %c0_i32, %c0_i32_0 : i32, i32, i32
  }
  func.func @transform_1(%arg0: i32) -> (i32, i32, i32) {
    %c0_i32 = arith.constant 0 : i32
    %c0_i32_0 = arith.constant 0 : i32
    %c0_i32_1 = arith.constant 0 : i32
    return %arg0, %c0_i32, %c0_i32_0 : i32, i32, i32
  }
  func.func @transform_2(%arg0: i32) -> (i32, i32) {
    %c0_i32 = arith.constant 0 : i32
    %c0_i32_0 = arith.constant 0 : i32
    %c0_i32_1 = arith.constant 0 : i32
    return %c0_i32, %c0_i32_0 : i32, i32
  }
  func.func @transform_3(%arg0: i32) -> (i32, i32, i32) {
    %c0_i32 = arith.constant 0 : i32
    %c0_i32_0 = arith.constant 0 : i32
    %c0_i32_1 = arith.constant 0 : i32
    return %arg0, %c0_i32, %c0_i32_0 : i32, i32, i32
  }
}

</mosaic_0001>

<llo_original>
// kernel: fmer_forward.1
$region0: #{fmer_forward.1}
  #allocation0 [shape = 'u32[]', space=smem, size = 0x4, offset = 0x4, fixed_abs, tag = 'smem constant byte address 0x4 - core index']
  #allocation1 [shape = 'u32[144,128]{1,0:T(1,128)}', space=vmem, size = 0x12000, scoped, tag = 'internal scratch']
  %s0 = inlined_call_operand.vmem [shape: f32[2,10,96], index: 0, kind: input, shape index: {}]
  %s1 = inlined_call_operand.vmem [shape: f32[2,3,2048], index: 1, kind: input, shape index: {}]
  %s2 = inlined_call_operand.vmem [shape: f32[728,128], index: 2, kind: input, shape index: {}]
  %s3 = inlined_call_operand.vmem [shape: f32[2,2,128], index: 3, kind: output, shape index: {}]
  %s4 = sld [smem:[#allocation0]]
  $region22: #{fmer_forward.1} parent=0
    _
  %s6 = ssub.s32 1, %s4
  %s7 = scalar_select 0, %s6, %s4
  // Predicated region
  $region2: #{fmer_forward.1} parent=0 // pred_check
    _
  $region3: #{fmer_forward.1} parent=0 // pred_check_branch
    %9 = sbr.rel (0) target = $region5
  $region4: #{fmer_forward.1} parent=0 // pred_region
    _
  $region5: #{fmer_forward.1} parent=0 // pred_fallthru
    _
  // Predicated region
  $region6: #{fmer_forward.1} parent=0 // pred_check
    _
  $region7: #{fmer_forward.1} parent=0 // pred_check_branch
    %11 = sbr.rel (0) target = $region9
  $region8: #{fmer_forward.1} parent=0 // pred_region
    _
  $region9: #{fmer_forward.1} parent=0 // pred_fallthru
    _
  // Predicated region
  $region10: #{fmer_forward.1} parent=0 // pred_check
    _
  $region11: #{fmer_forward.1} parent=0 // pred_check_branch
    %13 = sbr.rel (0) target = $region13
  $region12: #{fmer_forward.1} parent=0 // pred_region
    _
  $region13: #{fmer_forward.1} parent=0 // pred_fallthru
    _
  %v14 = vld [vmem:[%s2] sm:$0xff]
  %v15 = vld [vmem:[%s2 + $0x8] sm:$0xff]
  %v16 = vld [vmem:[%s2 + $0x10] sm:$0xff]
  %v17 = vld [vmem:[%s2 + $0x18] sm:$0xff]
  %v18 = vld [vmem:[%s2 + $0x20] sm:$0xff]
  %v19 = vld [vmem:[%s2 + $0x28] sm:$0xff]
  %v20 = vld [vmem:[%s2 + $0x30] sm:$0xff]
  %v21 = vld [vmem:[%s2 + $0x38] sm:$0xff]
  %v22 = vld [vmem:[%s2 + $0x40] sm:$0xff]
  %v23 = vld [vmem:[%s2 + $0x48] sm:$0xff]
  %v24 = vld [vmem:[%s2 + $0x50] sm:$0xff]
  %v25 = vld [vmem:[%s2 + $0x58] sm:$0xff]
  %v26 = vld [vmem:[%s2 + $0x60] sm:$0xff]
  %v27 = vld [vmem:[%s2 + $0x68] sm:$0xff]
  %v28 = vld [vmem:[%s2 + $0x70] sm:$0xff]
  %v29 = vld [vmem:[%s2 + $0x78] sm:$0xff]
  %v30 = vld [vmem:[%s2 + $0x80] sm:$0xff]
  %v31 = vld [vmem:[%s2 + $0x88] sm:$0xff]
  %v32 = vld [vmem:[%s2 + $0x90] sm:$0xff]
  %v33 = vld [vmem:[%s2 + $0x98] sm:$0xff]
  %v34 = vld [vmem:[%s2 + $0xa0] sm:$0xff]
  %v35 = vld [vmem:[%s2 + $0xa8] sm:$0xff]
  %v36 = vld [vmem:[%s2 + $0xb0] sm:$0xff]
  %v37 = vld [vmem:[%s2 + $0xb8] sm:$0xff]
  %v38 = vld [vmem:[%s2 + $0xc0] sm:$0xff]
  %v39 = vld [vmem:[%s2 + $0xc8] sm:$0x3]
  %v40 = vld [vmem:[%s2 + $0xd0] sm:$0xff]
  %v41 = vld [vmem:[%s2 + $0xd8] sm:$0xff]
  %v42 = vld [vmem:[%s2 + $0xe0] sm:$0xff]
  %v43 = vld [vmem:[%s2 + $0xe8] sm:$0xff]
  %v44 = vld [vmem:[%s2 + $0xf0] sm:$0xff]
  %v45 = vld [vmem:[%s2 + $0xf8] sm:$0xff]
  %v46 = vld [vmem:[%s2 + $0x100] sm:$0xff]
  %v47 = vld [vmem:[%s2 + $0x108] sm:$0xff]
  %v48 = vld [vmem:[%s2 + $0x110] sm:$0xff]
  %v49 = vld [vmem:[%s2 + $0x118] sm:$0xff]
  %v50 = vld [vmem:[%s2 + $0x120] sm:$0xff]
  %v51 = vld [vmem:[%s2 + $0x128] sm:$0xff]
  %v52 = vld [vmem:[%s2 + $0x130] sm:$0xff]
  %v53 = vld [vmem:[%s2 + $0x138] sm:$0x1]
  %v54 = vld [vmem:[%s2 + $0x140] sm:$0xff]
  %v55 = vld [vmem:[%s2 + $0x148] sm:$0x1]
  %v56 = vld [vmem:[%s2 + $0x150] sm:$0xff]
  %v57 = vld [vmem:[%s2 + $0x158] sm:$0x1]
  %v58 = vld [vmem:[%s2 + $0x160] sm:$0xff]
  %v59 = vld [vmem:[%s2 + $0x168] sm:$0x1]
  %v60 = vld [vmem:[%s2 + $0x170] sm:$0xff]
  %v61 = vld [vmem:[%s2 + $0x178] sm:$0xff]
  %v62 = vld [vmem:[%s2 + $0x180] sm:$0xff]
  %v63 = vld [vmem:[%s2 + $0x188] sm:$0xff]
  %v64 = vld [vmem:[%s2 + $0x190] sm:$0xff]
  %v65 = vld [vmem:[%s2 + $0x198] sm:$0xff]
  %v66 = vld [vmem:[%s2 + $0x1a0] sm:$0xff]
  %v67 = vld [vmem:[%s2 + $0x1a8] sm:$0xff]
  %v68 = vld [vmem:[%s2 + $0x1b0] sm:$0xff]
  %v69 = vld [vmem:[%s2 + $0x1b8] sm:$0xff]
  %v70 = vld [vmem:[%s2 + $0x1c0] sm:$0xff]
  %v71 = vld [vmem:[%s2 + $0x1c8] sm:$0xff]
  %v72 = vld [vmem:[%s2 + $0x1d0] sm:$0xff]
  %v73 = vld [vmem:[%s2 + $0x1d8] sm:$0xff]
  %v74 = vld [vmem:[%s2 + $0x1e0] sm:$0xff]
  %v75 = vld [vmem:[%s2 + $0x1e8] sm:$0xff]
  %v76 = vld [vmem:[%s2 + $0x1f0] sm:$0xff]
  %v77 = vld [vmem:[%s2 + $0x1f8] sm:$0xff]
  %v78 = vld [vmem:[%s2 + $0x200] sm:$0xff]
  %v79 = vld [vmem:[%s2 + $0x208] sm:$0xff]
  %v80 = vld [vmem:[%s2 + $0x210] sm:$0xff]
  %v81 = vld [vmem:[%s2 + $0x218] sm:$0xff]
  %v82 = vld [vmem:[%s2 + $0x220] sm:$0xff]
  %v83 = vld [vmem:[%s2 + $0x228] sm:$0xff]
  %v84 = vld [vmem:[%s2 + $0x230] sm:$0xff]
  %v85 = vld [vmem:[%s2 + $0x238] sm:$0xff]
  %v86 = vld [vmem:[%s2 + $0x240] sm:$0xff]
  %v87 = vld [vmem:[%s2 + $0x248] sm:$0xff]
  %v88 = vld [vmem:[%s2 + $0x250] sm:$0xff]
  %v89 = vld [vmem:[%s2 + $0x258] sm:$0xff]
  %v90 = vld [vmem:[%s2 + $0x260] sm:$0xff]
  %v91 = vld [vmem:[%s2 + $0x268] sm:$0xff]
  %v92 = vld [vmem:[%s2 + $0x270] sm:$0xff]
  %v93 = vld [vmem:[%s2 + $0x278] sm:$0xff]
  %v94 = vld [vmem:[%s2 + $0x280] sm:$0xff]
  %v95 = vld [vmem:[%s2 + $0x288] sm:$0xff]
  %v96 = vld [vmem:[%s2 + $0x290] sm:$0xff]
  %v97 = vld [vmem:[%s2 + $0x298] sm:$0xff]
  %v98 = vld [vmem:[%s2 + $0x2a0] sm:$0xff]
  %v99 = vld [vmem:[%s2 + $0x2a8] sm:$0xff]
  %v100 = vld [vmem:[%s2 + $0x2b0] sm:$0xff]
  %v101 = vld [vmem:[%s2 + $0x2b8] sm:$0xff]
  %v102 = vld [vmem:[%s2 + $0x2c0] sm:$0xff]
  %v103 = vld [vmem:[%s2 + $0x2c8] sm:$0xff]
  %v104 = vld [vmem:[%s2 + $0x2d0] sm:$0x1]
  %v105 = vld [vmem:[%s1] sm:$0x77]
  %v106 = vld [vmem:[%s1 + $0x8] sm:$0x77]
  %v107 = vld [vmem:[%s1 + $0x40] sm:$0x77]
  %v108 = vld [vmem:[%s1 + $0x48] sm:$0x77]
  %110 = vset.pattern.permute.xlu0 0
  %111 = vperm.xlu0 %110, %v40
  %v112 = vpop.permute.xlu0 %111
  %115 = vset.pattern.permute.xlu0 0
  %116 = vperm.xlu0 %115, %v41
  %v117 = vpop.permute.xlu0 %116
  %v123 = vlaneseq
  %v124 = vshrl.u32 %v123, 7
  %v125 = vsub.s32 0, %v124
  %v126 = vrot.slane %v105, %v125
  %v127 = vlaneseq
  %v128 = vshrl.u32 %v127, 7
  %v129 = vsub.s32 4, %v128
  %v130 = vrot.slane %v105, %v129
  %v131 = vlaneseq
  %v132 = vshrl.u32 %v131, 7
  %v133 = vsub.s32 0, %v132
  %v134 = vrot.slane %v106, %v133
  %v135 = vlaneseq
  %v136 = vshrl.u32 %v135, 7
  %v137 = vsub.s32 4, %v136
  %v138 = vrot.slane %v106, %v137
  %v139 = vlaneseq
  %v140 = vshrl.u32 %v139, 7
  %v141 = vsub.s32 0, %v140
  %v142 = vrot.slane %v107, %v141
  %v143 = vlaneseq
  %v144 = vshrl.u32 %v143, 7
  %v145 = vsub.s32 4, %v144
  %v146 = vrot.slane %v107, %v145
  %v147 = vlaneseq
  %v148 = vshrl.u32 %v147, 7
  %v149 = vsub.s32 0, %v148
  %v150 = vrot.slane %v108, %v149
  %v151 = vlaneseq
  %v152 = vshrl.u32 %v151, 7
  %v153 = vsub.s32 4, %v152
  %v154 = vrot.slane %v108, %v153
  %v163 = vlaneseq
  %v164 = vshrl.u32 %v163, 7
  %v165 = vsub.s32 0, %v164
  %v166 = vrot.slane %v126, %v165
  %v167 = vlaneseq
  %v168 = vshrl.u32 %v167, 7
  %v169 = vsub.s32 0, %v168
  %v170 = vrot.slane %v130, %v169
  %v171 = vlaneseq
  %v172 = vshrl.u32 %v171, 7
  %v173 = vsub.s32 0, %v172
  %v174 = vrot.slane %v134, %v173
  %v175 = vlaneseq
  %v176 = vshrl.u32 %v175, 7
  %v177 = vsub.s32 0, %v176
  %v178 = vrot.slane %v138, %v177
  %v179 = vlaneseq
  %v180 = vshrl.u32 %v179, 7
  %v181 = vsub.s32 0, %v180
  %v182 = vrot.slane %v142, %v181
  %v183 = vlaneseq
  %v184 = vshrl.u32 %v183, 7
  %v185 = vsub.s32 0, %v184
  %v186 = vrot.slane %v146, %v185
  %v187 = vlaneseq
  %v188 = vshrl.u32 %v187, 7
  %v189 = vsub.s32 0, %v188
  %v190 = vrot.slane %v150, %v189
  %v191 = vlaneseq
  %v192 = vshrl.u32 %v191, 7
  %v193 = vsub.s32 0, %v192
  %v194 = vrot.slane %v154, %v193
  %v195 = vmul.f32 %v112, %v166
  %v196 = vmul.f32 %v112, %v170
  %v197 = vmul.f32 %v112, %v174
  %v198 = vmul.f32 %v112, %v178
  %v199 = vmul.f32 %v117, %v166
  %v200 = vmul.f32 %v117, %v170
  %v201 = vmul.f32 %v117, %v174
  %v202 = vmul.f32 %v117, %v178
  %v203 = vmul.f32 %v112, %v182
  %v204 = vmul.f32 %v112, %v186
  %v205 = vmul.f32 %v112, %v190
  %v206 = vmul.f32 %v112, %v194
  %v207 = vmul.f32 %v117, %v182
  %v208 = vmul.f32 %v117, %v186
  %v209 = vmul.f32 %v117, %v190
  %v210 = vmul.f32 %v117, %v194
  %211 = vset.pattern.permute.xlu0 1
  %212 = vperm.xlu0 %211, %v40
  %v213 = vpop.permute.xlu0 %212
  %215 = vset.pattern.permute.xlu0 1
  %216 = vperm.xlu0 %215, %v41
  %v217 = vpop.permute.xlu0 %216
  %v219 = vlaneseq
  %v220 = vshrl.u32 %v219, 7
  %v221 = vsub.s32 1, %v220
  %v222 = vrot.slane %v105, %v221
  %v223 = vlaneseq
  %v224 = vshrl.u32 %v223, 7
  %v225 = vsub.s32 5, %v224
  %v226 = vrot.slane %v105, %v225
  %v227 = vlaneseq
  %v228 = vshrl.u32 %v227, 7
  %v229 = vsub.s32 1, %v228
  %v230 = vrot.slane %v106, %v229
  %v231 = vlaneseq
  %v232 = vshrl.u32 %v231, 7
  %v233 = vsub.s32 5, %v232
  %v234 = vrot.slane %v106, %v233
  %v235 = vlaneseq
  %v236 = vshrl.u32 %v235, 7
  %v237 = vsub.s32 1, %v236
  %v238 = vrot.slane %v107, %v237
  %v239 = vlaneseq
  %v240 = vshrl.u32 %v239, 7
  %v241 = vsub.s32 5, %v240
  %v242 = vrot.slane %v107, %v241
  %v243 = vlaneseq
  %v244 = vshrl.u32 %v243, 7
  %v245 = vsub.s32 1, %v244
  %v246 = vrot.slane %v108, %v245
  %v247 = vlaneseq
  %v248 = vshrl.u32 %v247, 7
  %v249 = vsub.s32 5, %v248
  %v250 = vrot.slane %v108, %v249
  %v259 = vlaneseq
  %v260 = vshrl.u32 %v259, 7
  %v261 = vsub.s32 1, %v260
  %v262 = vrot.slane %v222, %v261
  %v263 = vlaneseq
  %v264 = vshrl.u32 %v263, 7
  %v265 = vsub.s32 1, %v264
  %v266 = vrot.slane %v226, %v265
  %v267 = vlaneseq
  %v268 = vshrl.u32 %v267, 7
  %v269 = vsub.s32 1, %v268
  %v270 = vrot.slane %v230, %v269
  %v271 = vlaneseq
  %v272 = vshrl.u32 %v271, 7
  %v273 = vsub.s32 1, %v272
  %v274 = vrot.slane %v234, %v273
  %v275 = vlaneseq
  %v276 = vshrl.u32 %v275, 7
  %v277 = vsub.s32 1, %v276
  %v278 = vrot.slane %v238, %v277
  %v279 = vlaneseq
  %v280 = vshrl.u32 %v279, 7
  %v281 = vsub.s32 1, %v280
  %v282 = vrot.slane %v242, %v281
  %v283 = vlaneseq
  %v284 = vshrl.u32 %v283, 7
  %v285 = vsub.s32 1, %v284
  %v286 = vrot.slane %v246, %v285
  %v287 = vlaneseq
  %v288 = vshrl.u32 %v287, 7
  %v289 = vsub.s32 1, %v288
  %v290 = vrot.slane %v250, %v289
  %v291 = vmul.f32 %v213, %v262
  %v292 = vmul.f32 %v213, %v266
  %v293 = vmul.f32 %v213, %v270
  %v294 = vmul.f32 %v213, %v274
  %v295 = vmul.f32 %v217, %v262
  %v296 = vmul.f32 %v217, %v266
  %v297 = vmul.f32 %v217, %v270
  %v298 = vmul.f32 %v217, %v274
  %v299 = vmul.f32 %v213, %v278
  %v300 = vmul.f32 %v213, %v282
  %v301 = vmul.f32 %v213, %v286
  %v302 = vmul.f32 %v213, %v290
  %v303 = vmul.f32 %v217, %v278
  %v304 = vmul.f32 %v217, %v282
  %v305 = vmul.f32 %v217, %v286
  %v306 = vmul.f32 %v217, %v290
  %v307 = vadd.f32 %v195, %v291
  %v308 = vadd.f32 %v196, %v292
  %v309 = vadd.f32 %v197, %v293
  %v310 = vadd.f32 %v198, %v294
  %v311 = vadd.f32 %v199, %v295
  %v312 = vadd.f32 %v200, %v296
  %v313 = vadd.f32 %v201, %v297
  %v314 = vadd.f32 %v202, %v298
  %v315 = vadd.f32 %v203, %v299
  %v316 = vadd.f32 %v204, %v300
  %v317 = vadd.f32 %v205, %v301
  %v318 = vadd.f32 %v206, %v302
  %v319 = vadd.f32 %v207, %v303
  %v320 = vadd.f32 %v208, %v304
  %v321 = vadd.f32 %v209, %v305
  %v322 = vadd.f32 %v210, %v306
  %323 = vset.pattern.permute.xlu0 2
  %324 = vperm.xlu0 %323, %v40
  %v325 = vpop.permute.xlu0 %324
  %327 = vset.pattern.permute.xlu0 2
  %328 = vperm.xlu0 %327, %v41
  %v329 = vpop.permute.xlu0 %328
  %v331 = vlaneseq
  %v332 = vshrl.u32 %v331, 7
  %v333 = vsub.s32 2, %v332
  %v334 = vrot.slane %v105, %v333
  %v335 = vlaneseq
  %v336 = vshrl.u32 %v335, 7
  %v337 = vsub.s32 6, %v336
  %v338 = vrot.slane %v105, %v337
  %v339 = vlaneseq
  %v340 = vshrl.u32 %v339, 7
  %v341 = vsub.s32 2, %v340
  %v342 = vrot.slane %v106, %v341
  %v343 = vlaneseq
  %v344 = vshrl.u32 %v343, 7
  %v345 = vsub.s32 6, %v344
  %v346 = vrot.slane %v106, %v345
  %v347 = vlaneseq
  %v348 = vshrl.u32 %v347, 7
  %v349 = vsub.s32 2, %v348
  %v350 = vrot.slane %v107, %v349
  %v351 = vlaneseq
  %v352 = vshrl.u32 %v351, 7
  %v353 = vsub.s32 6, %v352
  %v354 = vrot.slane %v107, %v353
  %v355 = vlaneseq
  %v356 = vshrl.u32 %v355, 7
  %v357 = vsub.s32 2, %v356
  %v358 = vrot.slane %v108, %v357
  %v359 = vlaneseq
  %v360 = vshrl.u32 %v359, 7
  %v361 = vsub.s32 6, %v360
  %v362 = vrot.slane %v108, %v361
  %v371 = vlaneseq
  %v372 = vshrl.u32 %v371, 7
  %v373 = vsub.s32 2, %v372
  %v374 = vrot.slane %v334, %v373
  %v375 = vlaneseq
  %v376 = vshrl.u32 %v375, 7
  %v377 = vsub.s32 2, %v376
  %v378 = vrot.slane %v338, %v377
  %v379 = vlaneseq
  %v380 = vshrl.u32 %v379, 7
  %v381 = vsub.s32 2, %v380
  %v382 = vrot.slane %v342, %v381
  %v383 = vlaneseq
  %v384 = vshrl.u32 %v383, 7
  %v385 = vsub.s32 2, %v384
  %v386 = vrot.slane %v346, %v385
  %v387 = vlaneseq
  %v388 = vshrl.u32 %v387, 7
  %v389 = vsub.s32 2, %v388
  %v390 = vrot.slane %v350, %v389
  %v391 = vlaneseq
  %v392 = vshrl.u32 %v391, 7
  %v393 = vsub.s32 2, %v392
  %v394 = vrot.slane %v354, %v393
  %v395 = vlaneseq
  %v396 = vshrl.u32 %v395, 7
  %v397 = vsub.s32 2, %v396
  %v398 = vrot.slane %v358, %v397
  %v399 = vlaneseq
  %v400 = vshrl.u32 %v399, 7
  %v401 = vsub.s32 2, %v400
  %v402 = vrot.slane %v362, %v401
  %v403 = vmul.f32 %v325, %v374
  %v404 = vmul.f32 %v325, %v378
  %v405 = vmul.f32 %v325, %v382
  %v406 = vmul.f32 %v325, %v386
  %v407 = vmul.f32 %v329, %v374
  %v408 = vmul.f32 %v329, %v378
  %v409 = vmul.f32 %v329, %v382
  %v410 = vmul.f32 %v329, %v386
  %v411 = vmul.f32 %v325, %v390
  %v412 = vmul.f32 %v325, %v394
  %v413 = vmul.f32 %v325, %v398
  %v414 = vmul.f32 %v325, %v402
  %v415 = vmul.f32 %v329, %v390
  %v416 = vmul.f32 %v329, %v394
  %v417 = vmul.f32 %v329, %v398
  %v418 = vmul.f32 %v329, %v402
  %v419 = vadd.f32 %v307, %v403
  %v420 = vadd.f32 %v308, %v404
  %v421 = vadd.f32 %v309, %v405
  %v422 = vadd.f32 %v310, %v406
  %v423 = vadd.f32 %v311, %v407
  %v424 = vadd.f32 %v312, %v408
  %v425 = vadd.f32 %v313, %v409
  %v426 = vadd.f32 %v314, %v410
  %v427 = vadd.f32 %v315, %v411
  %v428 = vadd.f32 %v316, %v412
  %v429 = vadd.f32 %v317, %v413
  %v430 = vadd.f32 %v318, %v414
  %v431 = vadd.f32 %v319, %v415
  %v432 = vadd.f32 %v320, %v416
  %v433 = vadd.f32 %v321, %v417
  %v434 = vadd.f32 %v322, %v418
  %436 = vset.pattern.permute.xlu0 0
  %437 = vperm.xlu0 %436, %v42
  %v438 = vpop.permute.xlu0 %437
  %441 = vset.pattern.permute.xlu0 0
  %442 = vperm.xlu0 %441, %v43
  %v443 = vpop.permute.xlu0 %442
  %v445 = vadd.f32 %v419, %v438
  %v446 = vadd.f32 %v420, %v438
  %v447 = vadd.f32 %v421, %v438
  %v448 = vadd.f32 %v422, %v438
  %v449 = vadd.f32 %v423, %v443
  %v450 = vadd.f32 %v424, %v443
  %v451 = vadd.f32 %v425, %v443
  %v452 = vadd.f32 %v426, %v443
  %v453 = vadd.f32 %v427, %v438
  %v454 = vadd.f32 %v428, %v438
  %v455 = vadd.f32 %v429, %v438
  %v456 = vadd.f32 %v430, %v438
  %v457 = vadd.f32 %v431, %v443
  %v458 = vadd.f32 %v432, %v443
  %v459 = vadd.f32 %v433, %v443
  %v460 = vadd.f32 %v434, %v443
  %v461 = vmax.f32 %v445, 0.0
  %v462 = vmax.f32 %v446, 0.0
  %v463 = vmax.f32 %v447, 0.0
  %v464 = vmax.f32 %v448, 0.0
  %v465 = vmax.f32 %v449, 0.0
  %v466 = vmax.f32 %v450, 0.0
  %v467 = vmax.f32 %v451, 0.0
  %v468 = vmax.f32 %v452, 0.0
  %v469 = vmax.f32 %v453, 0.0
  %v470 = vmax.f32 %v454, 0.0
  %v471 = vmax.f32 %v455, 0.0
  %v472 = vmax.f32 %v456, 0.0
  %v473 = vmax.f32 %v457, 0.0
  %v474 = vmax.f32 %v458, 0.0
  %v475 = vmax.f32 %v459, 0.0
  %v476 = vmax.f32 %v460, 0.0
  %v477 = vadd.f32 %v461, %v462
  %v478 = vadd.f32 %v477, %v463
  %v479 = vadd.f32 %v478, %v464
  %480 = vadd.xlane.f32.xlu0 %v479
  %v481 = vpop.xlane.xlu0 %480
  %v482 = vadd.f32 %v465, %v466
  %v483 = vadd.f32 %v482, %v467
  %v484 = vadd.f32 %v483, %v468
  %485 = vadd.xlane.f32.xlu0 %v484
  %v486 = vpop.xlane.xlu0 %485
  %v487 = vadd.f32 %v469, %v470
  %v488 = vadd.f32 %v487, %v471
  %v489 = vadd.f32 %v488, %v472
  %490 = vadd.xlane.f32.xlu0 %v489
  %v491 = vpop.xlane.xlu0 %490
  %v492 = vadd.f32 %v473, %v474
  %v493 = vadd.f32 %v492, %v475
  %v494 = vadd.f32 %v493, %v476
  %495 = vadd.xlane.f32.xlu0 %v494
  %v496 = vpop.xlane.xlu0 %495
  %v497 = vadd.f32 %v481, 0.0
  %v498 = vadd.f32 %v486, 0.0
  %v499 = vadd.f32 %v491, 0.0
  %v500 = vadd.f32 %v496, 0.0
  %v501 = vld [vmem:[%s1 + $0x10] sm:$0x77]
  %v502 = vld [vmem:[%s1 + $0x18] sm:$0x77]
  %v503 = vld [vmem:[%s1 + $0x50] sm:$0x77]
  %v504 = vld [vmem:[%s1 + $0x58] sm:$0x77]
  %v509 = vlaneseq
  %v510 = vshrl.u32 %v509, 7
  %v511 = vsub.s32 0, %v510
  %v512 = vrot.slane %v501, %v511
  %v513 = vlaneseq
  %v514 = vshrl.u32 %v513, 7
  %v515 = vsub.s32 4, %v514
  %v516 = vrot.slane %v501, %v515
  %v517 = vlaneseq
  %v518 = vshrl.u32 %v517, 7
  %v519 = vsub.s32 0, %v518
  %v520 = vrot.slane %v502, %v519
  %v521 = vlaneseq
  %v522 = vshrl.u32 %v521, 7
  %v523 = vsub.s32 4, %v522
  %v524 = vrot.slane %v502, %v523
  %v525 = vlaneseq
  %v526 = vshrl.u32 %v525, 7
  %v527 = vsub.s32 0, %v526
  %v528 = vrot.slane %v503, %v527
  %v529 = vlaneseq
  %v530 = vshrl.u32 %v529, 7
  %v531 = vsub.s32 4, %v530
  %v532 = vrot.slane %v503, %v531
  %v533 = vlaneseq
  %v534 = vshrl.u32 %v533, 7
  %v535 = vsub.s32 0, %v534
  %v536 = vrot.slane %v504, %v535
  %v537 = vlaneseq
  %v538 = vshrl.u32 %v537, 7
  %v539 = vsub.s32 4, %v538
  %v540 = vrot.slane %v504, %v539
  %v549 = vlaneseq
  %v550 = vshrl.u32 %v549, 7
  %v551 = vsub.s32 0, %v550
  %v552 = vrot.slane %v512, %v551
  %v553 = vlaneseq
  %v554 = vshrl.u32 %v553, 7
  %v555 = vsub.s32 0, %v554
  %v556 = vrot.slane %v516, %v555
  %v557 = vlaneseq
  %v558 = vshrl.u32 %v557, 7
  %v559 = vsub.s32 0, %v558
  %v560 = vrot.slane %v520, %v559
  %v561 = vlaneseq
  %v562 = vshrl.u32 %v561, 7
  %v563 = vsub.s32 0, %v562
  %v564 = vrot.slane %v524, %v563
  %v565 = vlaneseq
  %v566 = vshrl.u32 %v565, 7
  %v567 = vsub.s32 0, %v566
  %v568 = vrot.slane %v528, %v567
  %v569 = vlaneseq
  %v570 = vshrl.u32 %v569, 7
  %v571 = vsub.s32 0, %v570
  %v572 = vrot.slane %v532, %v571
  %v573 = vlaneseq
  %v574 = vshrl.u32 %v573, 7
  %v575 = vsub.s32 0, %v574
  %v576 = vrot.slane %v536, %v575
  %v577 = vlaneseq
  %v578 = vshrl.u32 %v577, 7
  %v579 = vsub.s32 0, %v578
  %v580 = vrot.slane %v540, %v579
  %v581 = vmul.f32 %v112, %v552
  %v582 = vmul.f32 %v112, %v556
  %v583 = vmul.f32 %v112, %v560
  %v584 = vmul.f32 %v112, %v564
  %v585 = vmul.f32 %v117, %v552
  %v586 = vmul.f32 %v117, %v556
  %v587 = vmul.f32 %v117, %v560
  %v588 = vmul.f32 %v117, %v564
  %v589 = vmul.f32 %v112, %v568
  %v590 = vmul.f32 %v112, %v572
  %v591 = vmul.f32 %v112, %v576
  %v592 = vmul.f32 %v112, %v580
  %v593 = vmul.f32 %v117, %v568
  %v594 = vmul.f32 %v117, %v572
  %v595 = vmul.f32 %v117, %v576
  %v596 = vmul.f32 %v117, %v580
  %v597 = vlaneseq
  %v598 = vshrl.u32 %v597, 7
  %v599 = vsub.s32 1, %v598
  %v600 = vrot.slane %v501, %v599
  %v601 = vlaneseq
  %v602 = vshrl.u32 %v601, 7
  %v603 = vsub.s32 5, %v602
  %v604 = vrot.slane %v501, %v603
  %v605 = vlaneseq
  %v606 = vshrl.u32 %v605, 7
  %v607 = vsub.s32 1, %v606
  %v608 = vrot.slane %v502, %v607
  %v609 = vlaneseq
  %v610 = vshrl.u32 %v609, 7
  %v611 = vsub.s32 5, %v610
  %v612 = vrot.slane %v502, %v611
  %v613 = vlaneseq
  %v614 = vshrl.u32 %v613, 7
  %v615 = vsub.s32 1, %v614
  %v616 = vrot.slane %v503, %v615
  %v617 = vlaneseq
  %v618 = vshrl.u32 %v617, 7
  %v619 = vsub.s32 5, %v618
  %v620 = vrot.slane %v503, %v619
  %v621 = vlaneseq
  %v622 = vshrl.u32 %v621, 7
  %v623 = vsub.s32 1, %v622
  %v624 = vrot.slane %v504, %v623
  %v625 = vlaneseq
  %v626 = vshrl.u32 %v625, 7
  %v627 = vsub.s32 5, %v626
  %v628 = vrot.slane %v504, %v627
  %v637 = vlaneseq
  %v638 = vshrl.u32 %v637, 7
  %v639 = vsub.s32 1, %v638
  %v640 = vrot.slane %v600, %v639
  %v641 = vlaneseq
  %v642 = vshrl.u32 %v641, 7
  %v643 = vsub.s32 1, %v642
  %v644 = vrot.slane %v604, %v643
  %v645 = vlaneseq
  %v646 = vshrl.u32 %v645, 7
  %v647 = vsub.s32 1, %v646
  %v648 = vrot.slane %v608, %v647
  %v649 = vlaneseq
  %v650 = vshrl.u32 %v649, 7
  %v651 = vsub.s32 1, %v650
  %v652 = vrot.slane %v612, %v651
  %v653 = vlaneseq
  %v654 = vshrl.u32 %v653, 7
  %v655 = vsub.s32 1, %v654
  %v656 = vrot.slane %v616, %v655
  %v657 = vlaneseq
  %v658 = vshrl.u32 %v657, 7
  %v659 = vsub.s32 1, %v658
  %v660 = vrot.slane %v620, %v659
  %v661 = vlaneseq
  %v662 = vshrl.u32 %v661, 7
  %v663 = vsub.s32 1, %v662
  %v664 = vrot.slane %v624, %v663
  %v665 = vlaneseq
  %v666 = vshrl.u32 %v665, 7
  %v667 = vsub.s32 1, %v666
  %v668 = vrot.slane %v628, %v667
  %v669 = vmul.f32 %v213, %v640
  %v670 = vmul.f32 %v213, %v644
  %v671 = vmul.f32 %v213, %v648
  %v672 = vmul.f32 %v213, %v652
  %v673 = vmul.f32 %v217, %v640
  %v674 = vmul.f32 %v217, %v644
  %v675 = vmul.f32 %v217, %v648
  %v676 = vmul.f32 %v217, %v652
  %v677 = vmul.f32 %v213, %v656
  %v678 = vmul.f32 %v213, %v660
  %v679 = vmul.f32 %v213, %v664
  %v680 = vmul.f32 %v213, %v668
  %v681 = vmul.f32 %v217, %v656
  %v682 = vmul.f32 %v217, %v660
  %v683 = vmul.f32 %v217, %v664
  %v684 = vmul.f32 %v217, %v668
  %v685 = vadd.f32 %v581, %v669
  %v686 = vadd.f32 %v582, %v670
  %v687 = vadd.f32 %v583, %v671
  %v688 = vadd.f32 %v584, %v672
  %v689 = vadd.f32 %v585, %v673
  %v690 = vadd.f32 %v586, %v674
  %v691 = vadd.f32 %v587, %v675
  %v692 = vadd.f32 %v588, %v676
  %v693 = vadd.f32 %v589, %v677
  %v694 = vadd.f32 %v590, %v678
  %v695 = vadd.f32 %v591, %v679
  %v696 = vadd.f32 %v592, %v680
  %v697 = vadd.f32 %v593, %v681
  %v698 = vadd.f32 %v594, %v682
  %v699 = vadd.f32 %v595, %v683
  %v700 = vadd.f32 %v596, %v684
  %v701 = vlaneseq
  %v702 = vshrl.u32 %v701, 7
  %v703 = vsub.s32 2, %v702
  %v704 = vrot.slane %v501, %v703
  %v705 = vlaneseq
  %v706 = vshrl.u32 %v705, 7
  %v707 = vsub.s32 6, %v706
  %v708 = vrot.slane %v501, %v707
  %v709 = vlaneseq
  %v710 = vshrl.u32 %v709, 7
  %v711 = vsub.s32 2, %v710
  %v712 = vrot.slane %v502, %v711
  %v713 = vlaneseq
  %v714 = vshrl.u32 %v713, 7
  %v715 = vsub.s32 6, %v714
  %v716 = vrot.slane %v502, %v715
  %v717 = vlaneseq
  %v718 = vshrl.u32 %v717, 7
  %v719 = vsub.s32 2, %v718
  %v720 = vrot.slane %v503, %v719
  %v721 = vlaneseq
  %v722 = vshrl.u32 %v721, 7
  %v723 = vsub.s32 6, %v722
  %v724 = vrot.slane %v503, %v723
  %v725 = vlaneseq
  %v726 = vshrl.u32 %v725, 7
  %v727 = vsub.s32 2, %v726
  %v728 = vrot.slane %v504, %v727
  %v729 = vlaneseq
  %v730 = vshrl.u32 %v729, 7
  %v731 = vsub.s32 6, %v730
  %v732 = vrot.slane %v504, %v731
  %v741 = vlaneseq
  %v742 = vshrl.u32 %v741, 7
  %v743 = vsub.s32 2, %v742
  %v744 = vrot.slane %v704, %v743
  %v745 = vlaneseq
  %v746 = vshrl.u32 %v745, 7
  %v747 = vsub.s32 2, %v746
  %v748 = vrot.slane %v708, %v747
  %v749 = vlaneseq
  %v750 = vshrl.u32 %v749, 7
  %v751 = vsub.s32 2, %v750
  %v752 = vrot.slane %v712, %v751
  %v753 = vlaneseq
  %v754 = vshrl.u32 %v753, 7
  %v755 = vsub.s32 2, %v754
  %v756 = vrot.slane %v716, %v755
  %v757 = vlaneseq
  %v758 = vshrl.u32 %v757, 7
  %v759 = vsub.s32 2, %v758
  %v760 = vrot.slane %v720, %v759
  %v761 = vlaneseq
  %v762 = vshrl.u32 %v761, 7
  %v763 = vsub.s32 2, %v762
  %v764 = vrot.slane %v724, %v763
  %v765 = vlaneseq
  %v766 = vshrl.u32 %v765, 7
  %v767 = vsub.s32 2, %v766
  %v768 = vrot.slane %v728, %v767
  %v769 = vlaneseq
  %v770 = vshrl.u32 %v769, 7
  %v771 = vsub.s32 2, %v770
  %v772 = vrot.slane %v732, %v771
  %v773 = vmul.f32 %v325, %v744
  %v774 = vmul.f32 %v325, %v748
  %v775 = vmul.f32 %v325, %v752
  %v776 = vmul.f32 %v325, %v756
  %v777 = vmul.f32 %v329, %v744
  %v778 = vmul.f32 %v329, %v748
  %v779 = vmul.f32 %v329, %v752
  %v780 = vmul.f32 %v329, %v756
  %v781 = vmul.f32 %v325, %v760
  %v782 = vmul.f32 %v325, %v764
  %v783 = vmul.f32 %v325, %v768
  %v784 = vmul.f32 %v325, %v772
  %v785 = vmul.f32 %v329, %v760
  %v786 = vmul.f32 %v329, %v764
  %v787 = vmul.f32 %v329, %v768
  %v788 = vmul.f32 %v329, %v772
  %v789 = vadd.f32 %v685, %v773
  %v790 = vadd.f32 %v686, %v774
  %v791 = vadd.f32 %v687, %v775
  %v792 = vadd.f32 %v688, %v776
  %v793 = vadd.f32 %v689, %v777
  %v794 = vadd.f32 %v690, %v778
  %v795 = vadd.f32 %v691, %v779
  %v796 = vadd.f32 %v692, %v780
  %v797 = vadd.f32 %v693, %v781
  %v798 = vadd.f32 %v694, %v782
  %v799 = vadd.f32 %v695, %v783
  %v800 = vadd.f32 %v696, %v784
  %v801 = vadd.f32 %v697, %v785
  %v802 = vadd.f32 %v698, %v786
  %v803 = vadd.f32 %v699, %v787
  %v804 = vadd.f32 %v700, %v788
  %v805 = vadd.f32 %v789, %v438
  %v806 = vadd.f32 %v790, %v438
  %v807 = vadd.f32 %v791, %v438
  %v808 = vadd.f32 %v792, %v438
  %v809 = vadd.f32 %v793, %v443
  %v810 = vadd.f32 %v794, %v443
  %v811 = vadd.f32 %v795, %v443
  %v812 = vadd.f32 %v796, %v443
  %v813 = vadd.f32 %v797, %v438
  %v814 = vadd.f32 %v798, %v438
  %v815 = vadd.f32 %v799, %v438
  %v816 = vadd.f32 %v800, %v438
  %v817 = vadd.f32 %v801, %v443
  %v818 = vadd.f32 %v802, %v443
  %v819 = vadd.f32 %v803, %v443
  %v820 = vadd.f32 %v804, %v443
  %v821 = vmax.f32 %v805, 0.0
  %v822 = vmax.f32 %v806, 0.0
  %v823 = vmax.f32 %v807, 0.0
  %v824 = vmax.f32 %v808, 0.0
  %v825 = vmax.f32 %v809, 0.0
  %v826 = vmax.f32 %v810, 0.0
  %v827 = vmax.f32 %v811, 0.0
  %v828 = vmax.f32 %v812, 0.0
  %v829 = vmax.f32 %v813, 0.0
  %v830 = vmax.f32 %v814, 0.0
  %v831 = vmax.f32 %v815, 0.0
  %v832 = vmax.f32 %v816, 0.0
  %v833 = vmax.f32 %v817, 0.0
  %v834 = vmax.f32 %v818, 0.0
  %v835 = vmax.f32 %v819, 0.0
  %v836 = vmax.f32 %v820, 0.0
  %v837 = vadd.f32 %v821, %v822
  %v838 = vadd.f32 %v837, %v823
  %v839 = vadd.f32 %v838, %v824
  %840 = vadd.xlane.f32.xlu0 %v839
  %v841 = vpop.xlane.xlu0 %840
  %v842 = vadd.f32 %v825, %v826
  %v843 = vadd.f32 %v842, %v827
  %v844 = vadd.f32 %v843, %v828
  %845 = vadd.xlane.f32.xlu0 %v844
  %v846 = vpop.xlane.xlu0 %845
  %v847 = vadd.f32 %v829, %v830
  %v848 = vadd.f32 %v847, %v831
  %v849 = vadd.f32 %v848, %v832
  %850 = vadd.xlane.f32.xlu0 %v849
  %v851 = vpop.xlane.xlu0 %850
  %v852 = vadd.f32 %v833, %v834
  %v853 = vadd.f32 %v852, %v835
  %v854 = vadd.f32 %v853, %v836
  %855 = vadd.xlane.f32.xlu0 %v854
  %v856 = vpop.xlane.xlu0 %855
  %v857 = vadd.f32 %v497, %v841
  %v858 = vadd.f32 %v498, %v846
  %v859 = vadd.f32 %v499, %v851
  %v860 = vadd.f32 %v500, %v856
  %v861 = vld [vmem:[%s1 + $0x20] sm:$0x77]
  %v862 = vld [vmem:[%s1 + $0x28] sm:$0x77]
  %v863 = vld [vmem:[%s1 + $0x60] sm:$0x77]
  %v864 = vld [vmem:[%s1 + $0x68] sm:$0x77]
  %v869 = vlaneseq
  %v870 = vshrl.u32 %v869, 7
  %v871 = vsub.s32 0, %v870
  %v872 = vrot.slane %v861, %v871
  %v873 = vlaneseq
  %v874 = vshrl.u32 %v873, 7
  %v875 = vsub.s32 4, %v874
  %v876 = vrot.slane %v861, %v875
  %v877 = vlaneseq
  %v878 = vshrl.u32 %v877, 7
  %v879 = vsub.s32 0, %v878
  %v880 = vrot.slane %v862, %v879
  %v881 = vlaneseq
  %v882 = vshrl.u32 %v881, 7
  %v883 = vsub.s32 4, %v882
  %v884 = vrot.slane %v862, %v883
  %v885 = vlaneseq
  %v886 = vshrl.u32 %v885, 7
  %v887 = vsub.s32 0, %v886
  %v888 = vrot.slane %v863, %v887
  %v889 = vlaneseq
  %v890 = vshrl.u32 %v889, 7
  %v891 = vsub.s32 4, %v890
  %v892 = vrot.slane %v863, %v891
  %v893 = vlaneseq
  %v894 = vshrl.u32 %v893, 7
  %v895 = vsub.s32 0, %v894
  %v896 = vrot.slane %v864, %v895
  %v897 = vlaneseq
  %v898 = vshrl.u32 %v897, 7
  %v899 = vsub.s32 4, %v898
  %v900 = vrot.slane %v864, %v899
  %v909 = vlaneseq
  %v910 = vshrl.u32 %v909, 7
  %v911 = vsub.s32 0, %v910
  %v912 = vrot.slane %v872, %v911
  %v913 = vlaneseq
  %v914 = vshrl.u32 %v913, 7
  %v915 = vsub.s32 0, %v914
  %v916 = vrot.slane %v876, %v915
  %v917 = vlaneseq
  %v918 = vshrl.u32 %v917, 7
  %v919 = vsub.s32 0, %v918
  %v920 = vrot.slane %v880, %v919
  %v921 = vlaneseq
  %v922 = vshrl.u32 %v921, 7
  %v923 = vsub.s32 0, %v922
  %v924 = vrot.slane %v884, %v923
  %v925 = vlaneseq
  %v926 = vshrl.u32 %v925, 7
  %v927 = vsub.s32 0, %v926
  %v928 = vrot.slane %v888, %v927
  %v929 = vlaneseq
  %v930 = vshrl.u32 %v929, 7
  %v931 = vsub.s32 0, %v930
  %v932 = vrot.slane %v892, %v931
  %v933 = vlaneseq
  %v934 = vshrl.u32 %v933, 7
  %v935 = vsub.s32 0, %v934
  %v936 = vrot.slane %v896, %v935
  %v937 = vlaneseq
  %v938 = vshrl.u32 %v937, 7
  %v939 = vsub.s32 0, %v938
  %v940 = vrot.slane %v900, %v939
  %v941 = vmul.f32 %v112, %v912
  %v942 = vmul.f32 %v112, %v916
  %v943 = vmul.f32 %v112, %v920
  %v944 = vmul.f32 %v112, %v924
  %v945 = vmul.f32 %v117, %v912
  %v946 = vmul.f32 %v117, %v916
  %v947 = vmul.f32 %v117, %v920
  %v948 = vmul.f32 %v117, %v924
  %v949 = vmul.f32 %v112, %v928
  %v950 = vmul.f32 %v112, %v932
  %v951 = vmul.f32 %v112, %v936
  %v952 = vmul.f32 %v112, %v940
  %v953 = vmul.f32 %v117, %v928
  %v954 = vmul.f32 %v117, %v932
  %v955 = vmul.f32 %v117, %v936
  %v956 = vmul.f32 %v117, %v940
  %v957 = vlaneseq
  %v958 = vshrl.u32 %v957, 7
  %v959 = vsub.s32 1, %v958
  %v960 = vrot.slane %v861, %v959
  %v961 = vlaneseq
  %v962 = vshrl.u32 %v961, 7
  %v963 = vsub.s32 5, %v962
  %v964 = vrot.slane %v861, %v963
  %v965 = vlaneseq
  %v966 = vshrl.u32 %v965, 7
  %v967 = vsub.s32 1, %v966
  %v968 = vrot.slane %v862, %v967
  %v969 = vlaneseq
  %v970 = vshrl.u32 %v969, 7
  %v971 = vsub.s32 5, %v970
  %v972 = vrot.slane %v862, %v971
  %v973 = vlaneseq
  %v974 = vshrl.u32 %v973, 7
  %v975 = vsub.s32 1, %v974
  %v976 = vrot.slane %v863, %v975
  %v977 = vlaneseq
  %v978 = vshrl.u32 %v977, 7
  %v979 = vsub.s32 5, %v978
  %v980 = vrot.slane %v863, %v979
  %v981 = vlaneseq
  %v982 = vshrl.u32 %v981, 7
  %v983 = vsub.s32 1, %v982
  %v984 = vrot.slane %v864, %v983
  %v985 = vlaneseq
  %v986 = vshrl.u32 %v985, 7
  %v987 = vsub.s32 5, %v986
  %v988 = vrot.slane %v864, %v987
  %v997 = vlaneseq
  %v998 = vshrl.u32 %v997, 7
  %v999 = vsub.s32 1, %v998
  %v1000 = vrot.slane %v960, %v999
  %v1001 = vlaneseq
  %v1002 = vshrl.u32 %v1001, 7
  %v1003 = vsub.s32 1, %v1002
  %v1004 = vrot.slane %v964, %v1003
  %v1005 = vlaneseq
  %v1006 = vshrl.u32 %v1005, 7
  %v1007 = vsub.s32 1, %v1006
  %v1008 = vrot.slane %v968, %v1007
  %v1009 = vlaneseq
  %v1010 = vshrl.u32 %v1009, 7
  %v1011 = vsub.s32 1, %v1010
  %v1012 = vrot.slane %v972, %v1011
  %v1013 = vlaneseq
  %v1014 = vshrl.u32 %v1013, 7
  %v1015 = vsub.s32 1, %v1014
  %v1016 = vrot.slane %v976, %v1015
  %v1017 = vlaneseq
  %v1018 = vshrl.u32 %v1017, 7
  %v1019 = vsub.s32 1, %v1018
  %v1020 = vrot.slane %v980, %v1019
  %v1021 = vlaneseq
  %v1022 = vshrl.u32 %v1021, 7
  %v1023 = vsub.s32 1, %v1022
  %v1024 = vrot.slane %v984, %v1023
  %v1025 = vlaneseq
  %v1026 = vshrl.u32 %v1025, 7
  %v1027 = vsub.s32 1, %v1026
  %v1028 = vrot.slane %v988, %v1027
  %v1029 = vmul.f32 %v213, %v1000
  %v1030 = vmul.f32 %v213, %v1004
  %v1031 = vmul.f32 %v213, %v1008
  %v1032 = vmul.f32 %v213, %v1012
  %v1033 = vmul.f32 %v217, %v1000
  %v1034 = vmul.f32 %v217, %v1004
  %v1035 = vmul.f32 %v217, %v1008
  %v1036 = vmul.f32 %v217, %v1012
  %v1037 = vmul.f32 %v213, %v1016
  %v1038 = vmul.f32 %v213, %v1020
  %v1039 = vmul.f32 %v213, %v1024
  %v1040 = vmul.f32 %v213, %v1028
  %v1041 = vmul.f32 %v217, %v1016
  %v1042 = vmul.f32 %v217, %v1020
  %v1043 = vmul.f32 %v217, %v1024
  %v1044 = vmul.f32 %v217, %v1028
  %v1045 = vadd.f32 %v941, %v1029
  %v1046 = vadd.f32 %v942, %v1030
  %v1047 = vadd.f32 %v943, %v1031
  %v1048 = vadd.f32 %v944, %v1032
  %v1049 = vadd.f32 %v945, %v1033
  %v1050 = vadd.f32 %v946, %v1034
  %v1051 = vadd.f32 %v947, %v1035
  %v1052 = vadd.f32 %v948, %v1036
  %v1053 = vadd.f32 %v949, %v1037
  %v1054 = vadd.f32 %v950, %v1038
  %v1055 = vadd.f32 %v951, %v1039
  %v1056 = vadd.f32 %v952, %v1040
  %v1057 = vadd.f32 %v953, %v1041
  %v1058 = vadd.f32 %v954, %v1042
  %v1059 = vadd.f32 %v955, %v1043
  %v1060 = vadd.f32 %v956, %v1044
  %v1061 = vlaneseq
  %v1062 = vshrl.u32 %v1061, 7
  %v1063 = vsub.s32 2, %v1062
  %v1064 = vrot.slane %v861, %v1063
  %v1065 = vlaneseq
  %v1066 = vshrl.u32 %v1065, 7
  %v1067 = vsub.s32 6, %v1066
  %v1068 = vrot.slane %v861, %v1067
  %v1069 = vlaneseq
  %v1070 = vshrl.u32 %v1069, 7
  %v1071 = vsub.s32 2, %v1070
  %v1072 = vrot.slane %v862, %v1071
  %v1073 = vlaneseq
  %v1074 = vshrl.u32 %v1073, 7
  %v1075 = vsub.s32 6, %v1074
  %v1076 = vrot.slane %v862, %v1075
  %v1077 = vlaneseq
  %v1078 = vshrl.u32 %v1077, 7
  %v1079 = vsub.s32 2, %v1078
  %v1080 = vrot.slane %v863, %v1079
  %v1081 = vlaneseq
  %v1082 = vshrl.u32 %v1081, 7
  %v1083 = vsub.s32 6, %v1082
  %v1084 = vrot.slane %v863, %v1083
  %v1085 = vlaneseq
  %v1086 = vshrl.u32 %v1085, 7
  %v1087 = vsub.s32 2, %v1086
  %v1088 = vrot.slane %v864, %v1087
  %v1089 = vlaneseq
  %v1090 = vshrl.u32 %v1089, 7
  %v1091 = vsub.s32 6, %v1090
  %v1092 = vrot.slane %v864, %v1091
  %v1101 = vlaneseq
  %v1102 = vshrl.u32 %v1101, 7
  %v1103 = vsub.s32 2, %v1102
  %v1104 = vrot.slane %v1064, %v1103
  %v1105 = vlaneseq
  %v1106 = vshrl.u32 %v1105, 7
  %v1107 = vsub.s32 2, %v1106
  %v1108 = vrot.slane %v1068, %v1107
  %v1109 = vlaneseq
  %v1110 = vshrl.u32 %v1109, 7
  %v1111 = vsub.s32 2, %v1110
  %v1112 = vrot.slane %v1072, %v1111
  %v1113 = vlaneseq
  %v1114 = vshrl.u32 %v1113, 7
  %v1115 = vsub.s32 2, %v1114
  %v1116 = vrot.slane %v1076, %v1115
  %v1117 = vlaneseq
  %v1118 = vshrl.u32 %v1117, 7
  %v1119 = vsub.s32 2, %v1118
  %v1120 = vrot.slane %v1080, %v1119
  %v1121 = vlaneseq
  %v1122 = vshrl.u32 %v1121, 7
  %v1123 = vsub.s32 2, %v1122
  %v1124 = vrot.slane %v1084, %v1123
  %v1125 = vlaneseq
  %v1126 = vshrl.u32 %v1125, 7
  %v1127 = vsub.s32 2, %v1126
  %v1128 = vrot.slane %v1088, %v1127
  %v1129 = vlaneseq
  %v1130 = vshrl.u32 %v1129, 7
  %v1131 = vsub.s32 2, %v1130
  %v1132 = vrot.slane %v1092, %v1131
  %v1133 = vmul.f32 %v325, %v1104
  %v1134 = vmul.f32 %v325, %v1108
  %v1135 = vmul.f32 %v325, %v1112
  %v1136 = vmul.f32 %v325, %v1116
  %v1137 = vmul.f32 %v329, %v1104
  %v1138 = vmul.f32 %v329, %v1108
  %v1139 = vmul.f32 %v329, %v1112
  %v1140 = vmul.f32 %v329, %v1116
  %v1141 = vmul.f32 %v325, %v1120
  %v1142 = vmul.f32 %v325, %v1124
  %v1143 = vmul.f32 %v325, %v1128
  %v1144 = vmul.f32 %v325, %v1132
  %v1145 = vmul.f32 %v329, %v1120
  %v1146 = vmul.f32 %v329, %v1124
  %v1147 = vmul.f32 %v329, %v1128
  %v1148 = vmul.f32 %v329, %v1132
  %v1149 = vadd.f32 %v1045, %v1133
  %v1150 = vadd.f32 %v1046, %v1134
  %v1151 = vadd.f32 %v1047, %v1135
  %v1152 = vadd.f32 %v1048, %v1136
  %v1153 = vadd.f32 %v1049, %v1137
  %v1154 = vadd.f32 %v1050, %v1138
  %v1155 = vadd.f32 %v1051, %v1139
  %v1156 = vadd.f32 %v1052, %v1140
  %v1157 = vadd.f32 %v1053, %v1141
  %v1158 = vadd.f32 %v1054, %v1142
  %v1159 = vadd.f32 %v1055, %v1143
  %v1160 = vadd.f32 %v1056, %v1144
  %v1161 = vadd.f32 %v1057, %v1145
  %v1162 = vadd.f32 %v1058, %v1146
  %v1163 = vadd.f32 %v1059, %v1147
  %v1164 = vadd.f32 %v1060, %v1148
  %v1165 = vadd.f32 %v1149, %v438
  %v1166 = vadd.f32 %v1150, %v438
  %v1167 = vadd.f32 %v1151, %v438
  %v1168 = vadd.f32 %v1152, %v438
  %v1169 = vadd.f32 %v1153, %v443
  %v1170 = vadd.f32 %v1154, %v443
  %v1171 = vadd.f32 %v1155, %v443
  %v1172 = vadd.f32 %v1156, %v443
  %v1173 = vadd.f32 %v1157, %v438
  %v1174 = vadd.f32 %v1158, %v438
  %v1175 = vadd.f32 %v1159, %v438
  %v1176 = vadd.f32 %v1160, %v438
  %v1177 = vadd.f32 %v1161, %v443
  %v1178 = vadd.f32 %v1162, %v443
  %v1179 = vadd.f32 %v1163, %v443
  %v1180 = vadd.f32 %v1164, %v443
  %v1181 = vmax.f32 %v1165, 0.0
  %v1182 = vmax.f32 %v1166, 0.0
  %v1183 = vmax.f32 %v1167, 0.0
  %v1184 = vmax.f32 %v1168, 0.0
  %v1185 = vmax.f32 %v1169, 0.0
  %v1186 = vmax.f32 %v1170, 0.0
  %v1187 = vmax.f32 %v1171, 0.0
  %v1188 = vmax.f32 %v1172, 0.0
  %v1189 = vmax.f32 %v1173, 0.0
  %v1190 = vmax.f32 %v1174, 0.0
  %v1191 = vmax.f32 %v1175, 0.0
  %v1192 = vmax.f32 %v1176, 0.0
  %v1193 = vmax.f32 %v1177, 0.0
  %v1194 = vmax.f32 %v1178, 0.0
  %v1195 = vmax.f32 %v1179, 0.0
  %v1196 = vmax.f32 %v1180, 0.0
  %v1197 = vadd.f32 %v1181, %v1182
  %v1198 = vadd.f32 %v1197, %v1183
  %v1199 = vadd.f32 %v1198, %v1184
  %1200 = vadd.xlane.f32.xlu0 %v1199
  %v1201 = vpop.xlane.xlu0 %1200
  %v1202 = vadd.f32 %v1185, %v1186
  %v1203 = vadd.f32 %v1202, %v1187
  %v1204 = vadd.f32 %v1203, %v1188
  %1205 = vadd.xlane.f32.xlu0 %v1204
  %v1206 = vpop.xlane.xlu0 %1205
  %v1207 = vadd.f32 %v1189, %v1190
  %v1208 = vadd.f32 %v1207, %v1191
  %v1209 = vadd.f32 %v1208, %v1192
  %1210 = vadd.xlane.f32.xlu0 %v1209
  %v1211 = vpop.xlane.xlu0 %1210
  %v1212 = vadd.f32 %v1193, %v1194
  %v1213 = vadd.f32 %v1212, %v1195
  %v1214 = vadd.f32 %v1213, %v1196
  %1215 = vadd.xlane.f32.xlu0 %v1214
  %v1216 = vpop.xlane.xlu0 %1215
  %v1217 = vadd.f32 %v857, %v1201
  %v1218 = vadd.f32 %v858, %v1206
  %v1219 = vadd.f32 %v859, %v1211
  %v1220 = vadd.f32 %v860, %v1216
  %v1221 = vld [vmem:[%s1 + $0x30] sm:$0x77]
  %v1222 = vld [vmem:[%s1 + $0x38] sm:$0x77]
  %v1223 = vld [vmem:[%s1 + $0x70] sm:$0x77]
  %v1224 = vld [vmem:[%s1 + $0x78] sm:$0x77]
  %v1229 = vlaneseq
  %v1230 = vshrl.u32 %v1229, 7
  %v1231 = vsub.s32 0, %v1230
  %v1232 = vrot.slane %v1221, %v1231
  %v1233 = vlaneseq
  %v1234 = vshrl.u32 %v1233, 7
  %v1235 = vsub.s32 4, %v1234
  %v1236 = vrot.slane %v1221, %v1235
  %v1237 = vlaneseq
  %v1238 = vshrl.u32 %v1237, 7
  %v1239 = vsub.s32 0, %v1238
  %v1240 = vrot.slane %v1222, %v1239
  %v1241 = vlaneseq
  %v1242 = vshrl.u32 %v1241, 7
  %v1243 = vsub.s32 4, %v1242
  %v1244 = vrot.slane %v1222, %v1243
  %v1245 = vlaneseq
  %v1246 = vshrl.u32 %v1245, 7
  %v1247 = vsub.s32 0, %v1246
  %v1248 = vrot.slane %v1223, %v1247
  %v1249 = vlaneseq
  %v1250 = vshrl.u32 %v1249, 7
  %v1251 = vsub.s32 4, %v1250
  %v1252 = vrot.slane %v1223, %v1251
  %v1253 = vlaneseq
  %v1254 = vshrl.u32 %v1253, 7
  %v1255 = vsub.s32 0, %v1254
  %v1256 = vrot.slane %v1224, %v1255
  %v1257 = vlaneseq
  %v1258 = vshrl.u32 %v1257, 7
  %v1259 = vsub.s32 4, %v1258
  %v1260 = vrot.slane %v1224, %v1259
  %v1269 = vlaneseq
  %v1270 = vshrl.u32 %v1269, 7
  %v1271 = vsub.s32 0, %v1270
  %v1272 = vrot.slane %v1232, %v1271
  %v1273 = vlaneseq
  %v1274 = vshrl.u32 %v1273, 7
  %v1275 = vsub.s32 0, %v1274
  %v1276 = vrot.slane %v1236, %v1275
  %v1277 = vlaneseq
  %v1278 = vshrl.u32 %v1277, 7
  %v1279 = vsub.s32 0, %v1278
  %v1280 = vrot.slane %v1240, %v1279
  %v1281 = vlaneseq
  %v1282 = vshrl.u32 %v1281, 7
  %v1283 = vsub.s32 0, %v1282
  %v1284 = vrot.slane %v1244, %v1283
  %v1285 = vlaneseq
  %v1286 = vshrl.u32 %v1285, 7
  %v1287 = vsub.s32 0, %v1286
  %v1288 = vrot.slane %v1248, %v1287
  %v1289 = vlaneseq
  %v1290 = vshrl.u32 %v1289, 7
  %v1291 = vsub.s32 0, %v1290
  %v1292 = vrot.slane %v1252, %v1291
  %v1293 = vlaneseq
  %v1294 = vshrl.u32 %v1293, 7
  %v1295 = vsub.s32 0, %v1294
  %v1296 = vrot.slane %v1256, %v1295
  %v1297 = vlaneseq
  %v1298 = vshrl.u32 %v1297, 7
  %v1299 = vsub.s32 0, %v1298
  %v1300 = vrot.slane %v1260, %v1299
  %v1301 = vmul.f32 %v112, %v1272
  %v1302 = vmul.f32 %v112, %v1276
  %v1303 = vmul.f32 %v112, %v1280
  %v1304 = vmul.f32 %v112, %v1284
  %v1305 = vmul.f32 %v117, %v1272
  %v1306 = vmul.f32 %v117, %v1276
  %v1307 = vmul.f32 %v117, %v1280
  %v1308 = vmul.f32 %v117, %v1284
  %v1309 = vmul.f32 %v112, %v1288
  %v1310 = vmul.f32 %v112, %v1292
  %v1311 = vmul.f32 %v112, %v1296
  %v1312 = vmul.f32 %v112, %v1300
  %v1313 = vmul.f32 %v117, %v1288
  %v1314 = vmul.f32 %v117, %v1292
  %v1315 = vmul.f32 %v117, %v1296
  %v1316 = vmul.f32 %v117, %v1300
  %v1317 = vlaneseq
  %v1318 = vshrl.u32 %v1317, 7
  %v1319 = vsub.s32 1, %v1318
  %v1320 = vrot.slane %v1221, %v1319
  %v1321 = vlaneseq
  %v1322 = vshrl.u32 %v1321, 7
  %v1323 = vsub.s32 5, %v1322
  %v1324 = vrot.slane %v1221, %v1323
  %v1325 = vlaneseq
  %v1326 = vshrl.u32 %v1325, 7
  %v1327 = vsub.s32 1, %v1326
  %v1328 = vrot.slane %v1222, %v1327
  %v1329 = vlaneseq
  %v1330 = vshrl.u32 %v1329, 7
  %v1331 = vsub.s32 5, %v1330
  %v1332 = vrot.slane %v1222, %v1331
  %v1333 = vlaneseq
  %v1334 = vshrl.u32 %v1333, 7
  %v1335 = vsub.s32 1, %v1334
  %v1336 = vrot.slane %v1223, %v1335
  %v1337 = vlaneseq
  %v1338 = vshrl.u32 %v1337, 7
  %v1339 = vsub.s32 5, %v1338
  %v1340 = vrot.slane %v1223, %v1339
  %v1341 = vlaneseq
  %v1342 = vshrl.u32 %v1341, 7
  %v1343 = vsub.s32 1, %v1342
  %v1344 = vrot.slane %v1224, %v1343
  %v1345 = vlaneseq
  %v1346 = vshrl.u32 %v1345, 7
  %v1347 = vsub.s32 5, %v1346
  %v1348 = vrot.slane %v1224, %v1347
  %v1357 = vlaneseq
  %v1358 = vshrl.u32 %v1357, 7
  %v1359 = vsub.s32 1, %v1358
  %v1360 = vrot.slane %v1320, %v1359
  %v1361 = vlaneseq
  %v1362 = vshrl.u32 %v1361, 7
  %v1363 = vsub.s32 1, %v1362
  %v1364 = vrot.slane %v1324, %v1363
  %v1365 = vlaneseq
  %v1366 = vshrl.u32 %v1365, 7
  %v1367 = vsub.s32 1, %v1366
  %v1368 = vrot.slane %v1328, %v1367
  %v1369 = vlaneseq
  %v1370 = vshrl.u32 %v1369, 7
  %v1371 = vsub.s32 1, %v1370
  %v1372 = vrot.slane %v1332, %v1371
  %v1373 = vlaneseq
  %v1374 = vshrl.u32 %v1373, 7
  %v1375 = vsub.s32 1, %v1374
  %v1376 = vrot.slane %v1336, %v1375
  %v1377 = vlaneseq
  %v1378 = vshrl.u32 %v1377, 7
  %v1379 = vsub.s32 1, %v1378
  %v1380 = vrot.slane %v1340, %v1379
  %v1381 = vlaneseq
  %v1382 = vshrl.u32 %v1381, 7
  %v1383 = vsub.s32 1, %v1382
  %v1384 = vrot.slane %v1344, %v1383
  %v1385 = vlaneseq
  %v1386 = vshrl.u32 %v1385, 7
  %v1387 = vsub.s32 1, %v1386
  %v1388 = vrot.slane %v1348, %v1387
  %v1389 = vmul.f32 %v213, %v1360
  %v1390 = vmul.f32 %v213, %v1364
  %v1391 = vmul.f32 %v213, %v1368
  %v1392 = vmul.f32 %v213, %v1372
  %v1393 = vmul.f32 %v217, %v1360
  %v1394 = vmul.f32 %v217, %v1364
  %v1395 = vmul.f32 %v217, %v1368
  %v1396 = vmul.f32 %v217, %v1372
  %v1397 = vmul.f32 %v213, %v1376
  %v1398 = vmul.f32 %v213, %v1380
  %v1399 = vmul.f32 %v213, %v1384
  %v1400 = vmul.f32 %v213, %v1388
  %v1401 = vmul.f32 %v217, %v1376
  %v1402 = vmul.f32 %v217, %v1380
  %v1403 = vmul.f32 %v217, %v1384
  %v1404 = vmul.f32 %v217, %v1388
  %v1405 = vadd.f32 %v1301, %v1389
  %v1406 = vadd.f32 %v1302, %v1390
  %v1407 = vadd.f32 %v1303, %v1391
  %v1408 = vadd.f32 %v1304, %v1392
  %v1409 = vadd.f32 %v1305, %v1393
  %v1410 = vadd.f32 %v1306, %v1394
  %v1411 = vadd.f32 %v1307, %v1395
  %v1412 = vadd.f32 %v1308, %v1396
  %v1413 = vadd.f32 %v1309, %v1397
  %v1414 = vadd.f32 %v1310, %v1398
  %v1415 = vadd.f32 %v1311, %v1399
  %v1416 = vadd.f32 %v1312, %v1400
  %v1417 = vadd.f32 %v1313, %v1401
  %v1418 = vadd.f32 %v1314, %v1402
  %v1419 = vadd.f32 %v1315, %v1403
  %v1420 = vadd.f32 %v1316, %v1404
  %v1421 = vlaneseq
  %v1422 = vshrl.u32 %v1421, 7
  %v1423 = vsub.s32 2, %v1422
  %v1424 = vrot.slane %v1221, %v1423
  %v1425 = vlaneseq
  %v1426 = vshrl.u32 %v1425, 7
  %v1427 = vsub.s32 6, %v1426
  %v1428 = vrot.slane %v1221, %v1427
  %v1429 = vlaneseq
  %v1430 = vshrl.u32 %v1429, 7
  %v1431 = vsub.s32 2, %v1430
  %v1432 = vrot.slane %v1222, %v1431
  %v1433 = vlaneseq
  %v1434 = vshrl.u32 %v1433, 7
  %v1435 = vsub.s32 6, %v1434
  %v1436 = vrot.slane %v1222, %v1435
  %v1437 = vlaneseq
  %v1438 = vshrl.u32 %v1437, 7
  %v1439 = vsub.s32 2, %v1438
  %v1440 = vrot.slane %v1223, %v1439
  %v1441 = vlaneseq
  %v1442 = vshrl.u32 %v1441, 7
  %v1443 = vsub.s32 6, %v1442
  %v1444 = vrot.slane %v1223, %v1443
  %v1445 = vlaneseq
  %v1446 = vshrl.u32 %v1445, 7
  %v1447 = vsub.s32 2, %v1446
  %v1448 = vrot.slane %v1224, %v1447
  %v1449 = vlaneseq
  %v1450 = vshrl.u32 %v1449, 7
  %v1451 = vsub.s32 6, %v1450
  %v1452 = vrot.slane %v1224, %v1451
  %v1461 = vlaneseq
  %v1462 = vshrl.u32 %v1461, 7
  %v1463 = vsub.s32 2, %v1462
  %v1464 = vrot.slane %v1424, %v1463
  %v1465 = vlaneseq
  %v1466 = vshrl.u32 %v1465, 7
  %v1467 = vsub.s32 2, %v1466
  %v1468 = vrot.slane %v1428, %v1467
  %v1469 = vlaneseq
  %v1470 = vshrl.u32 %v1469, 7
  %v1471 = vsub.s32 2, %v1470
  %v1472 = vrot.slane %v1432, %v1471
  %v1473 = vlaneseq
  %v1474 = vshrl.u32 %v1473, 7
  %v1475 = vsub.s32 2, %v1474
  %v1476 = vrot.slane %v1436, %v1475
  %v1477 = vlaneseq
  %v1478 = vshrl.u32 %v1477, 7
  %v1479 = vsub.s32 2, %v1478
  %v1480 = vrot.slane %v1440, %v1479
  %v1481 = vlaneseq
  %v1482 = vshrl.u32 %v1481, 7
  %v1483 = vsub.s32 2, %v1482
  %v1484 = vrot.slane %v1444, %v1483
  %v1485 = vlaneseq
  %v1486 = vshrl.u32 %v1485, 7
  %v1487 = vsub.s32 2, %v1486
  %v1488 = vrot.slane %v1448, %v1487
  %v1489 = vlaneseq
  %v1490 = vshrl.u32 %v1489, 7
  %v1491 = vsub.s32 2, %v1490
  %v1492 = vrot.slane %v1452, %v1491
  %v1493 = vmul.f32 %v325, %v1464
  %v1494 = vmul.f32 %v325, %v1468
  %v1495 = vmul.f32 %v325, %v1472
  %v1496 = vmul.f32 %v325, %v1476
  %v1497 = vmul.f32 %v329, %v1464
  %v1498 = vmul.f32 %v329, %v1468
  %v1499 = vmul.f32 %v329, %v1472
  %v1500 = vmul.f32 %v329, %v1476
  %v1501 = vmul.f32 %v325, %v1480
  %v1502 = vmul.f32 %v325, %v1484
  %v1503 = vmul.f32 %v325, %v1488
  %v1504 = vmul.f32 %v325, %v1492
  %v1505 = vmul.f32 %v329, %v1480
  %v1506 = vmul.f32 %v329, %v1484
  %v1507 = vmul.f32 %v329, %v1488
  %v1508 = vmul.f32 %v329, %v1492
  %v1509 = vadd.f32 %v1405, %v1493
  %v1510 = vadd.f32 %v1406, %v1494
  %v1511 = vadd.f32 %v1407, %v1495
  %v1512 = vadd.f32 %v1408, %v1496
  %v1513 = vadd.f32 %v1409, %v1497
  %v1514 = vadd.f32 %v1410, %v1498
  %v1515 = vadd.f32 %v1411, %v1499
  %v1516 = vadd.f32 %v1412, %v1500
  %v1517 = vadd.f32 %v1413, %v1501
  %v1518 = vadd.f32 %v1414, %v1502
  %v1519 = vadd.f32 %v1415, %v1503
  %v1520 = vadd.f32 %v1416, %v1504
  %v1521 = vadd.f32 %v1417, %v1505
  %v1522 = vadd.f32 %v1418, %v1506
  %v1523 = vadd.f32 %v1419, %v1507
  %v1524 = vadd.f32 %v1420, %v1508
  %v1525 = vadd.f32 %v1509, %v438
  %v1526 = vadd.f32 %v1510, %v438
  %v1527 = vadd.f32 %v1511, %v438
  %v1528 = vadd.f32 %v1512, %v438
  %v1529 = vadd.f32 %v1513, %v443
  %v1530 = vadd.f32 %v1514, %v443
  %v1531 = vadd.f32 %v1515, %v443
  %v1532 = vadd.f32 %v1516, %v443
  %v1533 = vadd.f32 %v1517, %v438
  %v1534 = vadd.f32 %v1518, %v438
  %v1535 = vadd.f32 %v1519, %v438
  %v1536 = vadd.f32 %v1520, %v438
  %v1537 = vadd.f32 %v1521, %v443
  %v1538 = vadd.f32 %v1522, %v443
  %v1539 = vadd.f32 %v1523, %v443
  %v1540 = vadd.f32 %v1524, %v443
  %v1541 = vmax.f32 %v1525, 0.0
  %v1542 = vmax.f32 %v1526, 0.0
  %v1543 = vmax.f32 %v1527, 0.0
  %v1544 = vmax.f32 %v1528, 0.0
  %v1545 = vmax.f32 %v1529, 0.0
  %v1546 = vmax.f32 %v1530, 0.0
  %v1547 = vmax.f32 %v1531, 0.0
  %v1548 = vmax.f32 %v1532, 0.0
  %v1549 = vmax.f32 %v1533, 0.0
  %v1550 = vmax.f32 %v1534, 0.0
  %v1551 = vmax.f32 %v1535, 0.0
  %v1552 = vmax.f32 %v1536, 0.0
  %v1553 = vmax.f32 %v1537, 0.0
  %v1554 = vmax.f32 %v1538, 0.0
  %v1555 = vmax.f32 %v1539, 0.0
  %v1556 = vmax.f32 %v1540, 0.0
  %v1557 = vadd.f32 %v1541, %v1542
  %v1558 = vadd.f32 %v1557, %v1543
  %v1559 = vadd.f32 %v1558, %v1544
  %1560 = vadd.xlane.f32.xlu0 %v1559
  %v1561 = vpop.xlane.xlu0 %1560
  %v1562 = vadd.f32 %v1545, %v1546
  %v1563 = vadd.f32 %v1562, %v1547
  %v1564 = vadd.f32 %v1563, %v1548
  %1565 = vadd.xlane.f32.xlu0 %v1564
  %v1566 = vpop.xlane.xlu0 %1565
  %v1567 = vadd.f32 %v1549, %v1550
  %v1568 = vadd.f32 %v1567, %v1551
  %v1569 = vadd.f32 %v1568, %v1552
  %1570 = vadd.xlane.f32.xlu0 %v1569
  %v1571 = vpop.xlane.xlu0 %1570
  %v1572 = vadd.f32 %v1553, %v1554
  %v1573 = vadd.f32 %v1572, %v1555
  %v1574 = vadd.f32 %v1573, %v1556
  %1575 = vadd.xlane.f32.xlu0 %v1574
  %v1576 = vpop.xlane.xlu0 %1575
  %v1577 = vadd.f32 %v1217, %v1561
  %v1578 = vadd.f32 %v1218, %v1566
  %v1579 = vadd.f32 %v1219, %v1571
  %v1580 = vadd.f32 %v1220, %v1576
  %v1581 = vmul.f32 %v1577, 0.00048828125
  %v1582 = vmul.f32 %v1578, 0.00048828125
  %v1583 = vmul.f32 %v1579, 0.00048828125
  %v1584 = vmul.f32 %v1580, 0.00048828125
  %v1585 = vld [vmem:[%s0] sm:$0xff]
  %v1586 = vld [vmem:[%s0 + $0x8] sm:$0x3]
  %vm1587 = vcmask 785408
  %v1589 = vsel %vm1587, %v1585, 0
  %v1592 = vsel %vm1587, %v1586, 0
  %1594 = vmatprep.subr.mxu0 0.0
  %1595 = vmatpush1.msra.mxu0 0.0
  %1596 = vmatprep.subr.mxu0 0.0
  %1597 = vmatpush1.msra.mxu0 0.0
  %1598 = vmatprep.subr.mxu0 0.0
  %1599 = vmatpush1.msra.mxu0 0.0
  %1600 = vmatprep.subr.mxu0 0.0
  %1601 = vmatpush1.msra.mxu0 0.0
  %1602 = vmatprep.subr.mxu0 0.0
  %1603 = vmatpush1.msra.mxu0 %v25
  %1604 = vmatprep.subr.mxu0 0.0
  %1605 = vmatpush1.msra.mxu0 %v24
  %1606 = vmatprep.subr.mxu0 0.0
  %1607 = vmatpush1.msra.mxu0 %v23
  %1608 = vmatprep.subr.mxu0 0.0
  %1609 = vmatpush1.msra.mxu0 %v22
  %1610 = vmatprep.subr.mxu0 0.0
  %1611 = vmatpush1.msra.mxu0 %v21
  %1612 = vmatprep.subr.mxu0 0.0
  %1613 = vmatpush1.msra.mxu0 %v20
  %1614 = vmatprep.subr.mxu0 0.0
  %1615 = vmatpush1.msra.mxu0 %v19
  %1616 = vmatprep.subr.mxu0 0.0
  %1617 = vmatpush1.msra.mxu0 %v18
  %1618 = vmatprep.subr.mxu0 0.0
  %1619 = vmatpush1.msra.mxu0 %v17
  %1620 = vmatprep.subr.mxu0 0.0
  %1621 = vmatpush1.msra.mxu0 %v16
  %1622 = vmatprep.subr.mxu0 0.0
  %1623 = vmatpush1.msra.mxu0 %v15
  %1624 = vmatprep.subr.mxu0 0.0
  %1625 = vmatpush1.msra.mxu0 %v14
  %1626 = vmatprep.subr.mxu0 0.0
  %1627 = vmatpush2.msra.mxu0 0.0
  %1628 = vmatprep.subr.mxu0 0.0
  %1629 = vmatpush2.msra.mxu0 0.0
  %1630 = vmatprep.subr.mxu0 0.0
  %1631 = vmatpush2.msra.mxu0 0.0
  %1632 = vmatprep.subr.mxu0 0.0
  %1633 = vmatpush2.msra.mxu0 0.0
  %1634 = vmatprep.subr.mxu0 0.0
  %1635 = vmatpush2.msra.mxu0 0.0
  %1636 = vmatprep.subr.mxu0 0.0
  %1637 = vmatpush2.msra.mxu0 0.0
  %1638 = vmatprep.subr.mxu0 0.0
  %1639 = vmatpush2.msra.mxu0 0.0
  %1640 = vmatprep.subr.mxu0 0.0
  %1641 = vmatpush2.msra.mxu0 0.0
  %1642 = vmatprep.subr.mxu0 0.0
  %1643 = vmatpush2.msra.mxu0 0.0
  %1644 = vmatprep.subr.mxu0 0.0
  %1645 = vmatpush2.msra.mxu0 0.0
  %1646 = vmatprep.subr.mxu0 0.0
  %1647 = vmatpush2.msra.mxu0 0.0
  %1648 = vmatprep.subr.mxu0 0.0
  %1649 = vmatpush2.msra.mxu0 0.0
  %1650 = vmatprep.subr.mxu0 0.0
  %1651 = vmatpush2.msra.mxu0 0.0
  %1652 = vmatprep.subr.mxu0 0.0
  %1653 = vmatpush2.msra.mxu0 0.0
  %1654 = vmatprep.subr.mxu0 0.0
  %1655 = vmatpush2.msra.mxu0 0.0
  %1656 = vmatprep.subr.mxu0 0.0
  %1657 = vmatpush2.msra.mxu0 0.0
  %1658 = vmatprep.mubr.f32.mxu0 0.0
  %1659 = vmatmul.mubr.f32.gmra.mxu0 %v1589
  %v1660 = vpop.f32.mrf.mxu0
  %v1661 = vadd.f32 0.0, %v1660
  %v1662 = vpop.f32.mrf.mxu0
  %1663 = vmatprep.mubr.f32.mxu0 0.0
  %1664 = vmatmul.mubr.f32.gmra.mxu0 %v1592
  %v1665 = vpop.f32.mrf.mxu0
  %v1666 = vadd.f32 0.0, %v1665
  %v1667 = vpop.f32.mrf.mxu0
  %1668 = vdwg.mxu0
  %v1670 = vsel %vm1587, %v1661, 0
  %v1673 = vsel %vm1587, %v1666, 0
  %1675 = vmatprep.subr.mxu0 0.0
  %1676 = vmatpush1.xpose.msra.mxu0 0.0
  %1677 = vmatprep.subr.mxu0 0.0
  %1678 = vmatpush1.xpose.msra.mxu0 0.0
  %1679 = vmatprep.subr.mxu0 0.0
  %1680 = vmatpush1.xpose.msra.mxu0 0.0
  %1681 = vmatprep.subr.mxu0 0.0
  %1682 = vmatpush1.xpose.msra.mxu0 0.0
  %1683 = vmatprep.subr.mxu0 0.0
  %1684 = vmatpush1.xpose.msra.mxu0 0.0
  %1685 = vmatprep.subr.mxu0 0.0
  %1686 = vmatpush1.xpose.msra.mxu0 0.0
  %1687 = vmatprep.subr.mxu0 0.0
  %1688 = vmatpush1.xpose.msra.mxu0 0.0
  %1689 = vmatprep.subr.mxu0 0.0
  %1690 = vmatpush1.xpose.msra.mxu0 0.0
  %1691 = vmatprep.subr.mxu0 0.0
  %1692 = vmatpush1.xpose.msra.mxu0 0.0
  %1693 = vmatprep.subr.mxu0 0.0
  %1694 = vmatpush1.xpose.msra.mxu0 0.0
  %1695 = vmatprep.subr.mxu0 0.0
  %1696 = vmatpush1.xpose.msra.mxu0 0.0
  %1697 = vmatprep.subr.mxu0 0.0
  %1698 = vmatpush1.xpose.msra.mxu0 0.0
  %1699 = vmatprep.subr.mxu0 0.0
  %1700 = vmatpush1.xpose.msra.mxu0 0.0
  %1701 = vmatprep.subr.mxu0 0.0
  %1702 = vmatpush1.xpose.msra.mxu0 0.0
  %1703 = vmatprep.subr.mxu0 0.0
  %1704 = vmatpush1.xpose.msra.mxu0 %v1592
  %1705 = vmatprep.subr.mxu0 0.0
  %1706 = vmatpush1.xpose.msra.mxu0 %v1589
  %1707 = vmatprep.subr.mxu0 0.0
  %1708 = vmatpush2.xpose.msra.mxu0 0.0
  %1709 = vmatprep.subr.mxu0 0.0
  %1710 = vmatpush2.xpose.msra.mxu0 0.0
  %1711 = vmatprep.subr.mxu0 0.0
  %1712 = vmatpush2.xpose.msra.mxu0 0.0
  %1713 = vmatprep.subr.mxu0 0.0
  %1714 = vmatpush2.xpose.msra.mxu0 0.0
  %1715 = vmatprep.subr.mxu0 0.0
  %1716 = vmatpush2.xpose.msra.mxu0 0.0
  %1717 = vmatprep.subr.mxu0 0.0
  %1718 = vmatpush2.xpose.msra.mxu0 0.0
  %1719 = vmatprep.subr.mxu0 0.0
  %1720 = vmatpush2.xpose.msra.mxu0 0.0
  %1721 = vmatprep.subr.mxu0 0.0
  %1722 = vmatpush2.xpose.msra.mxu0 0.0
  %1723 = vmatprep.subr.mxu0 0.0
  %1724 = vmatpush2.xpose.msra.mxu0 0.0
  %1725 = vmatprep.subr.mxu0 0.0
  %1726 = vmatpush2.xpose.msra.mxu0 0.0
  %1727 = vmatprep.subr.mxu0 0.0
  %1728 = vmatpush2.xpose.msra.mxu0 0.0
  %1729 = vmatprep.subr.mxu0 0.0
  %1730 = vmatpush2.xpose.msra.mxu0 0.0
  %1731 = vmatprep.subr.mxu0 0.0
  %1732 = vmatpush2.xpose.msra.mxu0 0.0
  %1733 = vmatprep.subr.mxu0 0.0
  %1734 = vmatpush2.xpose.msra.mxu0 0.0
  %1735 = vmatprep.subr.mxu0 0.0
  %1736 = vmatpush2.xpose.msra.mxu0 0.0
  %1737 = vmatprep.subr.mxu0 0.0
  %1738 = vmatpush2.xpose.msra.mxu0 0.0
  %1739 = vmatprep.mubr.f32.mxu0 0.0
  %1740 = vmatmul.mubr.f32.gmra.mxu0 %v1670
  %v1741 = vpop.f32.mrf.mxu0
  %v1742 = vadd.f32 %v38, %v1741
  %v1743 = vpop.f32.mrf.mxu0
  %1744 = vmatprep.mubr.f32.mxu0 0.0
  %1745 = vmatmul.mubr.f32.gmra.mxu0 %v1673
  %v1746 = vpop.f32.mrf.mxu0
  %v1747 = vadd.f32 %v39, %v1746
  %v1748 = vpop.f32.mrf.mxu0
  %1749 = vdwg.mxu0
  %vm1750 = vcmask 80896
  %v1751 = vsel %vm1750, %v1742, -inf
  %1752 = vmax.xlane.f32.xlu0 %v1751
  %v1753 = vpop.xlane.xlu0 %1752
  %vm1754 = vcmask 74752
  %v1755 = vsel %vm1754, %v1747, -inf
  %1756 = vmax.xlane.f32.xlu0 %v1755
  %v1757 = vpop.xlane.xlu0 %1756
  %v1758 = vsub.f32 %v1742, %v1753
  %v1759 = vsub.f32 %v1747, %v1757
  %v1760 = vmul.f32 %v1758, 1.442695
  %v1761 = vpow.pop %v1760
  %v1762 = vmul.f32 %v1759, 1.442695
  %v1763 = vpow.pop %v1762
  %v1764 = vsel %vm1750, %v1761, 0.0
  %1765 = vadd.xlane.f32.xlu0 %v1764
  %v1766 = vpop.xlane.xlu0 %1765
  %v1767 = vsel %vm1754, %v1763, 0.0
  %1768 = vadd.xlane.f32.xlu0 %v1767
  %v1769 = vpop.xlane.xlu0 %1768
  %v1770 = vrcp.pop %v1766
  %v1771 = vmul.f32 %v1761, %v1770
  %v1772 = vrcp.pop %v1769
  %v1773 = vmul.f32 %v1763, %v1772
  %v1775 = vsel %vm1750, %v1771, 0
  %v1778 = vsel %vm1750, %v1773, 0
  %vm1780 = vcmask 1041408
  %v1781 = vsel %vm1780, %v1586, 0
  %1783 = vmatprep.subr.mxu0 0.0
  %1784 = vmatpush1.msra.mxu0 0.0
  %1785 = vmatprep.subr.mxu0 0.0
  %1786 = vmatpush1.msra.mxu0 0.0
  %1787 = vmatprep.subr.mxu0 0.0
  %1788 = vmatpush1.msra.mxu0 0.0
  %1789 = vmatprep.subr.mxu0 0.0
  %1790 = vmatpush1.msra.mxu0 0.0
  %1791 = vmatprep.subr.mxu0 0.0
  %1792 = vmatpush1.msra.mxu0 0.0
  %1793 = vmatprep.subr.mxu0 0.0
  %1794 = vmatpush1.msra.mxu0 0.0
  %1795 = vmatprep.subr.mxu0 0.0
  %1796 = vmatpush1.msra.mxu0 0.0
  %1797 = vmatprep.subr.mxu0 0.0
  %1798 = vmatpush1.msra.mxu0 0.0
  %1799 = vmatprep.subr.mxu0 0.0
  %1800 = vmatpush1.msra.mxu0 0.0
  %1801 = vmatprep.subr.mxu0 0.0
  %1802 = vmatpush1.msra.mxu0 0.0
  %1803 = vmatprep.subr.mxu0 0.0
  %1804 = vmatpush1.msra.mxu0 0.0
  %1805 = vmatprep.subr.mxu0 0.0
  %1806 = vmatpush1.msra.mxu0 0.0
  %1807 = vmatprep.subr.mxu0 0.0
  %1808 = vmatpush1.msra.mxu0 0.0
  %1809 = vmatprep.subr.mxu0 0.0
  %1810 = vmatpush1.msra.mxu0 0.0
  %1811 = vmatprep.subr.mxu0 0.0
  %1812 = vmatpush1.msra.mxu0 %v1781
  %1813 = vmatprep.subr.mxu0 0.0
  %1814 = vmatpush1.msra.mxu0 %v1585
  %1815 = vmatprep.subr.mxu0 0.0
  %1816 = vmatpush2.msra.mxu0 0.0
  %1817 = vmatprep.subr.mxu0 0.0
  %1818 = vmatpush2.msra.mxu0 0.0
  %1819 = vmatprep.subr.mxu0 0.0
  %1820 = vmatpush2.msra.mxu0 0.0
  %1821 = vmatprep.subr.mxu0 0.0
  %1822 = vmatpush2.msra.mxu0 0.0
  %1823 = vmatprep.subr.mxu0 0.0
  %1824 = vmatpush2.msra.mxu0 0.0
  %1825 = vmatprep.subr.mxu0 0.0
  %1826 = vmatpush2.msra.mxu0 0.0
  %1827 = vmatprep.subr.mxu0 0.0
  %1828 = vmatpush2.msra.mxu0 0.0
  %1829 = vmatprep.subr.mxu0 0.0
  %1830 = vmatpush2.msra.mxu0 0.0
  %1831 = vmatprep.subr.mxu0 0.0
  %1832 = vmatpush2.msra.mxu0 0.0
  %1833 = vmatprep.subr.mxu0 0.0
  %1834 = vmatpush2.msra.mxu0 0.0
  %1835 = vmatprep.subr.mxu0 0.0
  %1836 = vmatpush2.msra.mxu0 0.0
  %1837 = vmatprep.subr.mxu0 0.0
  %1838 = vmatpush2.msra.mxu0 0.0
  %1839 = vmatprep.subr.mxu0 0.0
  %1840 = vmatpush2.msra.mxu0 0.0
  %1841 = vmatprep.subr.mxu0 0.0
  %1842 = vmatpush2.msra.mxu0 0.0
  %1843 = vmatprep.subr.mxu0 0.0
  %1844 = vmatpush2.msra.mxu0 0.0
  %1845 = vmatprep.subr.mxu0 0.0
  %1846 = vmatpush2.msra.mxu0 0.0
  %1847 = vmatprep.mubr.f32.mxu0 0.0
  %1848 = vmatmul.mubr.f32.gmra.mxu0 %v1775
  %v1849 = vpop.f32.mrf.mxu0
  %v1850 = vadd.f32 0.0, %v1849
  %v1851 = vpop.f32.mrf.mxu0
  %1852 = vmatprep.mubr.f32.mxu0 0.0
  %1853 = vmatmul.mubr.f32.gmra.mxu0 %v1778
  %v1854 = vpop.f32.mrf.mxu0
  %v1855 = vadd.f32 0.0, %v1854
  %v1856 = vpop.f32.mrf.mxu0
  %1857 = vdwg.mxu0
  %v1859 = vsel %vm1587, %v1850, 0
  %v1862 = vsel %vm1587, %v1855, 0
  %1864 = vmatprep.subr.mxu0 0.0
  %1865 = vmatpush1.msra.mxu0 0.0
  %1866 = vmatprep.subr.mxu0 0.0
  %1867 = vmatpush1.msra.mxu0 0.0
  %1868 = vmatprep.subr.mxu0 0.0
  %1869 = vmatpush1.msra.mxu0 0.0
  %1870 = vmatprep.subr.mxu0 0.0
  %1871 = vmatpush1.msra.mxu0 0.0
  %1872 = vmatprep.subr.mxu0 0.0
  %1873 = vmatpush1.msra.mxu0 %v37
  %1874 = vmatprep.subr.mxu0 0.0
  %1875 = vmatpush1.msra.mxu0 %v36
  %1876 = vmatprep.subr.mxu0 0.0
  %1877 = vmatpush1.msra.mxu0 %v35
  %1878 = vmatprep.subr.mxu0 0.0
  %1879 = vmatpush1.msra.mxu0 %v34
  %1880 = vmatprep.subr.mxu0 0.0
  %1881 = vmatpush1.msra.mxu0 %v33
  %1882 = vmatprep.subr.mxu0 0.0
  %1883 = vmatpush1.msra.mxu0 %v32
  %1884 = vmatprep.subr.mxu0 0.0
  %1885 = vmatpush1.msra.mxu0 %v31
  %1886 = vmatprep.subr.mxu0 0.0
  %1887 = vmatpush1.msra.mxu0 %v30
  %1888 = vmatprep.subr.mxu0 0.0
  %1889 = vmatpush1.msra.mxu0 %v29
  %1890 = vmatprep.subr.mxu0 0.0
  %1891 = vmatpush1.msra.mxu0 %v28
  %1892 = vmatprep.subr.mxu0 0.0
  %1893 = vmatpush1.msra.mxu0 %v27
  %1894 = vmatprep.subr.mxu0 0.0
  %1895 = vmatpush1.msra.mxu0 %v26
  %1896 = vmatprep.subr.mxu0 0.0
  %1897 = vmatpush2.msra.mxu0 0.0
  %1898 = vmatprep.subr.mxu0 0.0
  %1899 = vmatpush2.msra.mxu0 0.0
  %1900 = vmatprep.subr.mxu0 0.0
  %1901 = vmatpush2.msra.mxu0 0.0
  %1902 = vmatprep.subr.mxu0 0.0
  %1903 = vmatpush2.msra.mxu0 0.0
  %1904 = vmatprep.subr.mxu0 0.0
  %1905 = vmatpush2.msra.mxu0 0.0
  %1906 = vmatprep.subr.mxu0 0.0
  %1907 = vmatpush2.msra.mxu0 0.0
  %1908 = vmatprep.subr.mxu0 0.0
  %1909 = vmatpush2.msra.mxu0 0.0
  %1910 = vmatprep.subr.mxu0 0.0
  %1911 = vmatpush2.msra.mxu0 0.0
  %1912 = vmatprep.subr.mxu0 0.0
  %1913 = vmatpush2.msra.mxu0 0.0
  %1914 = vmatprep.subr.mxu0 0.0
  %1915 = vmatpush2.msra.mxu0 0.0
  %1916 = vmatprep.subr.mxu0 0.0
  %1917 = vmatpush2.msra.mxu0 0.0
  %1918 = vmatprep.subr.mxu0 0.0
  %1919 = vmatpush2.msra.mxu0 0.0
  %1920 = vmatprep.subr.mxu0 0.0
  %1921 = vmatpush2.msra.mxu0 0.0
  %1922 = vmatprep.subr.mxu0 0.0
  %1923 = vmatpush2.msra.mxu0 0.0
  %1924 = vmatprep.subr.mxu0 0.0
  %1925 = vmatpush2.msra.mxu0 0.0
  %1926 = vmatprep.subr.mxu0 0.0
  %1927 = vmatpush2.msra.mxu0 0.0
  %1928 = vmatprep.mubr.f32.mxu0 0.0
  %1929 = vmatmul.mubr.f32.gmra.mxu0 %v1859
  %v1930 = vpop.f32.mrf.mxu0
  %v1931 = vadd.f32 0.0, %v1930
  %v1932 = vpop.f32.mrf.mxu0
  %1933 = vmatprep.mubr.f32.mxu0 0.0
  %1934 = vmatmul.mubr.f32.gmra.mxu0 %v1862
  %v1935 = vpop.f32.mrf.mxu0
  %v1936 = vadd.f32 0.0, %v1935
  %v1937 = vpop.f32.mrf.mxu0
  %1938 = vdwg.mxu0
  %v1939 = vmax.f32 %v1931, 0.0
  %v1940 = vmax.f32 %v1936, 0.0
  %vm1941 = vcmask 520192
  %v1942 = vsel %vm1941, %v1939, 0.0
  %v1943 = vrot.slane %v1942, 4
  %v1944 = vadd.f32 %v1942, %v1943
  %v1945 = vrot.slane %v1944, 2
  %v1946 = vadd.f32 %v1944, %v1945
  %v1947 = vrot.slane %v1946, 1
  %v1948 = vadd.f32 %v1946, %v1947
  %v1949 = vmul.f32 %v1948, 0.2
  %vm1952 = vcmask 1042432
  %v1953 = vrot.slane %v1939, 5
  %v1954 = vrot.slane %v1940, 5
  %v1955 = vsel %vm1952, %v1953, %v1954
  %v1957 = vsel %vm1941, %v1955, 0.0
  %v1958 = vrot.slane %v1957, 4
  %v1959 = vadd.f32 %v1957, %v1958
  %v1960 = vrot.slane %v1959, 2
  %v1961 = vadd.f32 %v1959, %v1960
  %v1962 = vrot.slane %v1961, 1
  %v1963 = vadd.f32 %v1961, %v1962
  %v1964 = vmul.f32 %v1963, 0.2
  %vm1965 = vcmask 130048
  %v1967 = vsel %vm1965, %v44, 0
  %v1970 = vsel %vm1965, %v45, 0
  %v1973 = vsel %vm1965, %v46, 0
  %v1976 = vsel %vm1965, %v47, 0
  %1978 = vmatprep.subr.mxu0 0.0
  %1979 = vmatpush1.msra.mxu0 0.0
  %1980 = vmatprep.subr.mxu0 0.0
  %1981 = vmatpush1.msra.mxu0 0.0
  %1982 = vmatprep.subr.mxu0 0.0
  %1983 = vmatpush1.msra.mxu0 0.0
  %1984 = vmatprep.subr.mxu0 0.0
  %1985 = vmatpush1.msra.mxu0 0.0
  %1986 = vmatprep.subr.mxu0 0.0
  %1987 = vmatpush1.msra.mxu0 0.0
  %1988 = vmatprep.subr.mxu0 0.0
  %1989 = vmatpush1.msra.mxu0 0.0
  %1990 = vmatprep.subr.mxu0 0.0
  %1991 = vmatpush1.msra.mxu0 0.0
  %1992 = vmatprep.subr.mxu0 0.0
  %1993 = vmatpush1.msra.mxu0 0.0
  %1994 = vmatprep.subr.mxu0 0.0
  %1995 = vmatpush1.msra.mxu0 0.0
  %1996 = vmatprep.subr.mxu0 0.0
  %1997 = vmatpush1.msra.mxu0 0.0
  %1998 = vmatprep.subr.mxu0 0.0
  %1999 = vmatpush1.msra.mxu0 0.0
  %2000 = vmatprep.subr.mxu0 0.0
  %2001 = vmatpush1.msra.mxu0 0.0
  %2002 = vmatprep.subr.mxu0 0.0
  %2003 = vmatpush1.msra.mxu0 0.0
  %2004 = vmatprep.subr.mxu0 0.0
  %2005 = vmatpush1.msra.mxu0 0.0
  %2006 = vmatprep.subr.mxu0 0.0
  %2007 = vmatpush1.msra.mxu0 %v1582
  %2008 = vmatprep.subr.mxu0 0.0
  %2009 = vmatpush1.msra.mxu0 %v1581
  %2010 = vmatprep.subr.mxu0 0.0
  %2011 = vmatpush2.msra.mxu0 0.0
  %2012 = vmatprep.subr.mxu0 0.0
  %2013 = vmatpush2.msra.mxu0 0.0
  %2014 = vmatprep.subr.mxu0 0.0
  %2015 = vmatpush2.msra.mxu0 0.0
  %2016 = vmatprep.subr.mxu0 0.0
  %2017 = vmatpush2.msra.mxu0 0.0
  %2018 = vmatprep.subr.mxu0 0.0
  %2019 = vmatpush2.msra.mxu0 0.0
  %2020 = vmatprep.subr.mxu0 0.0
  %2021 = vmatpush2.msra.mxu0 0.0
  %2022 = vmatprep.subr.mxu0 0.0
  %2023 = vmatpush2.msra.mxu0 0.0
  %2024 = vmatprep.subr.mxu0 0.0
  %2025 = vmatpush2.msra.mxu0 0.0
  %2026 = vmatprep.subr.mxu0 0.0
  %2027 = vmatpush2.msra.mxu0 0.0
  %2028 = vmatprep.subr.mxu0 0.0
  %2029 = vmatpush2.msra.mxu0 0.0
  %2030 = vmatprep.subr.mxu0 0.0
  %2031 = vmatpush2.msra.mxu0 0.0
  %2032 = vmatprep.subr.mxu0 0.0
  %2033 = vmatpush2.msra.mxu0 0.0
  %2034 = vmatprep.subr.mxu0 0.0
  %2035 = vmatpush2.msra.mxu0 0.0
  %2036 = vmatprep.subr.mxu0 0.0
  %2037 = vmatpush2.msra.mxu0 0.0
  %2038 = vmatprep.subr.mxu0 0.0
  %2039 = vmatpush2.msra.mxu0 0.0
  %2040 = vmatprep.subr.mxu0 0.0
  %2041 = vmatpush2.msra.mxu0 0.0
  %2042 = vmatprep.mubr.f32.mxu0 0.0
  %2043 = vmatmul.mubr.f32.gmra.mxu0 %v1967
  %v2044 = vpop.f32.mrf.mxu0
  %v2045 = vadd.f32 %v48, %v2044
  %v2046 = vpop.f32.mrf.mxu0
  %2047 = vmatprep.mubr.f32.mxu0 0.0
  %2048 = vmatmul.mubr.f32.gmra.mxu0 %v1970
  %v2049 = vpop.f32.mrf.mxu0
  %v2050 = vadd.f32 %v49, %v2049
  %v2051 = vpop.f32.mrf.mxu0
  %2052 = vmatprep.mubr.f32.mxu0 0.0
  %2053 = vmatmul.mubr.f32.gmra.mxu0 %v1973
  %v2054 = vpop.f32.mrf.mxu0
  %v2055 = vadd.f32 %v50, %v2054
  %v2056 = vpop.f32.mrf.mxu0
  %2057 = vmatprep.mubr.f32.mxu0 0.0
  %2058 = vmatmul.mubr.f32.gmra.mxu0 %v1976
  %v2059 = vpop.f32.mrf.mxu0
  %v2060 = vadd.f32 %v51, %v2059
  %v2061 = vpop.f32.mrf.mxu0
  %2062 = vdwg.mxu0
  %v2063 = vmax.f32 %v2045, 0.0
  %v2064 = vmax.f32 %v2050, 0.0
  %v2065 = vmax.f32 %v2055, 0.0
  %v2066 = vmax.f32 %v2060, 0.0
  %vm2067 = vcmask 261120
  %v2069 = vsel %vm2067, %v52, 0
  %v2072 = vsel %vm2067, %v53, 0
  %2074 = vmatprep.subr.mxu0 0.0
  %2075 = vmatpush1.msra.mxu0 0.0
  %2076 = vmatprep.subr.mxu0 0.0
  %2077 = vmatpush1.msra.mxu0 0.0
  %2078 = vmatprep.subr.mxu0 0.0
  %2079 = vmatpush1.msra.mxu0 0.0
  %2080 = vmatprep.subr.mxu0 0.0
  %2081 = vmatpush1.msra.mxu0 0.0
  %2082 = vmatprep.subr.mxu0 0.0
  %2083 = vmatpush1.msra.mxu0 0.0
  %2084 = vmatprep.subr.mxu0 0.0
  %2085 = vmatpush1.msra.mxu0 0.0
  %2086 = vmatprep.subr.mxu0 0.0
  %2087 = vmatpush1.msra.mxu0 0.0
  %2088 = vmatprep.subr.mxu0 0.0
  %2089 = vmatpush1.msra.mxu0 0.0
  %2090 = vmatprep.subr.mxu0 0.0
  %2091 = vmatpush1.msra.mxu0 0.0
  %2092 = vmatprep.subr.mxu0 0.0
  %2093 = vmatpush1.msra.mxu0 0.0
  %2094 = vmatprep.subr.mxu0 0.0
  %2095 = vmatpush1.msra.mxu0 0.0
  %2096 = vmatprep.subr.mxu0 0.0
  %2097 = vmatpush1.msra.mxu0 0.0
  %2098 = vmatprep.subr.mxu0 0.0
  %2099 = vmatpush1.msra.mxu0 %v2066
  %2100 = vmatprep.subr.mxu0 0.0
  %2101 = vmatpush1.msra.mxu0 %v2065
  %2102 = vmatprep.subr.mxu0 0.0
  %2103 = vmatpush1.msra.mxu0 %v2064
  %2104 = vmatprep.subr.mxu0 0.0
  %2105 = vmatpush1.msra.mxu0 %v2063
  %2106 = vmatprep.subr.mxu0 0.0
  %2107 = vmatpush2.msra.mxu0 0.0
  %2108 = vmatprep.subr.mxu0 0.0
  %2109 = vmatpush2.msra.mxu0 0.0
  %2110 = vmatprep.subr.mxu0 0.0
  %2111 = vmatpush2.msra.mxu0 0.0
  %2112 = vmatprep.subr.mxu0 0.0
  %2113 = vmatpush2.msra.mxu0 0.0
  %2114 = vmatprep.subr.mxu0 0.0
  %2115 = vmatpush2.msra.mxu0 0.0
  %2116 = vmatprep.subr.mxu0 0.0
  %2117 = vmatpush2.msra.mxu0 0.0
  %2118 = vmatprep.subr.mxu0 0.0
  %2119 = vmatpush2.msra.mxu0 0.0
  %2120 = vmatprep.subr.mxu0 0.0
  %2121 = vmatpush2.msra.mxu0 0.0
  %2122 = vmatprep.subr.mxu0 0.0
  %2123 = vmatpush2.msra.mxu0 0.0
  %2124 = vmatprep.subr.mxu0 0.0
  %2125 = vmatpush2.msra.mxu0 0.0
  %2126 = vmatprep.subr.mxu0 0.0
  %2127 = vmatpush2.msra.mxu0 0.0
  %2128 = vmatprep.subr.mxu0 0.0
  %2129 = vmatpush2.msra.mxu0 0.0
  %2130 = vmatprep.subr.mxu0 0.0
  %2131 = vmatpush2.msra.mxu0 0.0
  %2132 = vmatprep.subr.mxu0 0.0
  %2133 = vmatpush2.msra.mxu0 0.0
  %2134 = vmatprep.subr.mxu0 0.0
  %2135 = vmatpush2.msra.mxu0 0.0
  %2136 = vmatprep.subr.mxu0 0.0
  %2137 = vmatpush2.msra.mxu0 0.0
  %2138 = vmatprep.mubr.f32.mxu0 0.0
  %2139 = vmatmul.mubr.f32.gmra.mxu0 %v2069
  %v2140 = vpop.f32.mrf.mxu0
  %v2141 = vadd.f32 %v54, %v2140
  %v2142 = vpop.f32.mrf.mxu0
  %2143 = vmatprep.mubr.f32.mxu0 0.0
  %2144 = vmatmul.mubr.f32.gmra.mxu0 %v2072
  %v2145 = vpop.f32.mrf.mxu0
  %v2146 = vadd.f32 %v55, %v2145
  %v2147 = vpop.f32.mrf.mxu0
  %2148 = vdwg.mxu0
  %2150 = vset.pattern.permute.xlu0 0
  %2151 = vperm.xlu0 %2150, %v2141
  %v2152 = vpop.permute.xlu0 %2151
  %2155 = vset.pattern.permute.xlu0 0
  %2156 = vperm.xlu0 %2155, %v2146
  %v2157 = vpop.permute.xlu0 %2156
  %v2159 = vmul.f32 %v56, %v2152
  %v2160 = vmul.f32 %v57, %v2157
  %vm2161 = vcmask 72704
  %v2163 = vsel %vm2161, %v58, 0
  %v2166 = vsel %vm2161, %v59, 0
  %vm2168 = vcmask 1040384
  %v2170 = vsel %vm2168, %v2160, 0
  %2172 = vmatprep.subr.mxu0 0.0
  %2173 = vmatpush1.msra.mxu0 0.0
  %2174 = vmatprep.subr.mxu0 0.0
  %2175 = vmatpush1.msra.mxu0 0.0
  %2176 = vmatprep.subr.mxu0 0.0
  %2177 = vmatpush1.msra.mxu0 0.0
  %2178 = vmatprep.subr.mxu0 0.0
  %2179 = vmatpush1.msra.mxu0 0.0
  %2180 = vmatprep.subr.mxu0 0.0
  %2181 = vmatpush1.msra.mxu0 0.0
  %2182 = vmatprep.subr.mxu0 0.0
  %2183 = vmatpush1.msra.mxu0 0.0
  %2184 = vmatprep.subr.mxu0 0.0
  %2185 = vmatpush1.msra.mxu0 0.0
  %2186 = vmatprep.subr.mxu0 0.0
  %2187 = vmatpush1.msra.mxu0 0.0
  %2188 = vmatprep.subr.mxu0 0.0
  %2189 = vmatpush1.msra.mxu0 0.0
  %2190 = vmatprep.subr.mxu0 0.0
  %2191 = vmatpush1.msra.mxu0 0.0
  %2192 = vmatprep.subr.mxu0 0.0
  %2193 = vmatpush1.msra.mxu0 0.0
  %2194 = vmatprep.subr.mxu0 0.0
  %2195 = vmatpush1.msra.mxu0 0.0
  %2196 = vmatprep.subr.mxu0 0.0
  %2197 = vmatpush1.msra.mxu0 0.0
  %2198 = vmatprep.subr.mxu0 0.0
  %2199 = vmatpush1.msra.mxu0 0.0
  %2200 = vmatprep.subr.mxu0 0.0
  %2201 = vmatpush1.msra.mxu0 %v2170
  %2202 = vmatprep.subr.mxu0 0.0
  %2203 = vmatpush1.msra.mxu0 %v2159
  %2204 = vmatprep.subr.mxu0 0.0
  %2205 = vmatpush2.msra.mxu0 0.0
  %2206 = vmatprep.subr.mxu0 0.0
  %2207 = vmatpush2.msra.mxu0 0.0
  %2208 = vmatprep.subr.mxu0 0.0
  %2209 = vmatpush2.msra.mxu0 0.0
  %2210 = vmatprep.subr.mxu0 0.0
  %2211 = vmatpush2.msra.mxu0 0.0
  %2212 = vmatprep.subr.mxu0 0.0
  %2213 = vmatpush2.msra.mxu0 0.0
  %2214 = vmatprep.subr.mxu0 0.0
  %2215 = vmatpush2.msra.mxu0 0.0
  %2216 = vmatprep.subr.mxu0 0.0
  %2217 = vmatpush2.msra.mxu0 0.0
  %2218 = vmatprep.subr.mxu0 0.0
  %2219 = vmatpush2.msra.mxu0 0.0
  %2220 = vmatprep.subr.mxu0 0.0
  %2221 = vmatpush2.msra.mxu0 0.0
  %2222 = vmatprep.subr.mxu0 0.0
  %2223 = vmatpush2.msra.mxu0 0.0
  %2224 = vmatprep.subr.mxu0 0.0
  %2225 = vmatpush2.msra.mxu0 0.0
  %2226 = vmatprep.subr.mxu0 0.0
  %2227 = vmatpush2.msra.mxu0 0.0
  %2228 = vmatprep.subr.mxu0 0.0
  %2229 = vmatpush2.msra.mxu0 0.0
  %2230 = vmatprep.subr.mxu0 0.0
  %2231 = vmatpush2.msra.mxu0 0.0
  %2232 = vmatprep.subr.mxu0 0.0
  %2233 = vmatpush2.msra.mxu0 0.0
  %2234 = vmatprep.subr.mxu0 0.0
  %2235 = vmatpush2.msra.mxu0 0.0
  %2236 = vmatprep.mubr.f32.mxu0 0.0
  %2237 = vmatmul.mubr.f32.gmra.mxu0 %v2163
  %v2238 = vpop.f32.mrf.mxu0
  %v2239 = vadd.f32 0.0, %v2238
  %v2240 = vpop.f32.mrf.mxu0
  %2241 = vmatprep.mubr.f32.mxu0 0.0
  %2242 = vmatmul.mubr.f32.gmra.mxu0 %v2166
  %v2243 = vpop.f32.mrf.mxu0
  %v2244 = vadd.f32 0.0, %v2243
  %v2245 = vpop.f32.mrf.mxu0
  %2246 = vdwg.mxu0
  %vm2247 = vcmask 654336
  %v2249 = vsel %vm2247, %v2239, 0
  %v2252 = vsel %vm2247, %v2244, 0
  %2254 = vmatprep.subr.mxu0 0.0
  %2255 = vmatpush1.msra.mxu0 0.0
  %2256 = vmatprep.subr.mxu0 0.0
  %2257 = vmatpush1.msra.mxu0 0.0
  %2258 = vmatprep.subr.mxu0 0.0
  %2259 = vmatpush1.msra.mxu0 0.0
  %2260 = vmatprep.subr.mxu0 0.0
  %2261 = vmatpush1.msra.mxu0 0.0
  %2262 = vmatprep.subr.mxu0 0.0
  %2263 = vmatpush1.msra.mxu0 0.0
  %2264 = vmatprep.subr.mxu0 0.0
  %2265 = vmatpush1.msra.mxu0 0.0
  %2266 = vmatprep.subr.mxu0 0.0
  %2267 = vmatpush1.msra.mxu0 %v69
  %2268 = vmatprep.subr.mxu0 0.0
  %2269 = vmatpush1.msra.mxu0 %v68
  %2270 = vmatprep.subr.mxu0 0.0
  %2271 = vmatpush1.msra.mxu0 %v67
  %2272 = vmatprep.subr.mxu0 0.0
  %2273 = vmatpush1.msra.mxu0 %v66
  %2274 = vmatprep.subr.mxu0 0.0
  %2275 = vmatpush1.msra.mxu0 %v65
  %2276 = vmatprep.subr.mxu0 0.0
  %2277 = vmatpush1.msra.mxu0 %v64
  %2278 = vmatprep.subr.mxu0 0.0
  %2279 = vmatpush1.msra.mxu0 %v63
  %2280 = vmatprep.subr.mxu0 0.0
  %2281 = vmatpush1.msra.mxu0 %v62
  %2282 = vmatprep.subr.mxu0 0.0
  %2283 = vmatpush1.msra.mxu0 %v61
  %2284 = vmatprep.subr.mxu0 0.0
  %2285 = vmatpush1.msra.mxu0 %v60
  %2286 = vmatprep.subr.mxu0 0.0
  %2287 = vmatpush2.msra.mxu0 0.0
  %2288 = vmatprep.subr.mxu0 0.0
  %2289 = vmatpush2.msra.mxu0 0.0
  %2290 = vmatprep.subr.mxu0 0.0
  %2291 = vmatpush2.msra.mxu0 0.0
  %2292 = vmatprep.subr.mxu0 0.0
  %2293 = vmatpush2.msra.mxu0 0.0
  %2294 = vmatprep.subr.mxu0 0.0
  %2295 = vmatpush2.msra.mxu0 0.0
  %2296 = vmatprep.subr.mxu0 0.0
  %2297 = vmatpush2.msra.mxu0 0.0
  %2298 = vmatprep.subr.mxu0 0.0
  %2299 = vmatpush2.msra.mxu0 0.0
  %2300 = vmatprep.subr.mxu0 0.0
  %2301 = vmatpush2.msra.mxu0 0.0
  %2302 = vmatprep.subr.mxu0 0.0
  %2303 = vmatpush2.msra.mxu0 0.0
  %2304 = vmatprep.subr.mxu0 0.0
  %2305 = vmatpush2.msra.mxu0 0.0
  %2306 = vmatprep.subr.mxu0 0.0
  %2307 = vmatpush2.msra.mxu0 0.0
  %2308 = vmatprep.subr.mxu0 0.0
  %2309 = vmatpush2.msra.mxu0 0.0
  %2310 = vmatprep.subr.mxu0 0.0
  %2311 = vmatpush2.msra.mxu0 0.0
  %2312 = vmatprep.subr.mxu0 0.0
  %2313 = vmatpush2.msra.mxu0 0.0
  %2314 = vmatprep.subr.mxu0 0.0
  %2315 = vmatpush2.msra.mxu0 0.0
  %2316 = vmatprep.subr.mxu0 0.0
  %2317 = vmatpush2.msra.mxu0 0.0
  %2318 = vmatprep.mubr.f32.mxu0 0.0
  %2319 = vmatmul.mubr.f32.gmra.mxu0 %v2249
  %v2320 = vpop.f32.mrf.mxu0
  %v2321 = vadd.f32 0.0, %v2320
  %v2322 = vpop.f32.mrf.mxu0
  %2323 = vmatprep.mubr.f32.mxu0 0.0
  %2324 = vmatmul.mubr.f32.gmra.mxu0 %v2252
  %v2325 = vpop.f32.mrf.mxu0
  %v2326 = vadd.f32 0.0, %v2325
  %v2327 = vpop.f32.mrf.mxu0
  %2328 = vdwg.mxu0
  %v2329 = vmax.f32 %v2321, 0.0
  %v2330 = vmax.f32 %v2326, 0.0
  %v2332 = vsel %vm2168, %v2330, 0
  %2334 = vmatprep.subr.mxu0 0.0
  %2335 = vmatpush1.msra.mxu0 0.0
  %2336 = vmatprep.subr.mxu0 0.0
  %2337 = vmatpush1.msra.mxu0 0.0
  %2338 = vmatprep.subr.mxu0 0.0
  %2339 = vmatpush1.msra.mxu0 0.0
  %2340 = vmatprep.subr.mxu0 0.0
  %2341 = vmatpush1.msra.mxu0 0.0
  %2342 = vmatprep.subr.mxu0 0.0
  %2343 = vmatpush1.msra.mxu0 0.0
  %2344 = vmatprep.subr.mxu0 0.0
  %2345 = vmatpush1.msra.mxu0 0.0
  %2346 = vmatprep.subr.mxu0 0.0
  %2347 = vmatpush1.msra.mxu0 0.0
  %2348 = vmatprep.subr.mxu0 0.0
  %2349 = vmatpush1.msra.mxu0 0.0
  %2350 = vmatprep.subr.mxu0 0.0
  %2351 = vmatpush1.msra.mxu0 0.0
  %2352 = vmatprep.subr.mxu0 0.0
  %2353 = vmatpush1.msra.mxu0 0.0
  %2354 = vmatprep.subr.mxu0 0.0
  %2355 = vmatpush1.msra.mxu0 0.0
  %2356 = vmatprep.subr.mxu0 0.0
  %2357 = vmatpush1.msra.mxu0 0.0
  %2358 = vmatprep.subr.mxu0 0.0
  %2359 = vmatpush1.msra.mxu0 0.0
  %2360 = vmatprep.subr.mxu0 0.0
  %2361 = vmatpush1.msra.mxu0 0.0
  %2362 = vmatprep.subr.mxu0 0.0
  %2363 = vmatpush1.msra.mxu0 %v2332
  %2364 = vmatprep.subr.mxu0 0.0
  %2365 = vmatpush1.msra.mxu0 %v2329
  %2366 = vmatprep.subr.mxu0 0.0
  %2367 = vmatpush2.msra.mxu0 0.0
  %2368 = vmatprep.subr.mxu0 0.0
  %2369 = vmatpush2.msra.mxu0 0.0
  %2370 = vmatprep.subr.mxu0 0.0
  %2371 = vmatpush2.msra.mxu0 0.0
  %2372 = vmatprep.subr.mxu0 0.0
  %2373 = vmatpush2.msra.mxu0 0.0
  %2374 = vmatprep.subr.mxu0 0.0
  %2375 = vmatpush2.msra.mxu0 0.0
  %2376 = vmatprep.subr.mxu0 0.0
  %2377 = vmatpush2.msra.mxu0 0.0
  %2378 = vmatprep.subr.mxu0 0.0
  %2379 = vmatpush2.msra.mxu0 0.0
  %2380 = vmatprep.subr.mxu0 0.0
  %2381 = vmatpush2.msra.mxu0 0.0
  %2382 = vmatprep.subr.mxu0 0.0
  %2383 = vmatpush2.msra.mxu0 0.0
  %2384 = vmatprep.subr.mxu0 0.0
  %2385 = vmatpush2.msra.mxu0 0.0
  %2386 = vmatprep.subr.mxu0 0.0
  %2387 = vmatpush2.msra.mxu0 0.0
  %2388 = vmatprep.subr.mxu0 0.0
  %2389 = vmatpush2.msra.mxu0 0.0
  %2390 = vmatprep.subr.mxu0 0.0
  %2391 = vmatpush2.msra.mxu0 0.0
  %2392 = vmatprep.subr.mxu0 0.0
  %2393 = vmatpush2.msra.mxu0 0.0
  %2394 = vmatprep.subr.mxu0 0.0
  %2395 = vmatpush2.msra.mxu0 0.0
  %2396 = vmatprep.subr.mxu0 0.0
  %2397 = vmatpush2.msra.mxu0 0.0
  %2398 = vmatprep.mubr.f32.mxu0 0.0
  %2399 = vmatmul.mubr.f32.gmra.mxu0 %v2163
  %v2400 = vpop.f32.mrf.mxu0
  %v2401 = vadd.f32 0.0, %v2400
  %v2402 = vpop.f32.mrf.mxu0
  %2403 = vmatprep.mubr.f32.mxu0 0.0
  %2404 = vmatmul.mubr.f32.gmra.mxu0 %v2166
  %v2405 = vpop.f32.mrf.mxu0
  %v2406 = vadd.f32 0.0, %v2405
  %v2407 = vpop.f32.mrf.mxu0
  %2408 = vdwg.mxu0
  %v2410 = vsel %vm2247, %v2401, 0
  %v2413 = vsel %vm2247, %v2406, 0
  %2415 = vmatprep.subr.mxu0 0.0
  %2416 = vmatpush1.msra.mxu0 0.0
  %2417 = vmatprep.subr.mxu0 0.0
  %2418 = vmatpush1.msra.mxu0 0.0
  %2419 = vmatprep.subr.mxu0 0.0
  %2420 = vmatpush1.msra.mxu0 0.0
  %2421 = vmatprep.subr.mxu0 0.0
  %2422 = vmatpush1.msra.mxu0 0.0
  %2423 = vmatprep.subr.mxu0 0.0
  %2424 = vmatpush1.msra.mxu0 0.0
  %2425 = vmatprep.subr.mxu0 0.0
  %2426 = vmatpush1.msra.mxu0 0.0
  %2427 = vmatprep.subr.mxu0 0.0
  %2428 = vmatpush1.msra.mxu0 %v79
  %2429 = vmatprep.subr.mxu0 0.0
  %2430 = vmatpush1.msra.mxu0 %v78
  %2431 = vmatprep.subr.mxu0 0.0
  %2432 = vmatpush1.msra.mxu0 %v77
  %2433 = vmatprep.subr.mxu0 0.0
  %2434 = vmatpush1.msra.mxu0 %v76
  %2435 = vmatprep.subr.mxu0 0.0
  %2436 = vmatpush1.msra.mxu0 %v75
  %2437 = vmatprep.subr.mxu0 0.0
  %2438 = vmatpush1.msra.mxu0 %v74
  %2439 = vmatprep.subr.mxu0 0.0
  %2440 = vmatpush1.msra.mxu0 %v73
  %2441 = vmatprep.subr.mxu0 0.0
  %2442 = vmatpush1.msra.mxu0 %v72
  %2443 = vmatprep.subr.mxu0 0.0
  %2444 = vmatpush1.msra.mxu0 %v71
  %2445 = vmatprep.subr.mxu0 0.0
  %2446 = vmatpush1.msra.mxu0 %v70
  %2447 = vmatprep.subr.mxu0 0.0
  %2448 = vmatpush2.msra.mxu0 0.0
  %2449 = vmatprep.subr.mxu0 0.0
  %2450 = vmatpush2.msra.mxu0 0.0
  %2451 = vmatprep.subr.mxu0 0.0
  %2452 = vmatpush2.msra.mxu0 0.0
  %2453 = vmatprep.subr.mxu0 0.0
  %2454 = vmatpush2.msra.mxu0 0.0
  %2455 = vmatprep.subr.mxu0 0.0
  %2456 = vmatpush2.msra.mxu0 0.0
  %2457 = vmatprep.subr.mxu0 0.0
  %2458 = vmatpush2.msra.mxu0 0.0
  %2459 = vmatprep.subr.mxu0 0.0
  %2460 = vmatpush2.msra.mxu0 0.0
  %2461 = vmatprep.subr.mxu0 0.0
  %2462 = vmatpush2.msra.mxu0 0.0
  %2463 = vmatprep.subr.mxu0 0.0
  %2464 = vmatpush2.msra.mxu0 0.0
  %2465 = vmatprep.subr.mxu0 0.0
  %2466 = vmatpush2.msra.mxu0 0.0
  %2467 = vmatprep.subr.mxu0 0.0
  %2468 = vmatpush2.msra.mxu0 0.0
  %2469 = vmatprep.subr.mxu0 0.0
  %2470 = vmatpush2.msra.mxu0 0.0
  %2471 = vmatprep.subr.mxu0 0.0
  %2472 = vmatpush2.msra.mxu0 0.0
  %2473 = vmatprep.subr.mxu0 0.0
  %2474 = vmatpush2.msra.mxu0 0.0
  %2475 = vmatprep.subr.mxu0 0.0
  %2476 = vmatpush2.msra.mxu0 0.0
  %2477 = vmatprep.subr.mxu0 0.0
  %2478 = vmatpush2.msra.mxu0 0.0
  %2479 = vmatprep.mubr.f32.mxu0 0.0
  %2480 = vmatmul.mubr.f32.gmra.mxu0 %v2410
  %v2481 = vpop.f32.mrf.mxu0
  %v2482 = vadd.f32 0.0, %v2481
  %v2483 = vpop.f32.mrf.mxu0
  %2484 = vmatprep.mubr.f32.mxu0 0.0
  %2485 = vmatmul.mubr.f32.gmra.mxu0 %v2413
  %v2486 = vpop.f32.mrf.mxu0
  %v2487 = vadd.f32 0.0, %v2486
  %v2488 = vpop.f32.mrf.mxu0
  %2489 = vdwg.mxu0
  %vm2490 = vcmask 523264
  %v2491 = vsel %vm2490, %v2482, 0.0
  %vm2492 = vcmask 516096
  %v2493 = vsel %vm2492, %v2487, 0.0
  %v2494 = vadd.f32 %v2491, %v2493
  %v2495 = vrot.slane %v2494, 4
  %v2496 = vadd.f32 %v2494, %v2495
  %v2497 = vrot.slane %v2496, 2
  %v2498 = vadd.f32 %v2496, %v2497
  %v2499 = vrot.slane %v2498, 1
  %v2500 = vadd.f32 %v2498, %v2499
  %v2501 = vmul.f32 %v2500, 0.11111111
  %v2503 = vsel %vm2490, %v1964, 0
  %2505 = vmatprep.subr.mxu0 0.0
  %2506 = vmatpush1.msra.mxu0 0.0
  %2507 = vmatprep.subr.mxu0 0.0
  %2508 = vmatpush1.msra.mxu0 0.0
  %2509 = vmatprep.subr.mxu0 0.0
  %2510 = vmatpush1.msra.mxu0 0.0
  %2511 = vmatprep.subr.mxu0 0.0
  %2512 = vmatpush1.msra.mxu0 0.0
  %2513 = vmatprep.subr.mxu0 0.0
  %2514 = vmatpush1.msra.mxu0 0.0
  %2515 = vmatprep.subr.mxu0 0.0
  %2516 = vmatpush1.msra.mxu0 0.0
  %2517 = vmatprep.subr.mxu0 0.0
  %2518 = vmatpush1.msra.mxu0 0.0
  %2519 = vmatprep.subr.mxu0 0.0
  %2520 = vmatpush1.msra.mxu0 0.0
  %2521 = vmatprep.subr.mxu0 0.0
  %2522 = vmatpush1.msra.mxu0 %v95
  %2523 = vmatprep.subr.mxu0 0.0
  %2524 = vmatpush1.msra.mxu0 %v94
  %2525 = vmatprep.subr.mxu0 0.0
  %2526 = vmatpush1.msra.mxu0 %v93
  %2527 = vmatprep.subr.mxu0 0.0
  %2528 = vmatpush1.msra.mxu0 %v92
  %2529 = vmatprep.subr.mxu0 0.0
  %2530 = vmatpush1.msra.mxu0 %v91
  %2531 = vmatprep.subr.mxu0 0.0
  %2532 = vmatpush1.msra.mxu0 %v90
  %2533 = vmatprep.subr.mxu0 0.0
  %2534 = vmatpush1.msra.mxu0 %v89
  %2535 = vmatprep.subr.mxu0 0.0
  %2536 = vmatpush1.msra.mxu0 %v88
  %2537 = vmatprep.subr.mxu0 0.0
  %2538 = vmatpush2.msra.mxu0 0.0
  %2539 = vmatprep.subr.mxu0 0.0
  %2540 = vmatpush2.msra.mxu0 0.0
  %2541 = vmatprep.subr.mxu0 0.0
  %2542 = vmatpush2.msra.mxu0 0.0
  %2543 = vmatprep.subr.mxu0 0.0
  %2544 = vmatpush2.msra.mxu0 0.0
  %2545 = vmatprep.subr.mxu0 0.0
  %2546 = vmatpush2.msra.mxu0 0.0
  %2547 = vmatprep.subr.mxu0 0.0
  %2548 = vmatpush2.msra.mxu0 0.0
  %2549 = vmatprep.subr.mxu0 0.0
  %2550 = vmatpush2.msra.mxu0 0.0
  %2551 = vmatprep.subr.mxu0 0.0
  %2552 = vmatpush2.msra.mxu0 0.0
  %2553 = vmatprep.subr.mxu0 0.0
  %2554 = vmatpush2.msra.mxu0 0.0
  %2555 = vmatprep.subr.mxu0 0.0
  %2556 = vmatpush2.msra.mxu0 0.0
  %2557 = vmatprep.subr.mxu0 0.0
  %2558 = vmatpush2.msra.mxu0 0.0
  %2559 = vmatprep.subr.mxu0 0.0
  %2560 = vmatpush2.msra.mxu0 0.0
  %2561 = vmatprep.subr.mxu0 0.0
  %2562 = vmatpush2.msra.mxu0 0.0
  %2563 = vmatprep.subr.mxu0 0.0
  %2564 = vmatpush2.msra.mxu0 0.0
  %2565 = vmatprep.subr.mxu0 0.0
  %2566 = vmatpush2.msra.mxu0 0.0
  %2567 = vmatprep.subr.mxu0 0.0
  %2568 = vmatpush2.msra.mxu0 0.0
  %2569 = vmatprep.mubr.f32.mxu0 0.0
  %2570 = vmatmul.mubr.f32.gmra.mxu0 %v2503
  %v2571 = vpop.f32.mrf.mxu0
  %v2572 = vadd.f32 0.0, %v2571
  %v2573 = vpop.f32.mrf.mxu0
  %2574 = vdwg.mxu0
  %v2576 = vsel %vm2490, %v1949, 0
  %2578 = vmatprep.subr.mxu0 0.0
  %2579 = vmatpush1.msra.mxu0 0.0
  %2580 = vmatprep.subr.mxu0 0.0
  %2581 = vmatpush1.msra.mxu0 0.0
  %2582 = vmatprep.subr.mxu0 0.0
  %2583 = vmatpush1.msra.mxu0 0.0
  %2584 = vmatprep.subr.mxu0 0.0
  %2585 = vmatpush1.msra.mxu0 0.0
  %2586 = vmatprep.subr.mxu0 0.0
  %2587 = vmatpush1.msra.mxu0 0.0
  %2588 = vmatprep.subr.mxu0 0.0
  %2589 = vmatpush1.msra.mxu0 0.0
  %2590 = vmatprep.subr.mxu0 0.0
  %2591 = vmatpush1.msra.mxu0 0.0
  %2592 = vmatprep.subr.mxu0 0.0
  %2593 = vmatpush1.msra.mxu0 0.0
  %2594 = vmatprep.subr.mxu0 0.0
  %2595 = vmatpush1.msra.mxu0 %v87
  %2596 = vmatprep.subr.mxu0 0.0
  %2597 = vmatpush1.msra.mxu0 %v86
  %2598 = vmatprep.subr.mxu0 0.0
  %2599 = vmatpush1.msra.mxu0 %v85
  %2600 = vmatprep.subr.mxu0 0.0
  %2601 = vmatpush1.msra.mxu0 %v84
  %2602 = vmatprep.subr.mxu0 0.0
  %2603 = vmatpush1.msra.mxu0 %v83
  %2604 = vmatprep.subr.mxu0 0.0
  %2605 = vmatpush1.msra.mxu0 %v82
  %2606 = vmatprep.subr.mxu0 0.0
  %2607 = vmatpush1.msra.mxu0 %v81
  %2608 = vmatprep.subr.mxu0 0.0
  %2609 = vmatpush1.msra.mxu0 %v80
  %2610 = vmatprep.subr.mxu0 0.0
  %2611 = vmatpush2.msra.mxu0 0.0
  %2612 = vmatprep.subr.mxu0 0.0
  %2613 = vmatpush2.msra.mxu0 0.0
  %2614 = vmatprep.subr.mxu0 0.0
  %2615 = vmatpush2.msra.mxu0 0.0
  %2616 = vmatprep.subr.mxu0 0.0
  %2617 = vmatpush2.msra.mxu0 0.0
  %2618 = vmatprep.subr.mxu0 0.0
  %2619 = vmatpush2.msra.mxu0 0.0
  %2620 = vmatprep.subr.mxu0 0.0
  %2621 = vmatpush2.msra.mxu0 0.0
  %2622 = vmatprep.subr.mxu0 0.0
  %2623 = vmatpush2.msra.mxu0 0.0
  %2624 = vmatprep.subr.mxu0 0.0
  %2625 = vmatpush2.msra.mxu0 0.0
  %2626 = vmatprep.subr.mxu0 0.0
  %2627 = vmatpush2.msra.mxu0 0.0
  %2628 = vmatprep.subr.mxu0 0.0
  %2629 = vmatpush2.msra.mxu0 0.0
  %2630 = vmatprep.subr.mxu0 0.0
  %2631 = vmatpush2.msra.mxu0 0.0
  %2632 = vmatprep.subr.mxu0 0.0
  %2633 = vmatpush2.msra.mxu0 0.0
  %2634 = vmatprep.subr.mxu0 0.0
  %2635 = vmatpush2.msra.mxu0 0.0
  %2636 = vmatprep.subr.mxu0 0.0
  %2637 = vmatpush2.msra.mxu0 0.0
  %2638 = vmatprep.subr.mxu0 0.0
  %2639 = vmatpush2.msra.mxu0 0.0
  %2640 = vmatprep.subr.mxu0 0.0
  %2641 = vmatpush2.msra.mxu0 0.0
  %2642 = vmatprep.mubr.f32.mxu0 0.0
  %2643 = vmatmul.mubr.f32.gmra.mxu0 %v2576
  %v2644 = vpop.f32.mrf.mxu0
  %v2645 = vadd.f32 %v2572, %v2644
  %v2646 = vpop.f32.mrf.mxu0
  %2647 = vdwg.mxu0
  %v2649 = vsel %vm2490, %v2501, 0
  %2651 = vmatprep.subr.mxu0 0.0
  %2652 = vmatpush1.msra.mxu0 0.0
  %2653 = vmatprep.subr.mxu0 0.0
  %2654 = vmatpush1.msra.mxu0 0.0
  %2655 = vmatprep.subr.mxu0 0.0
  %2656 = vmatpush1.msra.mxu0 0.0
  %2657 = vmatprep.subr.mxu0 0.0
  %2658 = vmatpush1.msra.mxu0 0.0
  %2659 = vmatprep.subr.mxu0 0.0
  %2660 = vmatpush1.msra.mxu0 0.0
  %2661 = vmatprep.subr.mxu0 0.0
  %2662 = vmatpush1.msra.mxu0 0.0
  %2663 = vmatprep.subr.mxu0 0.0
  %2664 = vmatpush1.msra.mxu0 0.0
  %2665 = vmatprep.subr.mxu0 0.0
  %2666 = vmatpush1.msra.mxu0 0.0
  %2667 = vmatprep.subr.mxu0 0.0
  %2668 = vmatpush1.msra.mxu0 %v103
  %2669 = vmatprep.subr.mxu0 0.0
  %2670 = vmatpush1.msra.mxu0 %v102
  %2671 = vmatprep.subr.mxu0 0.0
  %2672 = vmatpush1.msra.mxu0 %v101
  %2673 = vmatprep.subr.mxu0 0.0
  %2674 = vmatpush1.msra.mxu0 %v100
  %2675 = vmatprep.subr.mxu0 0.0
  %2676 = vmatpush1.msra.mxu0 %v99
  %2677 = vmatprep.subr.mxu0 0.0
  %2678 = vmatpush1.msra.mxu0 %v98
  %2679 = vmatprep.subr.mxu0 0.0
  %2680 = vmatpush1.msra.mxu0 %v97
  %2681 = vmatprep.subr.mxu0 0.0
  %2682 = vmatpush1.msra.mxu0 %v96
  %2683 = vmatprep.subr.mxu0 0.0
  %2684 = vmatpush2.msra.mxu0 0.0
  %2685 = vmatprep.subr.mxu0 0.0
  %2686 = vmatpush2.msra.mxu0 0.0
  %2687 = vmatprep.subr.mxu0 0.0
  %2688 = vmatpush2.msra.mxu0 0.0
  %2689 = vmatprep.subr.mxu0 0.0
  %2690 = vmatpush2.msra.mxu0 0.0
  %2691 = vmatprep.subr.mxu0 0.0
  %2692 = vmatpush2.msra.mxu0 0.0
  %2693 = vmatprep.subr.mxu0 0.0
  %2694 = vmatpush2.msra.mxu0 0.0
  %2695 = vmatprep.subr.mxu0 0.0
  %2696 = vmatpush2.msra.mxu0 0.0
  %2697 = vmatprep.subr.mxu0 0.0
  %2698 = vmatpush2.msra.mxu0 0.0
  %2699 = vmatprep.subr.mxu0 0.0
  %2700 = vmatpush2.msra.mxu0 0.0
  %2701 = vmatprep.subr.mxu0 0.0
  %2702 = vmatpush2.msra.mxu0 0.0
  %2703 = vmatprep.subr.mxu0 0.0
  %2704 = vmatpush2.msra.mxu0 0.0
  %2705 = vmatprep.subr.mxu0 0.0
  %2706 = vmatpush2.msra.mxu0 0.0
  %2707 = vmatprep.subr.mxu0 0.0
  %2708 = vmatpush2.msra.mxu0 0.0
  %2709 = vmatprep.subr.mxu0 0.0
  %2710 = vmatpush2.msra.mxu0 0.0
  %2711 = vmatprep.subr.mxu0 0.0
  %2712 = vmatpush2.msra.mxu0 0.0
  %2713 = vmatprep.subr.mxu0 0.0
  %2714 = vmatpush2.msra.mxu0 0.0
  %2715 = vmatprep.mubr.f32.mxu0 0.0
  %2716 = vmatmul.mubr.f32.gmra.mxu0 %v2649
  %v2717 = vpop.f32.mrf.mxu0
  %v2718 = vadd.f32 0.0, %v2717
  %v2719 = vpop.f32.mrf.mxu0
  %2720 = vdwg.mxu0
  %v2721 = vadd.f32 %v2645, %v2718
  %v2722 = vadd.f32 %v2721, %v104
  %2723 = vxpose.xlu0.b32.start [1/16] %v2141, 128
  %2724 = vxpose.xlu0.b32.cont [2/16] %v2146, 128
  %2725 = vxpose.xlu0.b32.cont [3/16] 0.0, 128
  %2726 = vxpose.xlu0.b32.cont [4/16] 0.0, 128
  %2727 = vxpose.xlu0.b32.cont [5/16] 0.0, 128
  %2728 = vxpose.xlu0.b32.cont [6/16] 0.0, 128
  %2729 = vxpose.xlu0.b32.cont [7/16] 0.0, 128
  %2730 = vxpose.xlu0.b32.cont [8/16] 0.0, 128
  %2731 = vxpose.xlu0.b32.cont [9/16] 0.0, 128
  %2732 = vxpose.xlu0.b32.cont [10/16] 0.0, 128
  %2733 = vxpose.xlu0.b32.cont [11/16] 0.0, 128
  %2734 = vxpose.xlu0.b32.cont [12/16] 0.0, 128
  %2735 = vxpose.xlu0.b32.cont [13/16] 0.0, 128
  %2736 = vxpose.xlu0.b32.cont [14/16] 0.0, 128
  %2737 = vxpose.xlu0.b32.cont [15/16] 0.0, 128
  %2738 = vxpose.xlu0.b32.end [16/16] 0.0, 128
  %v2739 = vpop.trf.xlu0
  %v2740 = vpop.trf.xlu0
  %v2741 = vpop.trf.xlu0
  %v2742 = vpop.trf.xlu0
  %v2743 = vpop.trf.xlu0
  %v2744 = vpop.trf.xlu0
  %v2745 = vpop.trf.xlu0
  %v2746 = vpop.trf.xlu0
  %v2747 = vpop.trf.xlu0
  %v2748 = vpop.trf.xlu0
  %v2749 = vpop.trf.xlu0
  %v2750 = vpop.trf.xlu0
  %v2751 = vpop.trf.xlu0
  %v2752 = vpop.trf.xlu0
  %v2753 = vpop.trf.xlu0
  %v2754 = vpop.trf.xlu0
  %v2755 = vsel %vm2161, %v2739, 0.0
  %2756 = vst [vmem:[%s3] sm:$0x1] %v2722
  %2757 = vst [vmem:[%s3 + $0x1] sm:$0x1] %v2755
  %s2758 = scalar_lea.vmem %s0, 16
  %v2759 = vld [vmem:[%s2758] sm:$0xff]
  %v2760 = vld [vmem:[%s2758 + $0x8] sm:$0x3]
  %v2762 = vsel %vm1587, %v2759, 0
  %v2765 = vsel %vm1587, %v2760, 0
  %2767 = vmatprep.subr.mxu0 0.0
  %2768 = vmatpush1.msra.mxu0 0.0
  %2769 = vmatprep.subr.mxu0 0.0
  %2770 = vmatpush1.msra.mxu0 0.0
  %2771 = vmatprep.subr.mxu0 0.0
  %2772 = vmatpush1.msra.mxu0 0.0
  %2773 = vmatprep.subr.mxu0 0.0
  %2774 = vmatpush1.msra.mxu0 0.0
  %2775 = vmatprep.subr.mxu0 0.0
  %2776 = vmatpush1.msra.mxu0 %v25
  %2777 = vmatprep.subr.mxu0 0.0
  %2778 = vmatpush1.msra.mxu0 %v24
  %2779 = vmatprep.subr.mxu0 0.0
  %2780 = vmatpush1.msra.mxu0 %v23
  %2781 = vmatprep.subr.mxu0 0.0
  %2782 = vmatpush1.msra.mxu0 %v22
  %2783 = vmatprep.subr.mxu0 0.0
  %2784 = vmatpush1.msra.mxu0 %v21
  %2785 = vmatprep.subr.mxu0 0.0
  %2786 = vmatpush1.msra.mxu0 %v20
  %2787 = vmatprep.subr.mxu0 0.0
  %2788 = vmatpush1.msra.mxu0 %v19
  %2789 = vmatprep.subr.mxu0 0.0
  %2790 = vmatpush1.msra.mxu0 %v18
  %2791 = vmatprep.subr.mxu0 0.0
  %2792 = vmatpush1.msra.mxu0 %v17
  %2793 = vmatprep.subr.mxu0 0.0
  %2794 = vmatpush1.msra.mxu0 %v16
  %2795 = vmatprep.subr.mxu0 0.0
  %2796 = vmatpush1.msra.mxu0 %v15
  %2797 = vmatprep.subr.mxu0 0.0
  %2798 = vmatpush1.msra.mxu0 %v14
  %2799 = vmatprep.subr.mxu0 0.0
  %2800 = vmatpush2.msra.mxu0 0.0
  %2801 = vmatprep.subr.mxu0 0.0
  %2802 = vmatpush2.msra.mxu0 0.0
  %2803 = vmatprep.subr.mxu0 0.0
  %2804 = vmatpush2.msra.mxu0 0.0
  %2805 = vmatprep.subr.mxu0 0.0
  %2806 = vmatpush2.msra.mxu0 0.0
  %2807 = vmatprep.subr.mxu0 0.0
  %2808 = vmatpush2.msra.mxu0 0.0
  %2809 = vmatprep.subr.mxu0 0.0
  %2810 = vmatpush2.msra.mxu0 0.0
  %2811 = vmatprep.subr.mxu0 0.0
  %2812 = vmatpush2.msra.mxu0 0.0
  %2813 = vmatprep.subr.mxu0 0.0
  %2814 = vmatpush2.msra.mxu0 0.0
  %2815 = vmatprep.subr.mxu0 0.0
  %2816 = vmatpush2.msra.mxu0 0.0
  %2817 = vmatprep.subr.mxu0 0.0
  %2818 = vmatpush2.msra.mxu0 0.0
  %2819 = vmatprep.subr.mxu0 0.0
  %2820 = vmatpush2.msra.mxu0 0.0
  %2821 = vmatprep.subr.mxu0 0.0
  %2822 = vmatpush2.msra.mxu0 0.0
  %2823 = vmatprep.subr.mxu0 0.0
  %2824 = vmatpush2.msra.mxu0 0.0
  %2825 = vmatprep.subr.mxu0 0.0
  %2826 = vmatpush2.msra.mxu0 0.0
  %2827 = vmatprep.subr.mxu0 0.0
  %2828 = vmatpush2.msra.mxu0 0.0
  %2829 = vmatprep.subr.mxu0 0.0
  %2830 = vmatpush2.msra.mxu0 0.0
  %2831 = vmatprep.mubr.f32.mxu0 0.0
  %2832 = vmatmul.mubr.f32.gmra.mxu0 %v2762
  %v2833 = vpop.f32.mrf.mxu0
  %v2834 = vadd.f32 0.0, %v2833
  %v2835 = vpop.f32.mrf.mxu0
  %2836 = vmatprep.mubr.f32.mxu0 0.0
  %2837 = vmatmul.mubr.f32.gmra.mxu0 %v2765
  %v2838 = vpop.f32.mrf.mxu0
  %v2839 = vadd.f32 0.0, %v2838
  %v2840 = vpop.f32.mrf.mxu0
  %2841 = vdwg.mxu0
  %v2843 = vsel %vm1587, %v2834, 0
  %v2846 = vsel %vm1587, %v2839, 0
  %2848 = vmatprep.subr.mxu0 0.0
  %2849 = vmatpush1.xpose.msra.mxu0 0.0
  %2850 = vmatprep.subr.mxu0 0.0
  %2851 = vmatpush1.xpose.msra.mxu0 0.0
  %2852 = vmatprep.subr.mxu0 0.0
  %2853 = vmatpush1.xpose.msra.mxu0 0.0
  %2854 = vmatprep.subr.mxu0 0.0
  %2855 = vmatpush1.xpose.msra.mxu0 0.0
  %2856 = vmatprep.subr.mxu0 0.0
  %2857 = vmatpush1.xpose.msra.mxu0 0.0
  %2858 = vmatprep.subr.mxu0 0.0
  %2859 = vmatpush1.xpose.msra.mxu0 0.0
  %2860 = vmatprep.subr.mxu0 0.0
  %2861 = vmatpush1.xpose.msra.mxu0 0.0
  %2862 = vmatprep.subr.mxu0 0.0
  %2863 = vmatpush1.xpose.msra.mxu0 0.0
  %2864 = vmatprep.subr.mxu0 0.0
  %2865 = vmatpush1.xpose.msra.mxu0 0.0
  %2866 = vmatprep.subr.mxu0 0.0
  %2867 = vmatpush1.xpose.msra.mxu0 0.0
  %2868 = vmatprep.subr.mxu0 0.0
  %2869 = vmatpush1.xpose.msra.mxu0 0.0
  %2870 = vmatprep.subr.mxu0 0.0
  %2871 = vmatpush1.xpose.msra.mxu0 0.0
  %2872 = vmatprep.subr.mxu0 0.0
  %2873 = vmatpush1.xpose.msra.mxu0 0.0
  %2874 = vmatprep.subr.mxu0 0.0
  %2875 = vmatpush1.xpose.msra.mxu0 0.0
  %2876 = vmatprep.subr.mxu0 0.0
  %2877 = vmatpush1.xpose.msra.mxu0 %v2765
  %2878 = vmatprep.subr.mxu0 0.0
  %2879 = vmatpush1.xpose.msra.mxu0 %v2762
  %2880 = vmatprep.subr.mxu0 0.0
  %2881 = vmatpush2.xpose.msra.mxu0 0.0
  %2882 = vmatprep.subr.mxu0 0.0
  %2883 = vmatpush2.xpose.msra.mxu0 0.0
  %2884 = vmatprep.subr.mxu0 0.0
  %2885 = vmatpush2.xpose.msra.mxu0 0.0
  %2886 = vmatprep.subr.mxu0 0.0
  %2887 = vmatpush2.xpose.msra.mxu0 0.0
  %2888 = vmatprep.subr.mxu0 0.0
  %2889 = vmatpush2.xpose.msra.mxu0 0.0
  %2890 = vmatprep.subr.mxu0 0.0
  %2891 = vmatpush2.xpose.msra.mxu0 0.0
  %2892 = vmatprep.subr.mxu0 0.0
  %2893 = vmatpush2.xpose.msra.mxu0 0.0
  %2894 = vmatprep.subr.mxu0 0.0
  %2895 = vmatpush2.xpose.msra.mxu0 0.0
  %2896 = vmatprep.subr.mxu0 0.0
  %2897 = vmatpush2.xpose.msra.mxu0 0.0
  %2898 = vmatprep.subr.mxu0 0.0
  %2899 = vmatpush2.xpose.msra.mxu0 0.0
  %2900 = vmatprep.subr.mxu0 0.0
  %2901 = vmatpush2.xpose.msra.mxu0 0.0
  %2902 = vmatprep.subr.mxu0 0.0
  %2903 = vmatpush2.xpose.msra.mxu0 0.0
  %2904 = vmatprep.subr.mxu0 0.0
  %2905 = vmatpush2.xpose.msra.mxu0 0.0
  %2906 = vmatprep.subr.mxu0 0.0
  %2907 = vmatpush2.xpose.msra.mxu0 0.0
  %2908 = vmatprep.subr.mxu0 0.0
  %2909 = vmatpush2.xpose.msra.mxu0 0.0
  %2910 = vmatprep.subr.mxu0 0.0
  %2911 = vmatpush2.xpose.msra.mxu0 0.0
  %2912 = vmatprep.mubr.f32.mxu0 0.0
  %2913 = vmatmul.mubr.f32.gmra.mxu0 %v2843
  %v2914 = vpop.f32.mrf.mxu0
  %v2915 = vadd.f32 %v38, %v2914
  %v2916 = vpop.f32.mrf.mxu0
  %2917 = vmatprep.mubr.f32.mxu0 0.0
  %2918 = vmatmul.mubr.f32.gmra.mxu0 %v2846
  %v2919 = vpop.f32.mrf.mxu0
  %v2920 = vadd.f32 %v39, %v2919
  %v2921 = vpop.f32.mrf.mxu0
  %2922 = vdwg.mxu0
  %v2923 = vsel %vm1750, %v2915, -inf
  %2924 = vmax.xlane.f32.xlu0 %v2923
  %v2925 = vpop.xlane.xlu0 %2924
  %v2926 = vsel %vm1754, %v2920, -inf
  %2927 = vmax.xlane.f32.xlu0 %v2926
  %v2928 = vpop.xlane.xlu0 %2927
  %v2929 = vsub.f32 %v2915, %v2925
  %v2930 = vsub.f32 %v2920, %v2928
  %v2931 = vmul.f32 %v2929, 1.442695
  %v2932 = vpow.pop %v2931
  %v2933 = vmul.f32 %v2930, 1.442695
  %v2934 = vpow.pop %v2933
  %v2935 = vsel %vm1750, %v2932, 0.0
  %2936 = vadd.xlane.f32.xlu0 %v2935
  %v2937 = vpop.xlane.xlu0 %2936
  %v2938 = vsel %vm1754, %v2934, 0.0
  %2939 = vadd.xlane.f32.xlu0 %v2938
  %v2940 = vpop.xlane.xlu0 %2939
  %v2941 = vrcp.pop %v2937
  %v2942 = vmul.f32 %v2932, %v2941
  %v2943 = vrcp.pop %v2940
  %v2944 = vmul.f32 %v2934, %v2943
  %v2946 = vsel %vm1750, %v2942, 0
  %v2949 = vsel %vm1750, %v2944, 0
  %v2951 = vsel %vm1780, %v2760, 0
  %2953 = vmatprep.subr.mxu0 0.0
  %2954 = vmatpush1.msra.mxu0 0.0
  %2955 = vmatprep.subr.mxu0 0.0
  %2956 = vmatpush1.msra.mxu0 0.0
  %2957 = vmatprep.subr.mxu0 0.0
  %2958 = vmatpush1.msra.mxu0 0.0
  %2959 = vmatprep.subr.mxu0 0.0
  %2960 = vmatpush1.msra.mxu0 0.0
  %2961 = vmatprep.subr.mxu0 0.0
  %2962 = vmatpush1.msra.mxu0 0.0
  %2963 = vmatprep.subr.mxu0 0.0
  %2964 = vmatpush1.msra.mxu0 0.0
  %2965 = vmatprep.subr.mxu0 0.0
  %2966 = vmatpush1.msra.mxu0 0.0
  %2967 = vmatprep.subr.mxu0 0.0
  %2968 = vmatpush1.msra.mxu0 0.0
  %2969 = vmatprep.subr.mxu0 0.0
  %2970 = vmatpush1.msra.mxu0 0.0
  %2971 = vmatprep.subr.mxu0 0.0
  %2972 = vmatpush1.msra.mxu0 0.0
  %2973 = vmatprep.subr.mxu0 0.0
  %2974 = vmatpush1.msra.mxu0 0.0
  %2975 = vmatprep.subr.mxu0 0.0
  %2976 = vmatpush1.msra.mxu0 0.0
  %2977 = vmatprep.subr.mxu0 0.0
  %2978 = vmatpush1.msra.mxu0 0.0
  %2979 = vmatprep.subr.mxu0 0.0
  %2980 = vmatpush1.msra.mxu0 0.0
  %2981 = vmatprep.subr.mxu0 0.0
  %2982 = vmatpush1.msra.mxu0 %v2951
  %2983 = vmatprep.subr.mxu0 0.0
  %2984 = vmatpush1.msra.mxu0 %v2759
  %2985 = vmatprep.subr.mxu0 0.0
  %2986 = vmatpush2.msra.mxu0 0.0
  %2987 = vmatprep.subr.mxu0 0.0
  %2988 = vmatpush2.msra.mxu0 0.0
  %2989 = vmatprep.subr.mxu0 0.0
  %2990 = vmatpush2.msra.mxu0 0.0
  %2991 = vmatprep.subr.mxu0 0.0
  %2992 = vmatpush2.msra.mxu0 0.0
  %2993 = vmatprep.subr.mxu0 0.0
  %2994 = vmatpush2.msra.mxu0 0.0
  %2995 = vmatprep.subr.mxu0 0.0
  %2996 = vmatpush2.msra.mxu0 0.0
  %2997 = vmatprep.subr.mxu0 0.0
  %2998 = vmatpush2.msra.mxu0 0.0
  %2999 = vmatprep.subr.mxu0 0.0
  %3000 = vmatpush2.msra.mxu0 0.0
  %3001 = vmatprep.subr.mxu0 0.0
  %3002 = vmatpush2.msra.mxu0 0.0
  %3003 = vmatprep.subr.mxu0 0.0
  %3004 = vmatpush2.msra.mxu0 0.0
  %3005 = vmatprep.subr.mxu0 0.0
  %3006 = vmatpush2.msra.mxu0 0.0
  %3007 = vmatprep.subr.mxu0 0.0
  %3008 = vmatpush2.msra.mxu0 0.0
  %3009 = vmatprep.subr.mxu0 0.0
  %3010 = vmatpush2.msra.mxu0 0.0
  %3011 = vmatprep.subr.mxu0 0.0
  %3012 = vmatpush2.msra.mxu0 0.0
  %3013 = vmatprep.subr.mxu0 0.0
  %3014 = vmatpush2.msra.mxu0 0.0
  %3015 = vmatprep.subr.mxu0 0.0
  %3016 = vmatpush2.msra.mxu0 0.0
  %3017 = vmatprep.mubr.f32.mxu0 0.0
  %3018 = vmatmul.mubr.f32.gmra.mxu0 %v2946
  %v3019 = vpop.f32.mrf.mxu0
  %v3020 = vadd.f32 0.0, %v3019
  %v3021 = vpop.f32.mrf.mxu0
  %3022 = vmatprep.mubr.f32.mxu0 0.0
  %3023 = vmatmul.mubr.f32.gmra.mxu0 %v2949
  %v3024 = vpop.f32.mrf.mxu0
  %v3025 = vadd.f32 0.0, %v3024
  %v3026 = vpop.f32.mrf.mxu0
  %3027 = vdwg.mxu0
  %v3029 = vsel %vm1587, %v3020, 0
  %v3032 = vsel %vm1587, %v3025, 0
  %3034 = vmatprep.subr.mxu0 0.0
  %3035 = vmatpush1.msra.mxu0 0.0
  %3036 = vmatprep.subr.mxu0 0.0
  %3037 = vmatpush1.msra.mxu0 0.0
  %3038 = vmatprep.subr.mxu0 0.0
  %3039 = vmatpush1.msra.mxu0 0.0
  %3040 = vmatprep.subr.mxu0 0.0
  %3041 = vmatpush1.msra.mxu0 0.0
  %3042 = vmatprep.subr.mxu0 0.0
  %3043 = vmatpush1.msra.mxu0 %v37
  %3044 = vmatprep.subr.mxu0 0.0
  %3045 = vmatpush1.msra.mxu0 %v36
  %3046 = vmatprep.subr.mxu0 0.0
  %3047 = vmatpush1.msra.mxu0 %v35
  %3048 = vmatprep.subr.mxu0 0.0
  %3049 = vmatpush1.msra.mxu0 %v34
  %3050 = vmatprep.subr.mxu0 0.0
  %3051 = vmatpush1.msra.mxu0 %v33
  %3052 = vmatprep.subr.mxu0 0.0
  %3053 = vmatpush1.msra.mxu0 %v32
  %3054 = vmatprep.subr.mxu0 0.0
  %3055 = vmatpush1.msra.mxu0 %v31
  %3056 = vmatprep.subr.mxu0 0.0
  %3057 = vmatpush1.msra.mxu0 %v30
  %3058 = vmatprep.subr.mxu0 0.0
  %3059 = vmatpush1.msra.mxu0 %v29
  %3060 = vmatprep.subr.mxu0 0.0
  %3061 = vmatpush1.msra.mxu0 %v28
  %3062 = vmatprep.subr.mxu0 0.0
  %3063 = vmatpush1.msra.mxu0 %v27
  %3064 = vmatprep.subr.mxu0 0.0
  %3065 = vmatpush1.msra.mxu0 %v26
  %3066 = vmatprep.subr.mxu0 0.0
  %3067 = vmatpush2.msra.mxu0 0.0
  %3068 = vmatprep.subr.mxu0 0.0
  %3069 = vmatpush2.msra.mxu0 0.0
  %3070 = vmatprep.subr.mxu0 0.0
  %3071 = vmatpush2.msra.mxu0 0.0
  %3072 = vmatprep.subr.mxu0 0.0
  %3073 = vmatpush2.msra.mxu0 0.0
  %3074 = vmatprep.subr.mxu0 0.0
  %3075 = vmatpush2.msra.mxu0 0.0
  %3076 = vmatprep.subr.mxu0 0.0
  %3077 = vmatpush2.msra.mxu0 0.0
  %3078 = vmatprep.subr.mxu0 0.0
  %3079 = vmatpush2.msra.mxu0 0.0
  %3080 = vmatprep.subr.mxu0 0.0
  %3081 = vmatpush2.msra.mxu0 0.0
  %3082 = vmatprep.subr.mxu0 0.0
  %3083 = vmatpush2.msra.mxu0 0.0
  %3084 = vmatprep.subr.mxu0 0.0
  %3085 = vmatpush2.msra.mxu0 0.0
  %3086 = vmatprep.subr.mxu0 0.0
  %3087 = vmatpush2.msra.mxu0 0.0
  %3088 = vmatprep.subr.mxu0 0.0
  %3089 = vmatpush2.msra.mxu0 0.0
  %3090 = vmatprep.subr.mxu0 0.0
  %3091 = vmatpush2.msra.mxu0 0.0
  %3092 = vmatprep.subr.mxu0 0.0
  %3093 = vmatpush2.msra.mxu0 0.0
  %3094 = vmatprep.subr.mxu0 0.0
  %3095 = vmatpush2.msra.mxu0 0.0
  %3096 = vmatprep.subr.mxu0 0.0
  %3097 = vmatpush2.msra.mxu0 0.0
  %3098 = vmatprep.mubr.f32.mxu0 0.0
  %3099 = vmatmul.mubr.f32.gmra.mxu0 %v3029
  %v3100 = vpop.f32.mrf.mxu0
  %v3101 = vadd.f32 0.0, %v3100
  %v3102 = vpop.f32.mrf.mxu0
  %3103 = vmatprep.mubr.f32.mxu0 0.0
  %3104 = vmatmul.mubr.f32.gmra.mxu0 %v3032
  %v3105 = vpop.f32.mrf.mxu0
  %v3106 = vadd.f32 0.0, %v3105
  %v3107 = vpop.f32.mrf.mxu0
  %3108 = vdwg.mxu0
  %v3109 = vmax.f32 %v3101, 0.0
  %v3110 = vmax.f32 %v3106, 0.0
  %v3111 = vsel %vm1941, %v3109, 0.0
  %v3112 = vrot.slane %v3111, 4
  %v3113 = vadd.f32 %v3111, %v3112
  %v3114 = vrot.slane %v3113, 2
  %v3115 = vadd.f32 %v3113, %v3114
  %v3116 = vrot.slane %v3115, 1
  %v3117 = vadd.f32 %v3115, %v3116
  %v3118 = vmul.f32 %v3117, 0.2
  %v3121 = vrot.slane %v3109, 5
  %v3122 = vrot.slane %v3110, 5
  %v3123 = vsel %vm1952, %v3121, %v3122
  %v3125 = vsel %vm1941, %v3123, 0.0
  %v3126 = vrot.slane %v3125, 4
  %v3127 = vadd.f32 %v3125, %v3126
  %v3128 = vrot.slane %v3127, 2
  %v3129 = vadd.f32 %v3127, %v3128
  %v3130 = vrot.slane %v3129, 1
  %v3131 = vadd.f32 %v3129, %v3130
  %v3132 = vmul.f32 %v3131, 0.2
  %3133 = vmatprep.subr.mxu0 0.0
  %3134 = vmatpush1.msra.mxu0 0.0
  %3135 = vmatprep.subr.mxu0 0.0
  %3136 = vmatpush1.msra.mxu0 0.0
  %3137 = vmatprep.subr.mxu0 0.0
  %3138 = vmatpush1.msra.mxu0 0.0
  %3139 = vmatprep.subr.mxu0 0.0
  %3140 = vmatpush1.msra.mxu0 0.0
  %3141 = vmatprep.subr.mxu0 0.0
  %3142 = vmatpush1.msra.mxu0 0.0
  %3143 = vmatprep.subr.mxu0 0.0
  %3144 = vmatpush1.msra.mxu0 0.0
  %3145 = vmatprep.subr.mxu0 0.0
  %3146 = vmatpush1.msra.mxu0 0.0
  %3147 = vmatprep.subr.mxu0 0.0
  %3148 = vmatpush1.msra.mxu0 0.0
  %3149 = vmatprep.subr.mxu0 0.0
  %3150 = vmatpush1.msra.mxu0 0.0
  %3151 = vmatprep.subr.mxu0 0.0
  %3152 = vmatpush1.msra.mxu0 0.0
  %3153 = vmatprep.subr.mxu0 0.0
  %3154 = vmatpush1.msra.mxu0 0.0
  %3155 = vmatprep.subr.mxu0 0.0
  %3156 = vmatpush1.msra.mxu0 0.0
  %3157 = vmatprep.subr.mxu0 0.0
  %3158 = vmatpush1.msra.mxu0 0.0
  %3159 = vmatprep.subr.mxu0 0.0
  %3160 = vmatpush1.msra.mxu0 0.0
  %3161 = vmatprep.subr.mxu0 0.0
  %3162 = vmatpush1.msra.mxu0 %v1584
  %3163 = vmatprep.subr.mxu0 0.0
  %3164 = vmatpush1.msra.mxu0 %v1583
  %3165 = vmatprep.subr.mxu0 0.0
  %3166 = vmatpush2.msra.mxu0 0.0
  %3167 = vmatprep.subr.mxu0 0.0
  %3168 = vmatpush2.msra.mxu0 0.0
  %3169 = vmatprep.subr.mxu0 0.0
  %3170 = vmatpush2.msra.mxu0 0.0
  %3171 = vmatprep.subr.mxu0 0.0
  %3172 = vmatpush2.msra.mxu0 0.0
  %3173 = vmatprep.subr.mxu0 0.0
  %3174 = vmatpush2.msra.mxu0 0.0
  %3175 = vmatprep.subr.mxu0 0.0
  %3176 = vmatpush2.msra.mxu0 0.0
  %3177 = vmatprep.subr.mxu0 0.0
  %3178 = vmatpush2.msra.mxu0 0.0
  %3179 = vmatprep.subr.mxu0 0.0
  %3180 = vmatpush2.msra.mxu0 0.0
  %3181 = vmatprep.subr.mxu0 0.0
  %3182 = vmatpush2.msra.mxu0 0.0
  %3183 = vmatprep.subr.mxu0 0.0
  %3184 = vmatpush2.msra.mxu0 0.0
  %3185 = vmatprep.subr.mxu0 0.0
  %3186 = vmatpush2.msra.mxu0 0.0
  %3187 = vmatprep.subr.mxu0 0.0
  %3188 = vmatpush2.msra.mxu0 0.0
  %3189 = vmatprep.subr.mxu0 0.0
  %3190 = vmatpush2.msra.mxu0 0.0
  %3191 = vmatprep.subr.mxu0 0.0
  %3192 = vmatpush2.msra.mxu0 0.0
  %3193 = vmatprep.subr.mxu0 0.0
  %3194 = vmatpush2.msra.mxu0 0.0
  %3195 = vmatprep.subr.mxu0 0.0
  %3196 = vmatpush2.msra.mxu0 0.0
  %3197 = vmatprep.mubr.f32.mxu0 0.0
  %3198 = vmatmul.mubr.f32.gmra.mxu0 %v1967
  %v3199 = vpop.f32.mrf.mxu0
  %v3200 = vadd.f32 %v48, %v3199
  %v3201 = vpop.f32.mrf.mxu0
  %3202 = vmatprep.mubr.f32.mxu0 0.0
  %3203 = vmatmul.mubr.f32.gmra.mxu0 %v1970
  %v3204 = vpop.f32.mrf.mxu0
  %v3205 = vadd.f32 %v49, %v3204
  %v3206 = vpop.f32.mrf.mxu0
  %3207 = vmatprep.mubr.f32.mxu0 0.0
  %3208 = vmatmul.mubr.f32.gmra.mxu0 %v1973
  %v3209 = vpop.f32.mrf.mxu0
  %v3210 = vadd.f32 %v50, %v3209
  %v3211 = vpop.f32.mrf.mxu0
  %3212 = vmatprep.mubr.f32.mxu0 0.0
  %3213 = vmatmul.mubr.f32.gmra.mxu0 %v1976
  %v3214 = vpop.f32.mrf.mxu0
  %v3215 = vadd.f32 %v51, %v3214
  %v3216 = vpop.f32.mrf.mxu0
  %3217 = vdwg.mxu0
  %v3218 = vmax.f32 %v3200, 0.0
  %v3219 = vmax.f32 %v3205, 0.0
  %v3220 = vmax.f32 %v3210, 0.0
  %v3221 = vmax.f32 %v3215, 0.0
  %3222 = vmatprep.subr.mxu0 0.0
  %3223 = vmatpush1.msra.mxu0 0.0
  %3224 = vmatprep.subr.mxu0 0.0
  %3225 = vmatpush1.msra.mxu0 0.0
  %3226 = vmatprep.subr.mxu0 0.0
  %3227 = vmatpush1.msra.mxu0 0.0
  %3228 = vmatprep.subr.mxu0 0.0
  %3229 = vmatpush1.msra.mxu0 0.0
  %3230 = vmatprep.subr.mxu0 0.0
  %3231 = vmatpush1.msra.mxu0 0.0
  %3232 = vmatprep.subr.mxu0 0.0
  %3233 = vmatpush1.msra.mxu0 0.0
  %3234 = vmatprep.subr.mxu0 0.0
  %3235 = vmatpush1.msra.mxu0 0.0
  %3236 = vmatprep.subr.mxu0 0.0
  %3237 = vmatpush1.msra.mxu0 0.0
  %3238 = vmatprep.subr.mxu0 0.0
  %3239 = vmatpush1.msra.mxu0 0.0
  %3240 = vmatprep.subr.mxu0 0.0
  %3241 = vmatpush1.msra.mxu0 0.0
  %3242 = vmatprep.subr.mxu0 0.0
  %3243 = vmatpush1.msra.mxu0 0.0
  %3244 = vmatprep.subr.mxu0 0.0
  %3245 = vmatpush1.msra.mxu0 0.0
  %3246 = vmatprep.subr.mxu0 0.0
  %3247 = vmatpush1.msra.mxu0 %v3221
  %3248 = vmatprep.subr.mxu0 0.0
  %3249 = vmatpush1.msra.mxu0 %v3220
  %3250 = vmatprep.subr.mxu0 0.0
  %3251 = vmatpush1.msra.mxu0 %v3219
  %3252 = vmatprep.subr.mxu0 0.0
  %3253 = vmatpush1.msra.mxu0 %v3218
  %3254 = vmatprep.subr.mxu0 0.0
  %3255 = vmatpush2.msra.mxu0 0.0
  %3256 = vmatprep.subr.mxu0 0.0
  %3257 = vmatpush2.msra.mxu0 0.0
  %3258 = vmatprep.subr.mxu0 0.0
  %3259 = vmatpush2.msra.mxu0 0.0
  %3260 = vmatprep.subr.mxu0 0.0
  %3261 = vmatpush2.msra.mxu0 0.0
  %3262 = vmatprep.subr.mxu0 0.0
  %3263 = vmatpush2.msra.mxu0 0.0
  %3264 = vmatprep.subr.mxu0 0.0
  %3265 = vmatpush2.msra.mxu0 0.0
  %3266 = vmatprep.subr.mxu0 0.0
  %3267 = vmatpush2.msra.mxu0 0.0
  %3268 = vmatprep.subr.mxu0 0.0
  %3269 = vmatpush2.msra.mxu0 0.0
  %3270 = vmatprep.subr.mxu0 0.0
  %3271 = vmatpush2.msra.mxu0 0.0
  %3272 = vmatprep.subr.mxu0 0.0
  %3273 = vmatpush2.msra.mxu0 0.0
  %3274 = vmatprep.subr.mxu0 0.0
  %3275 = vmatpush2.msra.mxu0 0.0
  %3276 = vmatprep.subr.mxu0 0.0
  %3277 = vmatpush2.msra.mxu0 0.0
  %3278 = vmatprep.subr.mxu0 0.0
  %3279 = vmatpush2.msra.mxu0 0.0
  %3280 = vmatprep.subr.mxu0 0.0
  %3281 = vmatpush2.msra.mxu0 0.0
  %3282 = vmatprep.subr.mxu0 0.0
  %3283 = vmatpush2.msra.mxu0 0.0
  %3284 = vmatprep.subr.mxu0 0.0
  %3285 = vmatpush2.msra.mxu0 0.0
  %3286 = vmatprep.mubr.f32.mxu0 0.0
  %3287 = vmatmul.mubr.f32.gmra.mxu0 %v2069
  %v3288 = vpop.f32.mrf.mxu0
  %v3289 = vadd.f32 %v54, %v3288
  %v3290 = vpop.f32.mrf.mxu0
  %3291 = vmatprep.mubr.f32.mxu0 0.0
  %3292 = vmatmul.mubr.f32.gmra.mxu0 %v2072
  %v3293 = vpop.f32.mrf.mxu0
  %v3294 = vadd.f32 %v55, %v3293
  %v3295 = vpop.f32.mrf.mxu0
  %3296 = vdwg.mxu0
  %3298 = vset.pattern.permute.xlu0 0
  %3299 = vperm.xlu0 %3298, %v3289
  %v3300 = vpop.permute.xlu0 %3299
  %3303 = vset.pattern.permute.xlu0 0
  %3304 = vperm.xlu0 %3303, %v3294
  %v3305 = vpop.permute.xlu0 %3304
  %v3307 = vmul.f32 %v56, %v3300
  %v3308 = vmul.f32 %v57, %v3305
  %v3310 = vsel %vm2168, %v3308, 0
  %3312 = vmatprep.subr.mxu0 0.0
  %3313 = vmatpush1.msra.mxu0 0.0
  %3314 = vmatprep.subr.mxu0 0.0
  %3315 = vmatpush1.msra.mxu0 0.0
  %3316 = vmatprep.subr.mxu0 0.0
  %3317 = vmatpush1.msra.mxu0 0.0
  %3318 = vmatprep.subr.mxu0 0.0
  %3319 = vmatpush1.msra.mxu0 0.0
  %3320 = vmatprep.subr.mxu0 0.0
  %3321 = vmatpush1.msra.mxu0 0.0
  %3322 = vmatprep.subr.mxu0 0.0
  %3323 = vmatpush1.msra.mxu0 0.0
  %3324 = vmatprep.subr.mxu0 0.0
  %3325 = vmatpush1.msra.mxu0 0.0
  %3326 = vmatprep.subr.mxu0 0.0
  %3327 = vmatpush1.msra.mxu0 0.0
  %3328 = vmatprep.subr.mxu0 0.0
  %3329 = vmatpush1.msra.mxu0 0.0
  %3330 = vmatprep.subr.mxu0 0.0
  %3331 = vmatpush1.msra.mxu0 0.0
  %3332 = vmatprep.subr.mxu0 0.0
  %3333 = vmatpush1.msra.mxu0 0.0
  %3334 = vmatprep.subr.mxu0 0.0
  %3335 = vmatpush1.msra.mxu0 0.0
  %3336 = vmatprep.subr.mxu0 0.0
  %3337 = vmatpush1.msra.mxu0 0.0
  %3338 = vmatprep.subr.mxu0 0.0
  %3339 = vmatpush1.msra.mxu0 0.0
  %3340 = vmatprep.subr.mxu0 0.0
  %3341 = vmatpush1.msra.mxu0 %v3310
  %3342 = vmatprep.subr.mxu0 0.0
  %3343 = vmatpush1.msra.mxu0 %v3307
  %3344 = vmatprep.subr.mxu0 0.0
  %3345 = vmatpush2.msra.mxu0 0.0
  %3346 = vmatprep.subr.mxu0 0.0
  %3347 = vmatpush2.msra.mxu0 0.0
  %3348 = vmatprep.subr.mxu0 0.0
  %3349 = vmatpush2.msra.mxu0 0.0
  %3350 = vmatprep.subr.mxu0 0.0
  %3351 = vmatpush2.msra.mxu0 0.0
  %3352 = vmatprep.subr.mxu0 0.0
  %3353 = vmatpush2.msra.mxu0 0.0
  %3354 = vmatprep.subr.mxu0 0.0
  %3355 = vmatpush2.msra.mxu0 0.0
  %3356 = vmatprep.subr.mxu0 0.0
  %3357 = vmatpush2.msra.mxu0 0.0
  %3358 = vmatprep.subr.mxu0 0.0
  %3359 = vmatpush2.msra.mxu0 0.0
  %3360 = vmatprep.subr.mxu0 0.0
  %3361 = vmatpush2.msra.mxu0 0.0
  %3362 = vmatprep.subr.mxu0 0.0
  %3363 = vmatpush2.msra.mxu0 0.0
  %3364 = vmatprep.subr.mxu0 0.0
  %3365 = vmatpush2.msra.mxu0 0.0
  %3366 = vmatprep.subr.mxu0 0.0
  %3367 = vmatpush2.msra.mxu0 0.0
  %3368 = vmatprep.subr.mxu0 0.0
  %3369 = vmatpush2.msra.mxu0 0.0
  %3370 = vmatprep.subr.mxu0 0.0
  %3371 = vmatpush2.msra.mxu0 0.0
  %3372 = vmatprep.subr.mxu0 0.0
  %3373 = vmatpush2.msra.mxu0 0.0
  %3374 = vmatprep.subr.mxu0 0.0
  %3375 = vmatpush2.msra.mxu0 0.0
  %3376 = vmatprep.mubr.f32.mxu0 0.0
  %3377 = vmatmul.mubr.f32.gmra.mxu0 %v2163
  %v3378 = vpop.f32.mrf.mxu0
  %v3379 = vadd.f32 0.0, %v3378
  %v3380 = vpop.f32.mrf.mxu0
  %3381 = vmatprep.mubr.f32.mxu0 0.0
  %3382 = vmatmul.mubr.f32.gmra.mxu0 %v2166
  %v3383 = vpop.f32.mrf.mxu0
  %v3384 = vadd.f32 0.0, %v3383
  %v3385 = vpop.f32.mrf.mxu0
  %3386 = vdwg.mxu0
  %v3388 = vsel %vm2247, %v3379, 0
  %v3391 = vsel %vm2247, %v3384, 0
  %3393 = vmatprep.subr.mxu0 0.0
  %3394 = vmatpush1.msra.mxu0 0.0
  %3395 = vmatprep.subr.mxu0 0.0
  %3396 = vmatpush1.msra.mxu0 0.0
  %3397 = vmatprep.subr.mxu0 0.0
  %3398 = vmatpush1.msra.mxu0 0.0
  %3399 = vmatprep.subr.mxu0 0.0
  %3400 = vmatpush1.msra.mxu0 0.0
  %3401 = vmatprep.subr.mxu0 0.0
  %3402 = vmatpush1.msra.mxu0 0.0
  %3403 = vmatprep.subr.mxu0 0.0
  %3404 = vmatpush1.msra.mxu0 0.0
  %3405 = vmatprep.subr.mxu0 0.0
  %3406 = vmatpush1.msra.mxu0 %v69
  %3407 = vmatprep.subr.mxu0 0.0
  %3408 = vmatpush1.msra.mxu0 %v68
  %3409 = vmatprep.subr.mxu0 0.0
  %3410 = vmatpush1.msra.mxu0 %v67
  %3411 = vmatprep.subr.mxu0 0.0
  %3412 = vmatpush1.msra.mxu0 %v66
  %3413 = vmatprep.subr.mxu0 0.0
  %3414 = vmatpush1.msra.mxu0 %v65
  %3415 = vmatprep.subr.mxu0 0.0
  %3416 = vmatpush1.msra.mxu0 %v64
  %3417 = vmatprep.subr.mxu0 0.0
  %3418 = vmatpush1.msra.mxu0 %v63
  %3419 = vmatprep.subr.mxu0 0.0
  %3420 = vmatpush1.msra.mxu0 %v62
  %3421 = vmatprep.subr.mxu0 0.0
  %3422 = vmatpush1.msra.mxu0 %v61
  %3423 = vmatprep.subr.mxu0 0.0
  %3424 = vmatpush1.msra.mxu0 %v60
  %3425 = vmatprep.subr.mxu0 0.0
  %3426 = vmatpush2.msra.mxu0 0.0
  %3427 = vmatprep.subr.mxu0 0.0
  %3428 = vmatpush2.msra.mxu0 0.0
  %3429 = vmatprep.subr.mxu0 0.0
  %3430 = vmatpush2.msra.mxu0 0.0
  %3431 = vmatprep.subr.mxu0 0.0
  %3432 = vmatpush2.msra.mxu0 0.0
  %3433 = vmatprep.subr.mxu0 0.0
  %3434 = vmatpush2.msra.mxu0 0.0
  %3435 = vmatprep.subr.mxu0 0.0
  %3436 = vmatpush2.msra.mxu0 0.0
  %3437 = vmatprep.subr.mxu0 0.0
  %3438 = vmatpush2.msra.mxu0 0.0
  %3439 = vmatprep.subr.mxu0 0.0
  %3440 = vmatpush2.msra.mxu0 0.0
  %3441 = vmatprep.subr.mxu0 0.0
  %3442 = vmatpush2.msra.mxu0 0.0
  %3443 = vmatprep.subr.mxu0 0.0
  %3444 = vmatpush2.msra.mxu0 0.0
  %3445 = vmatprep.subr.mxu0 0.0
  %3446 = vmatpush2.msra.mxu0 0.0
  %3447 = vmatprep.subr.mxu0 0.0
  %3448 = vmatpush2.msra.mxu0 0.0
  %3449 = vmatprep.subr.mxu0 0.0
  %3450 = vmatpush2.msra.mxu0 0.0
  %3451 = vmatprep.subr.mxu0 0.0
  %3452 = vmatpush2.msra.mxu0 0.0
  %3453 = vmatprep.subr.mxu0 0.0
  %3454 = vmatpush2.msra.mxu0 0.0
  %3455 = vmatprep.subr.mxu0 0.0
  %3456 = vmatpush2.msra.mxu0 0.0
  %3457 = vmatprep.mubr.f32.mxu0 0.0
  %3458 = vmatmul.mubr.f32.gmra.mxu0 %v3388
  %v3459 = vpop.f32.mrf.mxu0
  %v3460 = vadd.f32 0.0, %v3459
  %v3461 = vpop.f32.mrf.mxu0
  %3462 = vmatprep.mubr.f32.mxu0 0.0
  %3463 = vmatmul.mubr.f32.gmra.mxu0 %v3391
  %v3464 = vpop.f32.mrf.mxu0
  %v3465 = vadd.f32 0.0, %v3464
  %v3466 = vpop.f32.mrf.mxu0
  %3467 = vdwg.mxu0
  %v3468 = vmax.f32 %v3460, 0.0
  %v3469 = vmax.f32 %v3465, 0.0
  %v3471 = vsel %vm2168, %v3469, 0
  %3473 = vmatprep.subr.mxu0 0.0
  %3474 = vmatpush1.msra.mxu0 0.0
  %3475 = vmatprep.subr.mxu0 0.0
  %3476 = vmatpush1.msra.mxu0 0.0
  %3477 = vmatprep.subr.mxu0 0.0
  %3478 = vmatpush1.msra.mxu0 0.0
  %3479 = vmatprep.subr.mxu0 0.0
  %3480 = vmatpush1.msra.mxu0 0.0
  %3481 = vmatprep.subr.mxu0 0.0
  %3482 = vmatpush1.msra.mxu0 0.0
  %3483 = vmatprep.subr.mxu0 0.0
  %3484 = vmatpush1.msra.mxu0 0.0
  %3485 = vmatprep.subr.mxu0 0.0
  %3486 = vmatpush1.msra.mxu0 0.0
  %3487 = vmatprep.subr.mxu0 0.0
  %3488 = vmatpush1.msra.mxu0 0.0
  %3489 = vmatprep.subr.mxu0 0.0
  %3490 = vmatpush1.msra.mxu0 0.0
  %3491 = vmatprep.subr.mxu0 0.0
  %3492 = vmatpush1.msra.mxu0 0.0
  %3493 = vmatprep.subr.mxu0 0.0
  %3494 = vmatpush1.msra.mxu0 0.0
  %3495 = vmatprep.subr.mxu0 0.0
  %3496 = vmatpush1.msra.mxu0 0.0
  %3497 = vmatprep.subr.mxu0 0.0
  %3498 = vmatpush1.msra.mxu0 0.0
  %3499 = vmatprep.subr.mxu0 0.0
  %3500 = vmatpush1.msra.mxu0 0.0
  %3501 = vmatprep.subr.mxu0 0.0
  %3502 = vmatpush1.msra.mxu0 %v3471
  %3503 = vmatprep.subr.mxu0 0.0
  %3504 = vmatpush1.msra.mxu0 %v3468
  %3505 = vmatprep.subr.mxu0 0.0
  %3506 = vmatpush2.msra.mxu0 0.0
  %3507 = vmatprep.subr.mxu0 0.0
  %3508 = vmatpush2.msra.mxu0 0.0
  %3509 = vmatprep.subr.mxu0 0.0
  %3510 = vmatpush2.msra.mxu0 0.0
  %3511 = vmatprep.subr.mxu0 0.0
  %3512 = vmatpush2.msra.mxu0 0.0
  %3513 = vmatprep.subr.mxu0 0.0
  %3514 = vmatpush2.msra.mxu0 0.0
  %3515 = vmatprep.subr.mxu0 0.0
  %3516 = vmatpush2.msra.mxu0 0.0
  %3517 = vmatprep.subr.mxu0 0.0
  %3518 = vmatpush2.msra.mxu0 0.0
  %3519 = vmatprep.subr.mxu0 0.0
  %3520 = vmatpush2.msra.mxu0 0.0
  %3521 = vmatprep.subr.mxu0 0.0
  %3522 = vmatpush2.msra.mxu0 0.0
  %3523 = vmatprep.subr.mxu0 0.0
  %3524 = vmatpush2.msra.mxu0 0.0
  %3525 = vmatprep.subr.mxu0 0.0
  %3526 = vmatpush2.msra.mxu0 0.0
  %3527 = vmatprep.subr.mxu0 0.0
  %3528 = vmatpush2.msra.mxu0 0.0
  %3529 = vmatprep.subr.mxu0 0.0
  %3530 = vmatpush2.msra.mxu0 0.0
  %3531 = vmatprep.subr.mxu0 0.0
  %3532 = vmatpush2.msra.mxu0 0.0
  %3533 = vmatprep.subr.mxu0 0.0
  %3534 = vmatpush2.msra.mxu0 0.0
  %3535 = vmatprep.subr.mxu0 0.0
  %3536 = vmatpush2.msra.mxu0 0.0
  %3537 = vmatprep.mubr.f32.mxu0 0.0
  %3538 = vmatmul.mubr.f32.gmra.mxu0 %v2163
  %v3539 = vpop.f32.mrf.mxu0
  %v3540 = vadd.f32 0.0, %v3539
  %v3541 = vpop.f32.mrf.mxu0
  %3542 = vmatprep.mubr.f32.mxu0 0.0
  %3543 = vmatmul.mubr.f32.gmra.mxu0 %v2166
  %v3544 = vpop.f32.mrf.mxu0
  %v3545 = vadd.f32 0.0, %v3544
  %v3546 = vpop.f32.mrf.mxu0
  %3547 = vdwg.mxu0
  %v3549 = vsel %vm2247, %v3540, 0
  %v3552 = vsel %vm2247, %v3545, 0
  %3554 = vmatprep.subr.mxu0 0.0
  %3555 = vmatpush1.msra.mxu0 0.0
  %3556 = vmatprep.subr.mxu0 0.0
  %3557 = vmatpush1.msra.mxu0 0.0
  %3558 = vmatprep.subr.mxu0 0.0
  %3559 = vmatpush1.msra.mxu0 0.0
  %3560 = vmatprep.subr.mxu0 0.0
  %3561 = vmatpush1.msra.mxu0 0.0
  %3562 = vmatprep.subr.mxu0 0.0
  %3563 = vmatpush1.msra.mxu0 0.0
  %3564 = vmatprep.subr.mxu0 0.0
  %3565 = vmatpush1.msra.mxu0 0.0
  %3566 = vmatprep.subr.mxu0 0.0
  %3567 = vmatpush1.msra.mxu0 %v79
  %3568 = vmatprep.subr.mxu0 0.0
  %3569 = vmatpush1.msra.mxu0 %v78
  %3570 = vmatprep.subr.mxu0 0.0
  %3571 = vmatpush1.msra.mxu0 %v77
  %3572 = vmatprep.subr.mxu0 0.0
  %3573 = vmatpush1.msra.mxu0 %v76
  %3574 = vmatprep.subr.mxu0 0.0
  %3575 = vmatpush1.msra.mxu0 %v75
  %3576 = vmatprep.subr.mxu0 0.0
  %3577 = vmatpush1.msra.mxu0 %v74
  %3578 = vmatprep.subr.mxu0 0.0
  %3579 = vmatpush1.msra.mxu0 %v73
  %3580 = vmatprep.subr.mxu0 0.0
  %3581 = vmatpush1.msra.mxu0 %v72
  %3582 = vmatprep.subr.mxu0 0.0
  %3583 = vmatpush1.msra.mxu0 %v71
  %3584 = vmatprep.subr.mxu0 0.0
  %3585 = vmatpush1.msra.mxu0 %v70
  %3586 = vmatprep.subr.mxu0 0.0
  %3587 = vmatpush2.msra.mxu0 0.0
  %3588 = vmatprep.subr.mxu0 0.0
  %3589 = vmatpush2.msra.mxu0 0.0
  %3590 = vmatprep.subr.mxu0 0.0
  %3591 = vmatpush2.msra.mxu0 0.0
  %3592 = vmatprep.subr.mxu0 0.0
  %3593 = vmatpush2.msra.mxu0 0.0
  %3594 = vmatprep.subr.mxu0 0.0
  %3595 = vmatpush2.msra.mxu0 0.0
  %3596 = vmatprep.subr.mxu0 0.0
  %3597 = vmatpush2.msra.mxu0 0.0
  %3598 = vmatprep.subr.mxu0 0.0
  %3599 = vmatpush2.msra.mxu0 0.0
  %3600 = vmatprep.subr.mxu0 0.0
  %3601 = vmatpush2.msra.mxu0 0.0
  %3602 = vmatprep.subr.mxu0 0.0
  %3603 = vmatpush2.msra.mxu0 0.0
  %3604 = vmatprep.subr.mxu0 0.0
  %3605 = vmatpush2.msra.mxu0 0.0
  %3606 = vmatprep.subr.mxu0 0.0
  %3607 = vmatpush2.msra.mxu0 0.0
  %3608 = vmatprep.subr.mxu0 0.0
  %3609 = vmatpush2.msra.mxu0 0.0
  %3610 = vmatprep.subr.mxu0 0.0
  %3611 = vmatpush2.msra.mxu0 0.0
  %3612 = vmatprep.subr.mxu0 0.0
  %3613 = vmatpush2.msra.mxu0 0.0
  %3614 = vmatprep.subr.mxu0 0.0
  %3615 = vmatpush2.msra.mxu0 0.0
  %3616 = vmatprep.subr.mxu0 0.0
  %3617 = vmatpush2.msra.mxu0 0.0
  %3618 = vmatprep.mubr.f32.mxu0 0.0
  %3619 = vmatmul.mubr.f32.gmra.mxu0 %v3549
  %v3620 = vpop.f32.mrf.mxu0
  %v3621 = vadd.f32 0.0, %v3620
  %v3622 = vpop.f32.mrf.mxu0
  %3623 = vmatprep.mubr.f32.mxu0 0.0
  %3624 = vmatmul.mubr.f32.gmra.mxu0 %v3552
  %v3625 = vpop.f32.mrf.mxu0
  %v3626 = vadd.f32 0.0, %v3625
  %v3627 = vpop.f32.mrf.mxu0
  %3628 = vdwg.mxu0
  %v3629 = vsel %vm2490, %v3621, 0.0
  %v3630 = vsel %vm2492, %v3626, 0.0
  %v3631 = vadd.f32 %v3629, %v3630
  %v3632 = vrot.slane %v3631, 4
  %v3633 = vadd.f32 %v3631, %v3632
  %v3634 = vrot.slane %v3633, 2
  %v3635 = vadd.f32 %v3633, %v3634
  %v3636 = vrot.slane %v3635, 1
  %v3637 = vadd.f32 %v3635, %v3636
  %v3638 = vmul.f32 %v3637, 0.11111111
  %v3640 = vsel %vm2490, %v3132, 0
  %3642 = vmatprep.subr.mxu0 0.0
  %3643 = vmatpush1.msra.mxu0 0.0
  %3644 = vmatprep.subr.mxu0 0.0
  %3645 = vmatpush1.msra.mxu0 0.0
  %3646 = vmatprep.subr.mxu0 0.0
  %3647 = vmatpush1.msra.mxu0 0.0
  %3648 = vmatprep.subr.mxu0 0.0
  %3649 = vmatpush1.msra.mxu0 0.0
  %3650 = vmatprep.subr.mxu0 0.0
  %3651 = vmatpush1.msra.mxu0 0.0
  %3652 = vmatprep.subr.mxu0 0.0
  %3653 = vmatpush1.msra.mxu0 0.0
  %3654 = vmatprep.subr.mxu0 0.0
  %3655 = vmatpush1.msra.mxu0 0.0
  %3656 = vmatprep.subr.mxu0 0.0
  %3657 = vmatpush1.msra.mxu0 0.0
  %3658 = vmatprep.subr.mxu0 0.0
  %3659 = vmatpush1.msra.mxu0 %v95
  %3660 = vmatprep.subr.mxu0 0.0
  %3661 = vmatpush1.msra.mxu0 %v94
  %3662 = vmatprep.subr.mxu0 0.0
  %3663 = vmatpush1.msra.mxu0 %v93
  %3664 = vmatprep.subr.mxu0 0.0
  %3665 = vmatpush1.msra.mxu0 %v92
  %3666 = vmatprep.subr.mxu0 0.0
  %3667 = vmatpush1.msra.mxu0 %v91
  %3668 = vmatprep.subr.mxu0 0.0
  %3669 = vmatpush1.msra.mxu0 %v90
  %3670 = vmatprep.subr.mxu0 0.0
  %3671 = vmatpush1.msra.mxu0 %v89
  %3672 = vmatprep.subr.mxu0 0.0
  %3673 = vmatpush1.msra.mxu0 %v88
  %3674 = vmatprep.subr.mxu0 0.0
  %3675 = vmatpush2.msra.mxu0 0.0
  %3676 = vmatprep.subr.mxu0 0.0
  %3677 = vmatpush2.msra.mxu0 0.0
  %3678 = vmatprep.subr.mxu0 0.0
  %3679 = vmatpush2.msra.mxu0 0.0
  %3680 = vmatprep.subr.mxu0 0.0
  %3681 = vmatpush2.msra.mxu0 0.0
  %3682 = vmatprep.subr.mxu0 0.0
  %3683 = vmatpush2.msra.mxu0 0.0
  %3684 = vmatprep.subr.mxu0 0.0
  %3685 = vmatpush2.msra.mxu0 0.0
  %3686 = vmatprep.subr.mxu0 0.0
  %3687 = vmatpush2.msra.mxu0 0.0
  %3688 = vmatprep.subr.mxu0 0.0
  %3689 = vmatpush2.msra.mxu0 0.0
  %3690 = vmatprep.subr.mxu0 0.0
  %3691 = vmatpush2.msra.mxu0 0.0
  %3692 = vmatprep.subr.mxu0 0.0
  %3693 = vmatpush2.msra.mxu0 0.0
  %3694 = vmatprep.subr.mxu0 0.0
  %3695 = vmatpush2.msra.mxu0 0.0
  %3696 = vmatprep.subr.mxu0 0.0
  %3697 = vmatpush2.msra.mxu0 0.0
  %3698 = vmatprep.subr.mxu0 0.0
  %3699 = vmatpush2.msra.mxu0 0.0
  %3700 = vmatprep.subr.mxu0 0.0
  %3701 = vmatpush2.msra.mxu0 0.0
  %3702 = vmatprep.subr.mxu0 0.0
  %3703 = vmatpush2.msra.mxu0 0.0
  %3704 = vmatprep.subr.mxu0 0.0
  %3705 = vmatpush2.msra.mxu0 0.0
  %3706 = vmatprep.mubr.f32.mxu0 0.0
  %3707 = vmatmul.mubr.f32.gmra.mxu0 %v3640
  %v3708 = vpop.f32.mrf.mxu0
  %v3709 = vadd.f32 0.0, %v3708
  %v3710 = vpop.f32.mrf.mxu0
  %3711 = vdwg.mxu0
  %v3713 = vsel %vm2490, %v3118, 0
  %3715 = vmatprep.subr.mxu0 0.0
  %3716 = vmatpush1.msra.mxu0 0.0
  %3717 = vmatprep.subr.mxu0 0.0
  %3718 = vmatpush1.msra.mxu0 0.0
  %3719 = vmatprep.subr.mxu0 0.0
  %3720 = vmatpush1.msra.mxu0 0.0
  %3721 = vmatprep.subr.mxu0 0.0
  %3722 = vmatpush1.msra.mxu0 0.0
  %3723 = vmatprep.subr.mxu0 0.0
  %3724 = vmatpush1.msra.mxu0 0.0
  %3725 = vmatprep.subr.mxu0 0.0
  %3726 = vmatpush1.msra.mxu0 0.0
  %3727 = vmatprep.subr.mxu0 0.0
  %3728 = vmatpush1.msra.mxu0 0.0
  %3729 = vmatprep.subr.mxu0 0.0
  %3730 = vmatpush1.msra.mxu0 0.0
  %3731 = vmatprep.subr.mxu0 0.0
  %3732 = vmatpush1.msra.mxu0 %v87
  %3733 = vmatprep.subr.mxu0 0.0
  %3734 = vmatpush1.msra.mxu0 %v86
  %3735 = vmatprep.subr.mxu0 0.0
  %3736 = vmatpush1.msra.mxu0 %v85
  %3737 = vmatprep.subr.mxu0 0.0
  %3738 = vmatpush1.msra.mxu0 %v84
  %3739 = vmatprep.subr.mxu0 0.0
  %3740 = vmatpush1.msra.mxu0 %v83
  %3741 = vmatprep.subr.mxu0 0.0
  %3742 = vmatpush1.msra.mxu0 %v82
  %3743 = vmatprep.subr.mxu0 0.0
  %3744 = vmatpush1.msra.mxu0 %v81
  %3745 = vmatprep.subr.mxu0 0.0
  %3746 = vmatpush1.msra.mxu0 %v80
  %3747 = vmatprep.subr.mxu0 0.0
  %3748 = vmatpush2.msra.mxu0 0.0
  %3749 = vmatprep.subr.mxu0 0.0
  %3750 = vmatpush2.msra.mxu0 0.0
  %3751 = vmatprep.subr.mxu0 0.0
  %3752 = vmatpush2.msra.mxu0 0.0
  %3753 = vmatprep.subr.mxu0 0.0
  %3754 = vmatpush2.msra.mxu0 0.0
  %3755 = vmatprep.subr.mxu0 0.0
  %3756 = vmatpush2.msra.mxu0 0.0
  %3757 = vmatprep.subr.mxu0 0.0
  %3758 = vmatpush2.msra.mxu0 0.0
  %3759 = vmatprep.subr.mxu0 0.0
  %3760 = vmatpush2.msra.mxu0 0.0
  %3761 = vmatprep.subr.mxu0 0.0
  %3762 = vmatpush2.msra.mxu0 0.0
  %3763 = vmatprep.subr.mxu0 0.0
  %3764 = vmatpush2.msra.mxu0 0.0
  %3765 = vmatprep.subr.mxu0 0.0
  %3766 = vmatpush2.msra.mxu0 0.0
  %3767 = vmatprep.subr.mxu0 0.0
  %3768 = vmatpush2.msra.mxu0 0.0
  %3769 = vmatprep.subr.mxu0 0.0
  %3770 = vmatpush2.msra.mxu0 0.0
  %3771 = vmatprep.subr.mxu0 0.0
  %3772 = vmatpush2.msra.mxu0 0.0
  %3773 = vmatprep.subr.mxu0 0.0
  %3774 = vmatpush2.msra.mxu0 0.0
  %3775 = vmatprep.subr.mxu0 0.0
  %3776 = vmatpush2.msra.mxu0 0.0
  %3777 = vmatprep.subr.mxu0 0.0
  %3778 = vmatpush2.msra.mxu0 0.0
  %3779 = vmatprep.mubr.f32.mxu0 0.0
  %3780 = vmatmul.mubr.f32.gmra.mxu0 %v3713
  %v3781 = vpop.f32.mrf.mxu0
  %v3782 = vadd.f32 %v3709, %v3781
  %v3783 = vpop.f32.mrf.mxu0
  %3784 = vdwg.mxu0
  %v3786 = vsel %vm2490, %v3638, 0
  %3788 = vmatprep.subr.mxu0 0.0
  %3789 = vmatpush1.msra.mxu0 0.0
  %3790 = vmatprep.subr.mxu0 0.0
  %3791 = vmatpush1.msra.mxu0 0.0
  %3792 = vmatprep.subr.mxu0 0.0
  %3793 = vmatpush1.msra.mxu0 0.0
  %3794 = vmatprep.subr.mxu0 0.0
  %3795 = vmatpush1.msra.mxu0 0.0
  %3796 = vmatprep.subr.mxu0 0.0
  %3797 = vmatpush1.msra.mxu0 0.0
  %3798 = vmatprep.subr.mxu0 0.0
  %3799 = vmatpush1.msra.mxu0 0.0
  %3800 = vmatprep.subr.mxu0 0.0
  %3801 = vmatpush1.msra.mxu0 0.0
  %3802 = vmatprep.subr.mxu0 0.0
  %3803 = vmatpush1.msra.mxu0 0.0
  %3804 = vmatprep.subr.mxu0 0.0
  %3805 = vmatpush1.msra.mxu0 %v103
  %3806 = vmatprep.subr.mxu0 0.0
  %3807 = vmatpush1.msra.mxu0 %v102
  %3808 = vmatprep.subr.mxu0 0.0
  %3809 = vmatpush1.msra.mxu0 %v101
  %3810 = vmatprep.subr.mxu0 0.0
  %3811 = vmatpush1.msra.mxu0 %v100
  %3812 = vmatprep.subr.mxu0 0.0
  %3813 = vmatpush1.msra.mxu0 %v99
  %3814 = vmatprep.subr.mxu0 0.0
  %3815 = vmatpush1.msra.mxu0 %v98
  %3816 = vmatprep.subr.mxu0 0.0
  %3817 = vmatpush1.msra.mxu0 %v97
  %3818 = vmatprep.subr.mxu0 0.0
  %3819 = vmatpush1.msra.mxu0 %v96
  %3820 = vmatprep.subr.mxu0 0.0
  %3821 = vmatpush2.msra.mxu0 0.0
  %3822 = vmatprep.subr.mxu0 0.0
  %3823 = vmatpush2.msra.mxu0 0.0
  %3824 = vmatprep.subr.mxu0 0.0
  %3825 = vmatpush2.msra.mxu0 0.0
  %3826 = vmatprep.subr.mxu0 0.0
  %3827 = vmatpush2.msra.mxu0 0.0
  %3828 = vmatprep.subr.mxu0 0.0
  %3829 = vmatpush2.msra.mxu0 0.0
  %3830 = vmatprep.subr.mxu0 0.0
  %3831 = vmatpush2.msra.mxu0 0.0
  %3832 = vmatprep.subr.mxu0 0.0
  %3833 = vmatpush2.msra.mxu0 0.0
  %3834 = vmatprep.subr.mxu0 0.0
  %3835 = vmatpush2.msra.mxu0 0.0
  %3836 = vmatprep.subr.mxu0 0.0
  %3837 = vmatpush2.msra.mxu0 0.0
  %3838 = vmatprep.subr.mxu0 0.0
  %3839 = vmatpush2.msra.mxu0 0.0
  %3840 = vmatprep.subr.mxu0 0.0
  %3841 = vmatpush2.msra.mxu0 0.0
  %3842 = vmatprep.subr.mxu0 0.0
  %3843 = vmatpush2.msra.mxu0 0.0
  %3844 = vmatprep.subr.mxu0 0.0
  %3845 = vmatpush2.msra.mxu0 0.0
  %3846 = vmatprep.subr.mxu0 0.0
  %3847 = vmatpush2.msra.mxu0 0.0
  %3848 = vmatprep.subr.mxu0 0.0
  %3849 = vmatpush2.msra.mxu0 0.0
  %3850 = vmatprep.subr.mxu0 0.0
  %3851 = vmatpush2.msra.mxu0 0.0
  %3852 = vmatprep.mubr.f32.mxu0 0.0
  %3853 = vmatmul.mubr.f32.gmra.mxu0 %v3786
  %v3854 = vpop.f32.mrf.mxu0
  %v3855 = vadd.f32 0.0, %v3854
  %v3856 = vpop.f32.mrf.mxu0
  %3857 = vdwg.mxu0
  %v3858 = vadd.f32 %v3782, %v3855
  %v3859 = vadd.f32 %v3858, %v104
  %3860 = vxpose.xlu0.b32.start [1/16] %v3289, 128
  %3861 = vxpose.xlu0.b32.cont [2/16] %v3294, 128
  %3862 = vxpose.xlu0.b32.cont [3/16] 0.0, 128
  %3863 = vxpose.xlu0.b32.cont [4/16] 0.0, 128
  %3864 = vxpose.xlu0.b32.cont [5/16] 0.0, 128
  %3865 = vxpose.xlu0.b32.cont [6/16] 0.0, 128
  %3866 = vxpose.xlu0.b32.cont [7/16] 0.0, 128
  %3867 = vxpose.xlu0.b32.cont [8/16] 0.0, 128
  %3868 = vxpose.xlu0.b32.cont [9/16] 0.0, 128
  %3869 = vxpose.xlu0.b32.cont [10/16] 0.0, 128
  %3870 = vxpose.xlu0.b32.cont [11/16] 0.0, 128
  %3871 = vxpose.xlu0.b32.cont [12/16] 0.0, 128
  %3872 = vxpose.xlu0.b32.cont [13/16] 0.0, 128
  %3873 = vxpose.xlu0.b32.cont [14/16] 0.0, 128
  %3874 = vxpose.xlu0.b32.cont [15/16] 0.0, 128
  %3875 = vxpose.xlu0.b32.end [16/16] 0.0, 128
  %v3876 = vpop.trf.xlu0
  %v3877 = vpop.trf.xlu0
  %v3878 = vpop.trf.xlu0
  %v3879 = vpop.trf.xlu0
  %v3880 = vpop.trf.xlu0
  %v3881 = vpop.trf.xlu0
  %v3882 = vpop.trf.xlu0
  %v3883 = vpop.trf.xlu0
  %v3884 = vpop.trf.xlu0
  %v3885 = vpop.trf.xlu0
  %v3886 = vpop.trf.xlu0
  %v3887 = vpop.trf.xlu0
  %v3888 = vpop.trf.xlu0
  %v3889 = vpop.trf.xlu0
  %v3890 = vpop.trf.xlu0
  %v3891 = vpop.trf.xlu0
  %v3892 = vsel %vm2161, %v3876, 0.0
  %s3893 = scalar_lea.vmem %s3, 2
  %3894 = vst [vmem:[%s3893] sm:$0x1] %v3859
  %3895 = vst [vmem:[%s3893 + $0x1] sm:$0x1] %v3892
  // Predicated region
  $region14: #{fmer_forward.1} parent=0 // pred_check
    _
  $region15: #{fmer_forward.1} parent=0 // pred_check_branch
    %3897 = sbr.rel (0) target = $region17
  $region16: #{fmer_forward.1} parent=0 // pred_region
    _
  $region17: #{fmer_forward.1} parent=0 // pred_fallthru
    _
  // Predicated region
  $region18: #{fmer_forward.1} parent=0 // pred_check
    _
  $region19: #{fmer_forward.1} parent=0 // pred_check_branch
    %3899 = sbr.rel (0) target = $region21
  $region20: #{fmer_forward.1} parent=0 // pred_region
    _
  $region21: #{fmer_forward.1} parent=0 // pred_fallthru
    _

</llo_original>
